<compile_context>
chip_gen: v7x
topology: tpu7x:2x2x1
jax: 0.10.0
libtpu: 0.0.40
codegen_flags: <defaults>
</compile_context>

<pallas_src>
import functools
import math

import jax
import jax.numpy as jnp
from jax.experimental import pallas as pl
from jax.experimental.pallas import tpu as pltpu

INPUT_DIM = 16
D_MODEL = 128
NHEAD = 8
NUM_LAYERS = 2
DIM_FF = 256
HEAD_DIM = D_MODEL // NHEAD
LN_EPS = 1e-5


# ---------------------------------------------------------------------------
# Kernel
# ---------------------------------------------------------------------------
def _layer_norm(x, gamma, beta):
    mu = jnp.mean(x, axis=-1, keepdims=True)
    xc = x - mu
    var = jnp.mean(xc * xc, axis=-1, keepdims=True)
    return xc * jax.lax.rsqrt(var + LN_EPS) * gamma + beta


def _encoder_kernel(x_ref, w_in_ref, b_in_ref, wqkv_ref, bqkv_ref, wo_ref,
                    w1_ref, b1_ref, w2_ref, vec_ref, o_ref, attn_scratch):
    """One grid step = one batch element's (S, .) rows through both layers."""
    bf16 = jnp.bfloat16
    f32 = jnp.float32

    # Input projection: bf16 operands, f32 accumulation.
    x = jnp.dot(x_ref[...].astype(bf16), w_in_ref[...],
                preferred_element_type=f32) + b_in_ref[...]

    for l in range(NUM_LAYERS):                     # static unroll (2 layers)
        wqkv = wqkv_ref[l]                          # (D, 3D)  bf16, Q pre-scaled
        bqkv = bqkv_ref[l]                          # (1, 3D)  f32
        wo = wo_ref[l]                              # (D, D)   bf16
        w1 = w1_ref[l]                              # (D, FF)  bf16
        w2 = w2_ref[l]                              # (FF, D)  bf16
        b1 = b1_ref[l]                              # (1, FF)  f32
        vec = vec_ref[l]                            # (6, D)   f32
        bo, b2 = vec[0:1], vec[1:2]
        g1, be1 = vec[2:3], vec[3:4]
        g2, be2 = vec[4:5], vec[5:6]

        # Fused Q/K/V projection: one wide (S, D) @ (D, 3D) MXU push.
        qkv = jnp.dot(x.astype(bf16), wqkv, preferred_element_type=f32) + bqkv

        # Per-head attention over this sequence only (no mask needed).
        # Head outputs land directly in a (S, D) VMEM scratch at lane offset
        # h*HEAD_DIM, so no concatenate and a single K=128 out-projection.
        for h in range(NHEAD):                      # static unroll over heads
            lo = h * HEAD_DIM
            q_h = qkv[:, lo:lo + HEAD_DIM].astype(bf16)
            k_h = qkv[:, D_MODEL + lo:D_MODEL + lo + HEAD_DIM].astype(bf16)
            v_h = qkv[:, 2 * D_MODEL + lo:2 * D_MODEL + lo + HEAD_DIM].astype(bf16)
            s = jnp.einsum('qd,kd->qk', q_h, k_h,
                           preferred_element_type=f32)          # (S, S) f32
            s = s - jnp.max(s, axis=-1, keepdims=True)
            p = jnp.exp(s)
            p = p / jnp.sum(p, axis=-1, keepdims=True)           # exact softmax
            attn_scratch[:, lo:lo + HEAD_DIM] = jnp.dot(
                p.astype(bf16), v_h, preferred_element_type=f32)

        attn = jnp.dot(attn_scratch[...].astype(bf16), wo,
                       preferred_element_type=f32) + bo

        # Residual + LayerNorm 1 (post-norm; dropout = identity in eval mode).
        x = _layer_norm(x + attn, g1, be1)

        # Feed-forward: Linear -> ReLU -> Linear.
        h1 = jnp.maximum(
            jnp.dot(x.astype(bf16), w1, preferred_element_type=f32) + b1, 0.0)
        ff = jnp.dot(h1.astype(bf16), w2, preferred_element_type=f32) + b2

        # Residual + LayerNorm 2.
        x = _layer_norm(x + ff, g2, be2)

    o_ref[...] = x.astype(o_ref.dtype)


# ---------------------------------------------------------------------------
# Wrapper
# ---------------------------------------------------------------------------
def transformer_forward(x, params):
    """x: (B, S, INPUT_DIM) f32 -> (B, S, D_MODEL) f32."""
    B, S, _ = x.shape
    grid_spec = pltpu.PrefetchScalarGridSpec(
        num_scalar_prefetch=0,
        grid=(B,),
        in_specs=[
            # activation tile for this batch element (leading dim squeezed)
            pl.BlockSpec((None, S, INPUT_DIM), lambda b: (b, 0, 0)),
            # weight slabs: constant index maps -> resident in VMEM, DMA'd once
            pl.BlockSpec((INPUT_DIM, D_MODEL), lambda b: (0, 0)),
            pl.BlockSpec((1, D_MODEL), lambda b: (0, 0)),
            pl.BlockSpec((NUM_LAYERS, D_MODEL, 3 * D_MODEL), lambda b: (0, 0, 0)),
            pl.BlockSpec((NUM_LAYERS, 1, 3 * D_MODEL), lambda b: (0, 0, 0)),
            pl.BlockSpec((NUM_LAYERS, D_MODEL, D_MODEL), lambda b: (0, 0, 0)),
            pl.BlockSpec((NUM_LAYERS, D_MODEL, DIM_FF), lambda b: (0, 0, 0)),
            pl.BlockSpec((NUM_LAYERS, 1, DIM_FF), lambda b: (0, 0, 0)),
            pl.BlockSpec((NUM_LAYERS, DIM_FF, D_MODEL), lambda b: (0, 0, 0)),
            pl.BlockSpec((NUM_LAYERS, 6, D_MODEL), lambda b: (0, 0, 0)),
        ],
        out_specs=pl.BlockSpec((None, S, D_MODEL), lambda b: (b, 0, 0)),
        scratch_shapes=[pltpu.VMEM((S, D_MODEL), jnp.float32)],
    )
    return pl.pallas_call(
        _encoder_kernel,
        out_shape=jax.ShapeDtypeStruct((B, S, D_MODEL), jnp.float32),
        grid_spec=grid_spec,
        compiler_params=pltpu.CompilerParams(
            dimension_semantics=("parallel",),          # v7x dual-TC sharding
            vmem_limit_bytes=32 * 1024 * 1024),          # real lift on v5e only
    )(x, params["w_in"], params["b_in"], params["wqkv"], params["bqkv"],
      params["wo"], params["w1"], params["b1"], params["w2"], params["vec"])


# ---------------------------------------------------------------------------
# Parameters (weights pre-transposed to (in_features, out_features); matmul
# operands stored bf16, biases / LayerNorm params stay f32).
# ---------------------------------------------------------------------------
def make_params(key):
    keys = iter(jax.random.split(key, 32))

    def uniform(shape, bound):
        return jax.random.uniform(next(keys), shape, jnp.float32, -bound, bound)

    bnd = 1.0 / math.sqrt(INPUT_DIM)
    w_in = uniform((INPUT_DIM, D_MODEL), bnd)
    b_in = uniform((1, D_MODEL), bnd)

    # Fold the 1/sqrt(head_dim) attention scale into the Q projection.
    # HEAD_DIM=16 -> scale=0.25 is a power of two, exact even in bf16.
    scale = 1.0 / math.sqrt(HEAD_DIM)
    qkv_scale = jnp.concatenate([
        jnp.full((D_MODEL,), scale, jnp.float32),
        jnp.ones((2 * D_MODEL,), jnp.float32),
    ])

    wqkv, bqkv, wo, w1, b1, w2, vec = [], [], [], [], [], [], []
    dbnd = 1.0 / math.sqrt(D_MODEL)
    fbnd = 1.0 / math.sqrt(DIM_FF)
    for _ in range(NUM_LAYERS):
        wqkv.append(uniform((D_MODEL, 3 * D_MODEL), dbnd) * qkv_scale)
        # in_proj bias is zero at init; when loading a real checkpoint, the Q
        # third of the bias must also be multiplied by qkv_scale.
        bqkv.append(jnp.zeros((1, 3 * D_MODEL), jnp.float32) * qkv_scale)
        wo.append(uniform((D_MODEL, D_MODEL), dbnd))
        bo = uniform((D_MODEL,), dbnd)
        w1.append(uniform((D_MODEL, DIM_FF), dbnd))
        b1.append(uniform((1, DIM_FF), dbnd))
        w2.append(uniform((DIM_FF, D_MODEL), fbnd))
        b2 = uniform((D_MODEL,), fbnd)
        g1, be1 = jnp.ones((D_MODEL,)), jnp.zeros((D_MODEL,))
        g2, be2 = jnp.ones((D_MODEL,)), jnp.zeros((D_MODEL,))
        # pack the 6 per-layer D-wide f32 vectors into one slab
        vec.append(jnp.stack([bo, b2, g1, be1, g2, be2]))

    bf16 = jnp.bfloat16
    return {
        "w_in": w_in.astype(bf16), "b_in": b_in,
        "wqkv": jnp.stack(wqkv).astype(bf16),
        "bqkv": jnp.stack(bqkv),
        "wo": jnp.stack(wo).astype(bf16),
        "w1": jnp.stack(w1).astype(bf16), "b1": jnp.stack(b1),
        "w2": jnp.stack(w2).astype(bf16),
        "vec": jnp.stack(vec),
    }


# ---------------------------------------------------------------------------
# Pure-JAX reference (mirrors the kernel's bf16 matmul / f32 accumulate math)
# ---------------------------------------------------------------------------
def reference_forward(x, params):
    bf16, f32 = jnp.bfloat16, jnp.float32

    def mm(a, b):
        return jnp.dot(a.astype(bf16), b, preferred_element_type=f32)

    def ln(v, g, b):
        mu = jnp.mean(v, axis=-1, keepdims=True)
        vc = v - mu
        var = jnp.mean(vc * vc, axis=-1, keepdims=True)
        return vc * jax.lax.rsqrt(var + LN_EPS) * g + b

    h = mm(x, params["w_in"]) + params["b_in"]
    B, S, _ = h.shape
    for l in range(NUM_LAYERS):
        vec = params["vec"][l]
        bo, b2, g1, be1, g2, be2 = (vec[i] for i in range(6))
        qkv = mm(h, params["wqkv"][l]) + params["bqkv"][l]
        q, k, v = jnp.split(qkv, 3, axis=-1)
        qh = q.reshape(B, S, NHEAD, HEAD_DIM).astype(bf16)
        kh = k.reshape(B, S, NHEAD, HEAD_DIM).astype(bf16)
        vh = v.reshape(B, S, NHEAD, HEAD_DIM).astype(bf16)
        s = jnp.einsum('bqhd,bkhd->bhqk', qh, kh, preferred_element_type=f32)
        s = s - jnp.max(s, axis=-1, keepdims=True)
        p = jnp.exp(s)
        p = p / jnp.sum(p, axis=-1, keepdims=True)
        o = jnp.einsum('bhqk,bkhd->bqhd', p.astype(bf16), vh,
                       preferred_element_type=f32)
        attn = mm(o.reshape(B, S, D_MODEL), params["wo"][l]) + bo
        h = ln(h + attn, g1, be1)
        ff = mm(jnp.maximum(mm(h, params["w1"][l]) + params["b1"][l], 0.0),
                params["w2"][l]) + b2
        h = ln(h + ff, g2, be2)
    return h


# ---------------------------------------------------------------------------
if __name__ == "__main__":
    key = jax.random.PRNGKey(0)
    pkey, xkey = jax.random.split(key)
    params = make_params(pkey)

    B, S = 2, 8
    x = jax.random.normal(xkey, (B, S, INPUT_DIM), jnp.float32)

    forward = jax.jit(transformer_forward)
    out = forward(x, params)
    jax.block_until_ready(out)

    ref = reference_forward(x, params)
    err = float(jnp.max(jnp.abs(out - ref)))

    assert out.shape == (B, S, D_MODEL)
    assert bool(jnp.all(jnp.isfinite(out)))
    assert err < 2e-2, f"kernel/reference mismatch: max abs err={err}"
    print("KERNEL_OK")
</pallas_src>

<mosaic_0001>
module attributes {stable_mosaic.version = 11 : i64} {
  func.func @_encoder_kernel(%arg0: i32, %arg1: memref<1x8x16xf32, #tpu.memory_space<vmem>>, %arg2: memref<16x128xbf16, #tpu.memory_space<vmem>>, %arg3: memref<1x128xf32, #tpu.memory_space<vmem>>, %arg4: memref<2x128x384xbf16, #tpu.memory_space<vmem>>, %arg5: memref<2x1x384xf32, #tpu.memory_space<vmem>>, %arg6: memref<2x128x128xbf16, #tpu.memory_space<vmem>>, %arg7: memref<2x128x256xbf16, #tpu.memory_space<vmem>>, %arg8: memref<2x1x256xf32, #tpu.memory_space<vmem>>, %arg9: memref<2x256x128xbf16, #tpu.memory_space<vmem>>, %arg10: memref<2x6x128xf32, #tpu.memory_space<vmem>>, %arg11: memref<1x8x128xf32, #tpu.memory_space<vmem>>, %arg12: memref<8x128xf32, #tpu.memory_space<vmem>>) attributes {dimension_semantics = [#tpu.dimension_semantics<parallel>], iteration_bounds = array<i64: 2>, scalar_prefetch = 0 : i64, scratch_operands = 1 : i64, tpu.core_type = #tpu.core_type<tc>, window_params = [{transform_indices = @transform_0, window_bounds = array<i64: 1, 8, 16>}, {pipeline_mode = #tpu.pipeline_mode<synchronous>, transform_indices = @transform_1, window_bounds = array<i64: 16, 128>}, {pipeline_mode = #tpu.pipeline_mode<synchronous>, transform_indices = @transform_2, window_bounds = array<i64: 1, 128>}, {pipeline_mode = #tpu.pipeline_mode<synchronous>, transform_indices = @transform_3, window_bounds = array<i64: 2, 128, 384>}, {pipeline_mode = #tpu.pipeline_mode<synchronous>, transform_indices = @transform_4, window_bounds = array<i64: 2, 1, 384>}, {pipeline_mode = #tpu.pipeline_mode<synchronous>, transform_indices = @transform_5, window_bounds = array<i64: 2, 128, 128>}, {pipeline_mode = #tpu.pipeline_mode<synchronous>, transform_indices = @transform_6, window_bounds = array<i64: 2, 128, 256>}, {pipeline_mode = #tpu.pipeline_mode<synchronous>, transform_indices = @transform_7, window_bounds = array<i64: 2, 1, 256>}, {pipeline_mode = #tpu.pipeline_mode<synchronous>, transform_indices = @transform_8, window_bounds = array<i64: 2, 256, 128>}, {pipeline_mode = #tpu.pipeline_mode<synchronous>, transform_indices = @transform_9, window_bounds = array<i64: 2, 6, 128>}, {transform_indices = @transform_10, window_bounds = array<i64: 1, 8, 128>}]} {
    %c0 = arith.constant 0 : index
    %c0_0 = arith.constant 0 : index
    %c0_1 = arith.constant 0 : index
    %0 = vector.load %arg1[%c0, %c0_0, %c0_1] : memref<1x8x16xf32, #tpu.memory_space<vmem>>, vector<1x8x16xf32>
    %1 = vector.shape_cast %0 : vector<1x8x16xf32> to vector<8x16xf32>
    %2 = arith.truncf %1 : vector<8x16xf32> to vector<8x16xbf16>
    %c0_2 = arith.constant 0 : index
    %c0_3 = arith.constant 0 : index
    %3 = vector.load %arg2[%c0_2, %c0_3] : memref<16x128xbf16, #tpu.memory_space<vmem>>, vector<16x128xbf16>
    %cst = arith.constant dense<0.000000e+00> : vector<8x128xf32>
    %4 = tpu.matmul %2, %3, %cst {dimension_numbers = #tpu.dot_dimension_numbers<[1], [0], [0], [1], [0, 0, 1, 1], [], []>} : vector<8x16xbf16>, vector<16x128xbf16>, vector<8x128xf32> -> vector<8x128xf32>
    %c0_4 = arith.constant 0 : index
    %c0_5 = arith.constant 0 : index
    %5 = vector.load %arg3[%c0_4, %c0_5] : memref<1x128xf32, #tpu.memory_space<vmem>>, vector<1x128xf32>
    %6 = vector.broadcast %5 : vector<1x128xf32> to vector<8x128xf32>
    %7 = arith.addf %4, %6 : vector<8x128xf32>
    %c0_6 = arith.constant 0 : index
    %c0_7 = arith.constant 0 : index
    %c0_8 = arith.constant 0 : index
    %8 = vector.load %arg4[%c0_6, %c0_7, %c0_8] : memref<2x128x384xbf16, #tpu.memory_space<vmem>>, vector<1x128x384xbf16>
    %9 = vector.shape_cast %8 : vector<1x128x384xbf16> to vector<128x384xbf16>
    %c0_9 = arith.constant 0 : index
    %c0_10 = arith.constant 0 : index
    %c0_11 = arith.constant 0 : index
    %10 = vector.load %arg5[%c0_9, %c0_10, %c0_11] : memref<2x1x384xf32, #tpu.memory_space<vmem>>, vector<1x1x384xf32>
    %11 = vector.shape_cast %10 : vector<1x1x384xf32> to vector<1x384xf32>
    %c0_12 = arith.constant 0 : index
    %c0_13 = arith.constant 0 : index
    %c0_14 = arith.constant 0 : index
    %12 = vector.load %arg6[%c0_12, %c0_13, %c0_14] : memref<2x128x128xbf16, #tpu.memory_space<vmem>>, vector<1x128x128xbf16>
    %13 = vector.shape_cast %12 : vector<1x128x128xbf16> to vector<128x128xbf16>
    %c0_15 = arith.constant 0 : index
    %c0_16 = arith.constant 0 : index
    %c0_17 = arith.constant 0 : index
    %14 = vector.load %arg7[%c0_15, %c0_16, %c0_17] : memref<2x128x256xbf16, #tpu.memory_space<vmem>>, vector<1x128x256xbf16>
    %15 = vector.shape_cast %14 : vector<1x128x256xbf16> to vector<128x256xbf16>
    %c0_18 = arith.constant 0 : index
    %c0_19 = arith.constant 0 : index
    %c0_20 = arith.constant 0 : index
    %16 = vector.load %arg9[%c0_18, %c0_19, %c0_20] : memref<2x256x128xbf16, #tpu.memory_space<vmem>>, vector<1x256x128xbf16>
    %17 = vector.shape_cast %16 : vector<1x256x128xbf16> to vector<256x128xbf16>
    %c0_21 = arith.constant 0 : index
    %c0_22 = arith.constant 0 : index
    %c0_23 = arith.constant 0 : index
    %18 = vector.load %arg8[%c0_21, %c0_22, %c0_23] : memref<2x1x256xf32, #tpu.memory_space<vmem>>, vector<1x1x256xf32>
    %19 = vector.shape_cast %18 : vector<1x1x256xf32> to vector<1x256xf32>
    %c0_24 = arith.constant 0 : index
    %c0_25 = arith.constant 0 : index
    %c0_26 = arith.constant 0 : index
    %20 = vector.load %arg10[%c0_24, %c0_25, %c0_26] : memref<2x6x128xf32, #tpu.memory_space<vmem>>, vector<1x6x128xf32>
    %21 = vector.shape_cast %20 : vector<1x6x128xf32> to vector<6x128xf32>
    %22 = vector.extract_strided_slice %21 {offsets = [0, 0], sizes = [1, 128], strides = [1, 1]} : vector<6x128xf32> to vector<1x128xf32>
    %23 = vector.extract_strided_slice %21 {offsets = [1, 0], sizes = [1, 128], strides = [1, 1]} : vector<6x128xf32> to vector<1x128xf32>
    %24 = vector.extract_strided_slice %21 {offsets = [2, 0], sizes = [1, 128], strides = [1, 1]} : vector<6x128xf32> to vector<1x128xf32>
    %25 = vector.extract_strided_slice %21 {offsets = [3, 0], sizes = [1, 128], strides = [1, 1]} : vector<6x128xf32> to vector<1x128xf32>
    %26 = vector.extract_strided_slice %21 {offsets = [4, 0], sizes = [1, 128], strides = [1, 1]} : vector<6x128xf32> to vector<1x128xf32>
    %27 = vector.extract_strided_slice %21 {offsets = [5, 0], sizes = [1, 128], strides = [1, 1]} : vector<6x128xf32> to vector<1x128xf32>
    %28 = arith.truncf %7 : vector<8x128xf32> to vector<8x128xbf16>
    %cst_27 = arith.constant dense<0.000000e+00> : vector<8x384xf32>
    %29 = tpu.matmul %28, %9, %cst_27 {dimension_numbers = #tpu.dot_dimension_numbers<[1], [0], [0], [1], [0, 0, 1, 1], [], []>} : vector<8x128xbf16>, vector<128x384xbf16>, vector<8x384xf32> -> vector<8x384xf32>
    %30 = vector.broadcast %11 : vector<1x384xf32> to vector<8x384xf32>
    %31 = arith.addf %29, %30 : vector<8x384xf32>
    %32 = vector.extract_strided_slice %31 {offsets = [0, 0], sizes = [8, 16], strides = [1, 1]} : vector<8x384xf32> to vector<8x16xf32>
    %33 = arith.truncf %32 : vector<8x16xf32> to vector<8x16xbf16>
    %34 = vector.extract_strided_slice %31 {offsets = [0, 128], sizes = [8, 16], strides = [1, 1]} : vector<8x384xf32> to vector<8x16xf32>
    %35 = arith.truncf %34 : vector<8x16xf32> to vector<8x16xbf16>
    %36 = vector.extract_strided_slice %31 {offsets = [0, 256], sizes = [8, 16], strides = [1, 1]} : vector<8x384xf32> to vector<8x16xf32>
    %37 = arith.truncf %36 : vector<8x16xf32> to vector<8x16xbf16>
    "tpu.trace_start"() <{level = 10 : i32, message = "qd,kd->qk"}> : () -> ()
    %cst_28 = arith.constant dense<0.000000e+00> : vector<8x8xf32>
    %38 = tpu.matmul %33, %35, %cst_28 {dimension_numbers = #tpu.dot_dimension_numbers<[1], [1], [0], [0], [0, 0, 1, 0], [], []>} : vector<8x16xbf16>, vector<8x16xbf16>, vector<8x8xf32> -> vector<8x8xf32>
    "tpu.trace_stop"() : () -> ()
    %cst_29 = arith.constant dense<0xFF800000> : vector<8xf32>
    %39 = vector.multi_reduction <maximumf>, %38, %cst_29 [1] : vector<8x8xf32> to vector<8xf32>
    %40 = vector.shape_cast %39 : vector<8xf32> to vector<8x1xf32>
    %41 = vector.broadcast %40 : vector<8x1xf32> to vector<8x8xf32>
    %42 = arith.subf %38, %41 : vector<8x8xf32>
    %43 = math.exp %42 : vector<8x8xf32>
    %cst_30 = arith.constant dense<0.000000e+00> : vector<8xf32>
    %44 = vector.multi_reduction <add>, %43, %cst_30 [1] : vector<8x8xf32> to vector<8xf32>
    %45 = vector.shape_cast %44 : vector<8xf32> to vector<8x1xf32>
    %46 = vector.broadcast %45 : vector<8x1xf32> to vector<8x8xf32>
    %47 = arith.divf %43, %46 : vector<8x8xf32>
    %48 = arith.truncf %47 : vector<8x8xf32> to vector<8x8xbf16>
    %cst_31 = arith.constant dense<0.000000e+00> : vector<8x16xf32>
    %49 = tpu.matmul %48, %37, %cst_31 {dimension_numbers = #tpu.dot_dimension_numbers<[1], [0], [0], [1], [0, 0, 1, 1], [], []>} : vector<8x8xbf16>, vector<8x16xbf16>, vector<8x16xf32> -> vector<8x16xf32>
    %c0_32 = arith.constant 0 : index
    %c0_33 = arith.constant 0 : index
    %50 = vector.load %arg12[%c0_32, %c0_33] : memref<8x128xf32, #tpu.memory_space<vmem>>, vector<8x16xf32>
    tpu.vector_store %arg12[%c0_32, %c0_33], %49 {strides = array<i32>} : memref<8x128xf32, #tpu.memory_space<vmem>>, vector<8x16xf32>,
    %51 = vector.extract_strided_slice %31 {offsets = [0, 16], sizes = [8, 16], strides = [1, 1]} : vector<8x384xf32> to vector<8x16xf32>
    %52 = arith.truncf %51 : vector<8x16xf32> to vector<8x16xbf16>
    %53 = vector.extract_strided_slice %31 {offsets = [0, 144], sizes = [8, 16], strides = [1, 1]} : vector<8x384xf32> to vector<8x16xf32>
    %54 = arith.truncf %53 : vector<8x16xf32> to vector<8x16xbf16>
    %55 = vector.extract_strided_slice %31 {offsets = [0, 272], sizes = [8, 16], strides = [1, 1]} : vector<8x384xf32> to vector<8x16xf32>
    %56 = arith.truncf %55 : vector<8x16xf32> to vector<8x16xbf16>
    "tpu.trace_start"() <{level = 10 : i32, message = "qd,kd->qk"}> : () -> ()
    %cst_34 = arith.constant dense<0.000000e+00> : vector<8x8xf32>
    %57 = tpu.matmul %52, %54, %cst_34 {dimension_numbers = #tpu.dot_dimension_numbers<[1], [1], [0], [0], [0, 0, 1, 0], [], []>} : vector<8x16xbf16>, vector<8x16xbf16>, vector<8x8xf32> -> vector<8x8xf32>
    "tpu.trace_stop"() : () -> ()
    %cst_35 = arith.constant dense<0xFF800000> : vector<8xf32>
    %58 = vector.multi_reduction <maximumf>, %57, %cst_35 [1] : vector<8x8xf32> to vector<8xf32>
    %59 = vector.shape_cast %58 : vector<8xf32> to vector<8x1xf32>
    %60 = vector.broadcast %59 : vector<8x1xf32> to vector<8x8xf32>
    %61 = arith.subf %57, %60 : vector<8x8xf32>
    %62 = math.exp %61 : vector<8x8xf32>
    %cst_36 = arith.constant dense<0.000000e+00> : vector<8xf32>
    %63 = vector.multi_reduction <add>, %62, %cst_36 [1] : vector<8x8xf32> to vector<8xf32>
    %64 = vector.shape_cast %63 : vector<8xf32> to vector<8x1xf32>
    %65 = vector.broadcast %64 : vector<8x1xf32> to vector<8x8xf32>
    %66 = arith.divf %62, %65 : vector<8x8xf32>
    %67 = arith.truncf %66 : vector<8x8xf32> to vector<8x8xbf16>
    %cst_37 = arith.constant dense<0.000000e+00> : vector<8x16xf32>
    %68 = tpu.matmul %67, %56, %cst_37 {dimension_numbers = #tpu.dot_dimension_numbers<[1], [0], [0], [1], [0, 0, 1, 1], [], []>} : vector<8x8xbf16>, vector<8x16xbf16>, vector<8x16xf32> -> vector<8x16xf32>
    %c0_38 = arith.constant 0 : index
    %c16 = arith.constant 16 : index
    %69 = vector.load %arg12[%c0_38, %c16] : memref<8x128xf32, #tpu.memory_space<vmem>>, vector<8x16xf32>
    tpu.vector_store %arg12[%c0_38, %c16], %68 {strides = array<i32>} : memref<8x128xf32, #tpu.memory_space<vmem>>, vector<8x16xf32>,
    %70 = vector.extract_strided_slice %31 {offsets = [0, 32], sizes = [8, 16], strides = [1, 1]} : vector<8x384xf32> to vector<8x16xf32>
    %71 = arith.truncf %70 : vector<8x16xf32> to vector<8x16xbf16>
    %72 = vector.extract_strided_slice %31 {offsets = [0, 160], sizes = [8, 16], strides = [1, 1]} : vector<8x384xf32> to vector<8x16xf32>
    %73 = arith.truncf %72 : vector<8x16xf32> to vector<8x16xbf16>
    %74 = vector.extract_strided_slice %31 {offsets = [0, 288], sizes = [8, 16], strides = [1, 1]} : vector<8x384xf32> to vector<8x16xf32>
    %75 = arith.truncf %74 : vector<8x16xf32> to vector<8x16xbf16>
    "tpu.trace_start"() <{level = 10 : i32, message = "qd,kd->qk"}> : () -> ()
    %cst_39 = arith.constant dense<0.000000e+00> : vector<8x8xf32>
    %76 = tpu.matmul %71, %73, %cst_39 {dimension_numbers = #tpu.dot_dimension_numbers<[1], [1], [0], [0], [0, 0, 1, 0], [], []>} : vector<8x16xbf16>, vector<8x16xbf16>, vector<8x8xf32> -> vector<8x8xf32>
    "tpu.trace_stop"() : () -> ()
    %cst_40 = arith.constant dense<0xFF800000> : vector<8xf32>
    %77 = vector.multi_reduction <maximumf>, %76, %cst_40 [1] : vector<8x8xf32> to vector<8xf32>
    %78 = vector.shape_cast %77 : vector<8xf32> to vector<8x1xf32>
    %79 = vector.broadcast %78 : vector<8x1xf32> to vector<8x8xf32>
    %80 = arith.subf %76, %79 : vector<8x8xf32>
    %81 = math.exp %80 : vector<8x8xf32>
    %cst_41 = arith.constant dense<0.000000e+00> : vector<8xf32>
    %82 = vector.multi_reduction <add>, %81, %cst_41 [1] : vector<8x8xf32> to vector<8xf32>
    %83 = vector.shape_cast %82 : vector<8xf32> to vector<8x1xf32>
    %84 = vector.broadcast %83 : vector<8x1xf32> to vector<8x8xf32>
    %85 = arith.divf %81, %84 : vector<8x8xf32>
    %86 = arith.truncf %85 : vector<8x8xf32> to vector<8x8xbf16>
    %cst_42 = arith.constant dense<0.000000e+00> : vector<8x16xf32>
    %87 = tpu.matmul %86, %75, %cst_42 {dimension_numbers = #tpu.dot_dimension_numbers<[1], [0], [0], [1], [0, 0, 1, 1], [], []>} : vector<8x8xbf16>, vector<8x16xbf16>, vector<8x16xf32> -> vector<8x16xf32>
    %c0_43 = arith.constant 0 : index
    %c32 = arith.constant 32 : index
    %88 = vector.load %arg12[%c0_43, %c32] : memref<8x128xf32, #tpu.memory_space<vmem>>, vector<8x16xf32>
    tpu.vector_store %arg12[%c0_43, %c32], %87 {strides = array<i32>} : memref<8x128xf32, #tpu.memory_space<vmem>>, vector<8x16xf32>,
    %89 = vector.extract_strided_slice %31 {offsets = [0, 48], sizes = [8, 16], strides = [1, 1]} : vector<8x384xf32> to vector<8x16xf32>
    %90 = arith.truncf %89 : vector<8x16xf32> to vector<8x16xbf16>
    %91 = vector.extract_strided_slice %31 {offsets = [0, 176], sizes = [8, 16], strides = [1, 1]} : vector<8x384xf32> to vector<8x16xf32>
    %92 = arith.truncf %91 : vector<8x16xf32> to vector<8x16xbf16>
    %93 = vector.extract_strided_slice %31 {offsets = [0, 304], sizes = [8, 16], strides = [1, 1]} : vector<8x384xf32> to vector<8x16xf32>
    %94 = arith.truncf %93 : vector<8x16xf32> to vector<8x16xbf16>
    "tpu.trace_start"() <{level = 10 : i32, message = "qd,kd->qk"}> : () -> ()
    %cst_44 = arith.constant dense<0.000000e+00> : vector<8x8xf32>
    %95 = tpu.matmul %90, %92, %cst_44 {dimension_numbers = #tpu.dot_dimension_numbers<[1], [1], [0], [0], [0, 0, 1, 0], [], []>} : vector<8x16xbf16>, vector<8x16xbf16>, vector<8x8xf32> -> vector<8x8xf32>
    "tpu.trace_stop"() : () -> ()
    %cst_45 = arith.constant dense<0xFF800000> : vector<8xf32>
    %96 = vector.multi_reduction <maximumf>, %95, %cst_45 [1] : vector<8x8xf32> to vector<8xf32>
    %97 = vector.shape_cast %96 : vector<8xf32> to vector<8x1xf32>
    %98 = vector.broadcast %97 : vector<8x1xf32> to vector<8x8xf32>
    %99 = arith.subf %95, %98 : vector<8x8xf32>
    %100 = math.exp %99 : vector<8x8xf32>
    %cst_46 = arith.constant dense<0.000000e+00> : vector<8xf32>
    %101 = vector.multi_reduction <add>, %100, %cst_46 [1] : vector<8x8xf32> to vector<8xf32>
    %102 = vector.shape_cast %101 : vector<8xf32> to vector<8x1xf32>
    %103 = vector.broadcast %102 : vector<8x1xf32> to vector<8x8xf32>
    %104 = arith.divf %100, %103 : vector<8x8xf32>
    %105 = arith.truncf %104 : vector<8x8xf32> to vector<8x8xbf16>
    %cst_47 = arith.constant dense<0.000000e+00> : vector<8x16xf32>
    %106 = tpu.matmul %105, %94, %cst_47 {dimension_numbers = #tpu.dot_dimension_numbers<[1], [0], [0], [1], [0, 0, 1, 1], [], []>} : vector<8x8xbf16>, vector<8x16xbf16>, vector<8x16xf32> -> vector<8x16xf32>
    %c0_48 = arith.constant 0 : index
    %c48 = arith.constant 48 : index
    %107 = vector.load %arg12[%c0_48, %c48] : memref<8x128xf32, #tpu.memory_space<vmem>>, vector<8x16xf32>
    tpu.vector_store %arg12[%c0_48, %c48], %106 {strides = array<i32>} : memref<8x128xf32, #tpu.memory_space<vmem>>, vector<8x16xf32>,
    %108 = vector.extract_strided_slice %31 {offsets = [0, 64], sizes = [8, 16], strides = [1, 1]} : vector<8x384xf32> to vector<8x16xf32>
    %109 = arith.truncf %108 : vector<8x16xf32> to vector<8x16xbf16>
    %110 = vector.extract_strided_slice %31 {offsets = [0, 192], sizes = [8, 16], strides = [1, 1]} : vector<8x384xf32> to vector<8x16xf32>
    %111 = arith.truncf %110 : vector<8x16xf32> to vector<8x16xbf16>
    %112 = vector.extract_strided_slice %31 {offsets = [0, 320], sizes = [8, 16], strides = [1, 1]} : vector<8x384xf32> to vector<8x16xf32>
    %113 = arith.truncf %112 : vector<8x16xf32> to vector<8x16xbf16>
    "tpu.trace_start"() <{level = 10 : i32, message = "qd,kd->qk"}> : () -> ()
    %cst_49 = arith.constant dense<0.000000e+00> : vector<8x8xf32>
    %114 = tpu.matmul %109, %111, %cst_49 {dimension_numbers = #tpu.dot_dimension_numbers<[1], [1], [0], [0], [0, 0, 1, 0], [], []>} : vector<8x16xbf16>, vector<8x16xbf16>, vector<8x8xf32> -> vector<8x8xf32>
    "tpu.trace_stop"() : () -> ()
    %cst_50 = arith.constant dense<0xFF800000> : vector<8xf32>
    %115 = vector.multi_reduction <maximumf>, %114, %cst_50 [1] : vector<8x8xf32> to vector<8xf32>
    %116 = vector.shape_cast %115 : vector<8xf32> to vector<8x1xf32>
    %117 = vector.broadcast %116 : vector<8x1xf32> to vector<8x8xf32>
    %118 = arith.subf %114, %117 : vector<8x8xf32>
    %119 = math.exp %118 : vector<8x8xf32>
    %cst_51 = arith.constant dense<0.000000e+00> : vector<8xf32>
    %120 = vector.multi_reduction <add>, %119, %cst_51 [1] : vector<8x8xf32> to vector<8xf32>
    %121 = vector.shape_cast %120 : vector<8xf32> to vector<8x1xf32>
    %122 = vector.broadcast %121 : vector<8x1xf32> to vector<8x8xf32>
    %123 = arith.divf %119, %122 : vector<8x8xf32>
    %124 = arith.truncf %123 : vector<8x8xf32> to vector<8x8xbf16>
    %cst_52 = arith.constant dense<0.000000e+00> : vector<8x16xf32>
    %125 = tpu.matmul %124, %113, %cst_52 {dimension_numbers = #tpu.dot_dimension_numbers<[1], [0], [0], [1], [0, 0, 1, 1], [], []>} : vector<8x8xbf16>, vector<8x16xbf16>, vector<8x16xf32> -> vector<8x16xf32>
    %c0_53 = arith.constant 0 : index
    %c64 = arith.constant 64 : index
    %126 = vector.load %arg12[%c0_53, %c64] : memref<8x128xf32, #tpu.memory_space<vmem>>, vector<8x16xf32>
    tpu.vector_store %arg12[%c0_53, %c64], %125 {strides = array<i32>} : memref<8x128xf32, #tpu.memory_space<vmem>>, vector<8x16xf32>,
    %127 = vector.extract_strided_slice %31 {offsets = [0, 80], sizes = [8, 16], strides = [1, 1]} : vector<8x384xf32> to vector<8x16xf32>
    %128 = arith.truncf %127 : vector<8x16xf32> to vector<8x16xbf16>
    %129 = vector.extract_strided_slice %31 {offsets = [0, 208], sizes = [8, 16], strides = [1, 1]} : vector<8x384xf32> to vector<8x16xf32>
    %130 = arith.truncf %129 : vector<8x16xf32> to vector<8x16xbf16>
    %131 = vector.extract_strided_slice %31 {offsets = [0, 336], sizes = [8, 16], strides = [1, 1]} : vector<8x384xf32> to vector<8x16xf32>
    %132 = arith.truncf %131 : vector<8x16xf32> to vector<8x16xbf16>
    "tpu.trace_start"() <{level = 10 : i32, message = "qd,kd->qk"}> : () -> ()
    %cst_54 = arith.constant dense<0.000000e+00> : vector<8x8xf32>
    %133 = tpu.matmul %128, %130, %cst_54 {dimension_numbers = #tpu.dot_dimension_numbers<[1], [1], [0], [0], [0, 0, 1, 0], [], []>} : vector<8x16xbf16>, vector<8x16xbf16>, vector<8x8xf32> -> vector<8x8xf32>
    "tpu.trace_stop"() : () -> ()
    %cst_55 = arith.constant dense<0xFF800000> : vector<8xf32>
    %134 = vector.multi_reduction <maximumf>, %133, %cst_55 [1] : vector<8x8xf32> to vector<8xf32>
    %135 = vector.shape_cast %134 : vector<8xf32> to vector<8x1xf32>
    %136 = vector.broadcast %135 : vector<8x1xf32> to vector<8x8xf32>
    %137 = arith.subf %133, %136 : vector<8x8xf32>
    %138 = math.exp %137 : vector<8x8xf32>
    %cst_56 = arith.constant dense<0.000000e+00> : vector<8xf32>
    %139 = vector.multi_reduction <add>, %138, %cst_56 [1] : vector<8x8xf32> to vector<8xf32>
    %140 = vector.shape_cast %139 : vector<8xf32> to vector<8x1xf32>
    %141 = vector.broadcast %140 : vector<8x1xf32> to vector<8x8xf32>
    %142 = arith.divf %138, %141 : vector<8x8xf32>
    %143 = arith.truncf %142 : vector<8x8xf32> to vector<8x8xbf16>
    %cst_57 = arith.constant dense<0.000000e+00> : vector<8x16xf32>
    %144 = tpu.matmul %143, %132, %cst_57 {dimension_numbers = #tpu.dot_dimension_numbers<[1], [0], [0], [1], [0, 0, 1, 1], [], []>} : vector<8x8xbf16>, vector<8x16xbf16>, vector<8x16xf32> -> vector<8x16xf32>
    %c0_58 = arith.constant 0 : index
    %c80 = arith.constant 80 : index
    %145 = vector.load %arg12[%c0_58, %c80] : memref<8x128xf32, #tpu.memory_space<vmem>>, vector<8x16xf32>
    tpu.vector_store %arg12[%c0_58, %c80], %144 {strides = array<i32>} : memref<8x128xf32, #tpu.memory_space<vmem>>, vector<8x16xf32>,
    %146 = vector.extract_strided_slice %31 {offsets = [0, 96], sizes = [8, 16], strides = [1, 1]} : vector<8x384xf32> to vector<8x16xf32>
    %147 = arith.truncf %146 : vector<8x16xf32> to vector<8x16xbf16>
    %148 = vector.extract_strided_slice %31 {offsets = [0, 224], sizes = [8, 16], strides = [1, 1]} : vector<8x384xf32> to vector<8x16xf32>
    %149 = arith.truncf %148 : vector<8x16xf32> to vector<8x16xbf16>
    %150 = vector.extract_strided_slice %31 {offsets = [0, 352], sizes = [8, 16], strides = [1, 1]} : vector<8x384xf32> to vector<8x16xf32>
    %151 = arith.truncf %150 : vector<8x16xf32> to vector<8x16xbf16>
    "tpu.trace_start"() <{level = 10 : i32, message = "qd,kd->qk"}> : () -> ()
    %cst_59 = arith.constant dense<0.000000e+00> : vector<8x8xf32>
    %152 = tpu.matmul %147, %149, %cst_59 {dimension_numbers = #tpu.dot_dimension_numbers<[1], [1], [0], [0], [0, 0, 1, 0], [], []>} : vector<8x16xbf16>, vector<8x16xbf16>, vector<8x8xf32> -> vector<8x8xf32>
    "tpu.trace_stop"() : () -> ()
    %cst_60 = arith.constant dense<0xFF800000> : vector<8xf32>
    %153 = vector.multi_reduction <maximumf>, %152, %cst_60 [1] : vector<8x8xf32> to vector<8xf32>
    %154 = vector.shape_cast %153 : vector<8xf32> to vector<8x1xf32>
    %155 = vector.broadcast %154 : vector<8x1xf32> to vector<8x8xf32>
    %156 = arith.subf %152, %155 : vector<8x8xf32>
    %157 = math.exp %156 : vector<8x8xf32>
    %cst_61 = arith.constant dense<0.000000e+00> : vector<8xf32>
    %158 = vector.multi_reduction <add>, %157, %cst_61 [1] : vector<8x8xf32> to vector<8xf32>
    %159 = vector.shape_cast %158 : vector<8xf32> to vector<8x1xf32>
    %160 = vector.broadcast %159 : vector<8x1xf32> to vector<8x8xf32>
    %161 = arith.divf %157, %160 : vector<8x8xf32>
    %162 = arith.truncf %161 : vector<8x8xf32> to vector<8x8xbf16>
    %cst_62 = arith.constant dense<0.000000e+00> : vector<8x16xf32>
    %163 = tpu.matmul %162, %151, %cst_62 {dimension_numbers = #tpu.dot_dimension_numbers<[1], [0], [0], [1], [0, 0, 1, 1], [], []>} : vector<8x8xbf16>, vector<8x16xbf16>, vector<8x16xf32> -> vector<8x16xf32>
    %c0_63 = arith.constant 0 : index
    %c96 = arith.constant 96 : index
    %164 = vector.load %arg12[%c0_63, %c96] : memref<8x128xf32, #tpu.memory_space<vmem>>, vector<8x16xf32>
    tpu.vector_store %arg12[%c0_63, %c96], %163 {strides = array<i32>} : memref<8x128xf32, #tpu.memory_space<vmem>>, vector<8x16xf32>,
    %165 = vector.extract_strided_slice %31 {offsets = [0, 112], sizes = [8, 16], strides = [1, 1]} : vector<8x384xf32> to vector<8x16xf32>
    %166 = arith.truncf %165 : vector<8x16xf32> to vector<8x16xbf16>
    %167 = vector.extract_strided_slice %31 {offsets = [0, 240], sizes = [8, 16], strides = [1, 1]} : vector<8x384xf32> to vector<8x16xf32>
    %168 = arith.truncf %167 : vector<8x16xf32> to vector<8x16xbf16>
    %169 = vector.extract_strided_slice %31 {offsets = [0, 368], sizes = [8, 16], strides = [1, 1]} : vector<8x384xf32> to vector<8x16xf32>
    %170 = arith.truncf %169 : vector<8x16xf32> to vector<8x16xbf16>
    "tpu.trace_start"() <{level = 10 : i32, message = "qd,kd->qk"}> : () -> ()
    %cst_64 = arith.constant dense<0.000000e+00> : vector<8x8xf32>
    %171 = tpu.matmul %166, %168, %cst_64 {dimension_numbers = #tpu.dot_dimension_numbers<[1], [1], [0], [0], [0, 0, 1, 0], [], []>} : vector<8x16xbf16>, vector<8x16xbf16>, vector<8x8xf32> -> vector<8x8xf32>
    "tpu.trace_stop"() : () -> ()
    %cst_65 = arith.constant dense<0xFF800000> : vector<8xf32>
    %172 = vector.multi_reduction <maximumf>, %171, %cst_65 [1] : vector<8x8xf32> to vector<8xf32>
    %173 = vector.shape_cast %172 : vector<8xf32> to vector<8x1xf32>
    %174 = vector.broadcast %173 : vector<8x1xf32> to vector<8x8xf32>
    %175 = arith.subf %171, %174 : vector<8x8xf32>
    %176 = math.exp %175 : vector<8x8xf32>
    %cst_66 = arith.constant dense<0.000000e+00> : vector<8xf32>
    %177 = vector.multi_reduction <add>, %176, %cst_66 [1] : vector<8x8xf32> to vector<8xf32>
    %178 = vector.shape_cast %177 : vector<8xf32> to vector<8x1xf32>
    %179 = vector.broadcast %178 : vector<8x1xf32> to vector<8x8xf32>
    %180 = arith.divf %176, %179 : vector<8x8xf32>
    %181 = arith.truncf %180 : vector<8x8xf32> to vector<8x8xbf16>
    %cst_67 = arith.constant dense<0.000000e+00> : vector<8x16xf32>
    %182 = tpu.matmul %181, %170, %cst_67 {dimension_numbers = #tpu.dot_dimension_numbers<[1], [0], [0], [1], [0, 0, 1, 1], [], []>} : vector<8x8xbf16>, vector<8x16xbf16>, vector<8x16xf32> -> vector<8x16xf32>
    %c0_68 = arith.constant 0 : index
    %c112 = arith.constant 112 : index
    %183 = vector.load %arg12[%c0_68, %c112] : memref<8x128xf32, #tpu.memory_space<vmem>>, vector<8x16xf32>
    tpu.vector_store %arg12[%c0_68, %c112], %182 {strides = array<i32>} : memref<8x128xf32, #tpu.memory_space<vmem>>, vector<8x16xf32>,
    %c0_69 = arith.constant 0 : index
    %c0_70 = arith.constant 0 : index
    %184 = vector.load %arg12[%c0_69, %c0_70] : memref<8x128xf32, #tpu.memory_space<vmem>>, vector<8x128xf32>
    %185 = arith.truncf %184 : vector<8x128xf32> to vector<8x128xbf16>
    %cst_71 = arith.constant dense<0.000000e+00> : vector<8x128xf32>
    %186 = tpu.matmul %185, %13, %cst_71 {dimension_numbers = #tpu.dot_dimension_numbers<[1], [0], [0], [1], [0, 0, 1, 1], [], []>} : vector<8x128xbf16>, vector<128x128xbf16>, vector<8x128xf32> -> vector<8x128xf32>
    %187 = vector.broadcast %22 : vector<1x128xf32> to vector<8x128xf32>
    %188 = arith.addf %186, %187 : vector<8x128xf32>
    %189 = arith.addf %7, %188 : vector<8x128xf32>
    %cst_72 = arith.constant dense<0.000000e+00> : vector<8xf32>
    %190 = vector.multi_reduction <add>, %189, %cst_72 [1] : vector<8x128xf32> to vector<8xf32>
    %191 = vector.shape_cast %190 : vector<8xf32> to vector<8x1xf32>
    %cst_73 = arith.constant 1.280000e+02 : f32
    %192 = vector.broadcast %cst_73 : f32 to vector<8x1xf32>
    %193 = arith.divf %191, %192 : vector<8x1xf32>
    %194 = vector.broadcast %193 : vector<8x1xf32> to vector<8x128xf32>
    %195 = arith.subf %189, %194 : vector<8x128xf32>
    %196 = arith.mulf %195, %195 : vector<8x128xf32>
    %cst_74 = arith.constant dense<0.000000e+00> : vector<8xf32>
    %197 = vector.multi_reduction <add>, %196, %cst_74 [1] : vector<8x128xf32> to vector<8xf32>
    %198 = vector.shape_cast %197 : vector<8xf32> to vector<8x1xf32>
    %cst_75 = arith.constant 1.280000e+02 : f32
    %199 = vector.broadcast %cst_75 : f32 to vector<8x1xf32>
    %200 = arith.divf %198, %199 : vector<8x1xf32>
    %cst_76 = arith.constant 9.99999974E-6 : f32
    %201 = vector.broadcast %cst_76 : f32 to vector<8x1xf32>
    %202 = arith.addf %200, %201 : vector<8x1xf32>
    %203 = math.rsqrt %202 : vector<8x1xf32>
    %204 = vector.broadcast %203 : vector<8x1xf32> to vector<8x128xf32>
    %205 = arith.mulf %195, %204 : vector<8x128xf32>
    %206 = vector.broadcast %24 : vector<1x128xf32> to vector<8x128xf32>
    %207 = arith.mulf %205, %206 : vector<8x128xf32>
    %208 = vector.broadcast %25 : vector<1x128xf32> to vector<8x128xf32>
    %209 = arith.addf %207, %208 : vector<8x128xf32>
    %210 = arith.truncf %209 : vector<8x128xf32> to vector<8x128xbf16>
    %cst_77 = arith.constant dense<0.000000e+00> : vector<8x256xf32>
    %211 = tpu.matmul %210, %15, %cst_77 {dimension_numbers = #tpu.dot_dimension_numbers<[1], [0], [0], [1], [0, 0, 1, 1], [], []>} : vector<8x128xbf16>, vector<128x256xbf16>, vector<8x256xf32> -> vector<8x256xf32>
    %212 = vector.broadcast %19 : vector<1x256xf32> to vector<8x256xf32>
    %213 = arith.addf %211, %212 : vector<8x256xf32>
    %cst_78 = arith.constant 0.000000e+00 : f32
    %214 = vector.broadcast %cst_78 : f32 to vector<8x256xf32>
    %215 = arith.maximumf %213, %214 : vector<8x256xf32>
    %216 = arith.truncf %215 : vector<8x256xf32> to vector<8x256xbf16>
    %cst_79 = arith.constant dense<0.000000e+00> : vector<8x128xf32>
    %217 = tpu.matmul %216, %17, %cst_79 {dimension_numbers = #tpu.dot_dimension_numbers<[1], [0], [0], [1], [0, 0, 1, 1], [], []>} : vector<8x256xbf16>, vector<256x128xbf16>, vector<8x128xf32> -> vector<8x128xf32>
    %218 = vector.broadcast %23 : vector<1x128xf32> to vector<8x128xf32>
    %219 = arith.addf %217, %218 : vector<8x128xf32>
    %220 = arith.addf %209, %219 : vector<8x128xf32>
    %cst_80 = arith.constant dense<0.000000e+00> : vector<8xf32>
    %221 = vector.multi_reduction <add>, %220, %cst_80 [1] : vector<8x128xf32> to vector<8xf32>
    %222 = vector.shape_cast %221 : vector<8xf32> to vector<8x1xf32>
    %cst_81 = arith.constant 1.280000e+02 : f32
    %223 = vector.broadcast %cst_81 : f32 to vector<8x1xf32>
    %224 = arith.divf %222, %223 : vector<8x1xf32>
    %225 = vector.broadcast %224 : vector<8x1xf32> to vector<8x128xf32>
    %226 = arith.subf %220, %225 : vector<8x128xf32>
    %227 = arith.mulf %226, %226 : vector<8x128xf32>
    %cst_82 = arith.constant dense<0.000000e+00> : vector<8xf32>
    %228 = vector.multi_reduction <add>, %227, %cst_82 [1] : vector<8x128xf32> to vector<8xf32>
    %229 = vector.shape_cast %228 : vector<8xf32> to vector<8x1xf32>
    %cst_83 = arith.constant 1.280000e+02 : f32
    %230 = vector.broadcast %cst_83 : f32 to vector<8x1xf32>
    %231 = arith.divf %229, %230 : vector<8x1xf32>
    %cst_84 = arith.constant 9.99999974E-6 : f32
    %232 = vector.broadcast %cst_84 : f32 to vector<8x1xf32>
    %233 = arith.addf %231, %232 : vector<8x1xf32>
    %234 = math.rsqrt %233 : vector<8x1xf32>
    %235 = vector.broadcast %234 : vector<8x1xf32> to vector<8x128xf32>
    %236 = arith.mulf %226, %235 : vector<8x128xf32>
    %237 = vector.broadcast %26 : vector<1x128xf32> to vector<8x128xf32>
    %238 = arith.mulf %236, %237 : vector<8x128xf32>
    %239 = vector.broadcast %27 : vector<1x128xf32> to vector<8x128xf32>
    %240 = arith.addf %238, %239 : vector<8x128xf32>
    %c1 = arith.constant 1 : index
    %c0_85 = arith.constant 0 : index
    %c0_86 = arith.constant 0 : index
    %241 = vector.load %arg4[%c1, %c0_85, %c0_86] : memref<2x128x384xbf16, #tpu.memory_space<vmem>>, vector<1x128x384xbf16>
    %242 = vector.shape_cast %241 : vector<1x128x384xbf16> to vector<128x384xbf16>
    %c1_87 = arith.constant 1 : index
    %c0_88 = arith.constant 0 : index
    %c0_89 = arith.constant 0 : index
    %243 = vector.load %arg5[%c1_87, %c0_88, %c0_89] : memref<2x1x384xf32, #tpu.memory_space<vmem>>, vector<1x1x384xf32>
    %244 = vector.shape_cast %243 : vector<1x1x384xf32> to vector<1x384xf32>
    %c1_90 = arith.constant 1 : index
    %c0_91 = arith.constant 0 : index
    %c0_92 = arith.constant 0 : index
    %245 = vector.load %arg6[%c1_90, %c0_91, %c0_92] : memref<2x128x128xbf16, #tpu.memory_space<vmem>>, vector<1x128x128xbf16>
    %246 = vector.shape_cast %245 : vector<1x128x128xbf16> to vector<128x128xbf16>
    %c1_93 = arith.constant 1 : index
    %c0_94 = arith.constant 0 : index
    %c0_95 = arith.constant 0 : index
    %247 = vector.load %arg7[%c1_93, %c0_94, %c0_95] : memref<2x128x256xbf16, #tpu.memory_space<vmem>>, vector<1x128x256xbf16>
    %248 = vector.shape_cast %247 : vector<1x128x256xbf16> to vector<128x256xbf16>
    %c1_96 = arith.constant 1 : index
    %c0_97 = arith.constant 0 : index
    %c0_98 = arith.constant 0 : index
    %249 = vector.load %arg9[%c1_96, %c0_97, %c0_98] : memref<2x256x128xbf16, #tpu.memory_space<vmem>>, vector<1x256x128xbf16>
    %250 = vector.shape_cast %249 : vector<1x256x128xbf16> to vector<256x128xbf16>
    %c1_99 = arith.constant 1 : index
    %c0_100 = arith.constant 0 : index
    %c0_101 = arith.constant 0 : index
    %251 = vector.load %arg8[%c1_99, %c0_100, %c0_101] : memref<2x1x256xf32, #tpu.memory_space<vmem>>, vector<1x1x256xf32>
    %252 = vector.shape_cast %251 : vector<1x1x256xf32> to vector<1x256xf32>
    %c1_102 = arith.constant 1 : index
    %c0_103 = arith.constant 0 : index
    %c0_104 = arith.constant 0 : index
    %253 = vector.load %arg10[%c1_102, %c0_103, %c0_104] : memref<2x6x128xf32, #tpu.memory_space<vmem>>, vector<1x6x128xf32>
    %254 = vector.shape_cast %253 : vector<1x6x128xf32> to vector<6x128xf32>
    %255 = vector.extract_strided_slice %254 {offsets = [0, 0], sizes = [1, 128], strides = [1, 1]} : vector<6x128xf32> to vector<1x128xf32>
    %256 = vector.extract_strided_slice %254 {offsets = [1, 0], sizes = [1, 128], strides = [1, 1]} : vector<6x128xf32> to vector<1x128xf32>
    %257 = vector.extract_strided_slice %254 {offsets = [2, 0], sizes = [1, 128], strides = [1, 1]} : vector<6x128xf32> to vector<1x128xf32>
    %258 = vector.extract_strided_slice %254 {offsets = [3, 0], sizes = [1, 128], strides = [1, 1]} : vector<6x128xf32> to vector<1x128xf32>
    %259 = vector.extract_strided_slice %254 {offsets = [4, 0], sizes = [1, 128], strides = [1, 1]} : vector<6x128xf32> to vector<1x128xf32>
    %260 = vector.extract_strided_slice %254 {offsets = [5, 0], sizes = [1, 128], strides = [1, 1]} : vector<6x128xf32> to vector<1x128xf32>
    %261 = arith.truncf %240 : vector<8x128xf32> to vector<8x128xbf16>
    %cst_105 = arith.constant dense<0.000000e+00> : vector<8x384xf32>
    %262 = tpu.matmul %261, %242, %cst_105 {dimension_numbers = #tpu.dot_dimension_numbers<[1], [0], [0], [1], [0, 0, 1, 1], [], []>} : vector<8x128xbf16>, vector<128x384xbf16>, vector<8x384xf32> -> vector<8x384xf32>
    %263 = vector.broadcast %244 : vector<1x384xf32> to vector<8x384xf32>
    %264 = arith.addf %262, %263 : vector<8x384xf32>
    %265 = vector.extract_strided_slice %264 {offsets = [0, 0], sizes = [8, 16], strides = [1, 1]} : vector<8x384xf32> to vector<8x16xf32>
    %266 = arith.truncf %265 : vector<8x16xf32> to vector<8x16xbf16>
    %267 = vector.extract_strided_slice %264 {offsets = [0, 128], sizes = [8, 16], strides = [1, 1]} : vector<8x384xf32> to vector<8x16xf32>
    %268 = arith.truncf %267 : vector<8x16xf32> to vector<8x16xbf16>
    %269 = vector.extract_strided_slice %264 {offsets = [0, 256], sizes = [8, 16], strides = [1, 1]} : vector<8x384xf32> to vector<8x16xf32>
    %270 = arith.truncf %269 : vector<8x16xf32> to vector<8x16xbf16>
    "tpu.trace_start"() <{level = 10 : i32, message = "qd,kd->qk"}> : () -> ()
    %cst_106 = arith.constant dense<0.000000e+00> : vector<8x8xf32>
    %271 = tpu.matmul %266, %268, %cst_106 {dimension_numbers = #tpu.dot_dimension_numbers<[1], [1], [0], [0], [0, 0, 1, 0], [], []>} : vector<8x16xbf16>, vector<8x16xbf16>, vector<8x8xf32> -> vector<8x8xf32>
    "tpu.trace_stop"() : () -> ()
    %cst_107 = arith.constant dense<0xFF800000> : vector<8xf32>
    %272 = vector.multi_reduction <maximumf>, %271, %cst_107 [1] : vector<8x8xf32> to vector<8xf32>
    %273 = vector.shape_cast %272 : vector<8xf32> to vector<8x1xf32>
    %274 = vector.broadcast %273 : vector<8x1xf32> to vector<8x8xf32>
    %275 = arith.subf %271, %274 : vector<8x8xf32>
    %276 = math.exp %275 : vector<8x8xf32>
    %cst_108 = arith.constant dense<0.000000e+00> : vector<8xf32>
    %277 = vector.multi_reduction <add>, %276, %cst_108 [1] : vector<8x8xf32> to vector<8xf32>
    %278 = vector.shape_cast %277 : vector<8xf32> to vector<8x1xf32>
    %279 = vector.broadcast %278 : vector<8x1xf32> to vector<8x8xf32>
    %280 = arith.divf %276, %279 : vector<8x8xf32>
    %281 = arith.truncf %280 : vector<8x8xf32> to vector<8x8xbf16>
    %cst_109 = arith.constant dense<0.000000e+00> : vector<8x16xf32>
    %282 = tpu.matmul %281, %270, %cst_109 {dimension_numbers = #tpu.dot_dimension_numbers<[1], [0], [0], [1], [0, 0, 1, 1], [], []>} : vector<8x8xbf16>, vector<8x16xbf16>, vector<8x16xf32> -> vector<8x16xf32>
    %c0_110 = arith.constant 0 : index
    %c0_111 = arith.constant 0 : index
    %283 = vector.load %arg12[%c0_110, %c0_111] : memref<8x128xf32, #tpu.memory_space<vmem>>, vector<8x16xf32>
    tpu.vector_store %arg12[%c0_110, %c0_111], %282 {strides = array<i32>} : memref<8x128xf32, #tpu.memory_space<vmem>>, vector<8x16xf32>,
    %284 = vector.extract_strided_slice %264 {offsets = [0, 16], sizes = [8, 16], strides = [1, 1]} : vector<8x384xf32> to vector<8x16xf32>
    %285 = arith.truncf %284 : vector<8x16xf32> to vector<8x16xbf16>
    %286 = vector.extract_strided_slice %264 {offsets = [0, 144], sizes = [8, 16], strides = [1, 1]} : vector<8x384xf32> to vector<8x16xf32>
    %287 = arith.truncf %286 : vector<8x16xf32> to vector<8x16xbf16>
    %288 = vector.extract_strided_slice %264 {offsets = [0, 272], sizes = [8, 16], strides = [1, 1]} : vector<8x384xf32> to vector<8x16xf32>
    %289 = arith.truncf %288 : vector<8x16xf32> to vector<8x16xbf16>
    "tpu.trace_start"() <{level = 10 : i32, message = "qd,kd->qk"}> : () -> ()
    %cst_112 = arith.constant dense<0.000000e+00> : vector<8x8xf32>
    %290 = tpu.matmul %285, %287, %cst_112 {dimension_numbers = #tpu.dot_dimension_numbers<[1], [1], [0], [0], [0, 0, 1, 0], [], []>} : vector<8x16xbf16>, vector<8x16xbf16>, vector<8x8xf32> -> vector<8x8xf32>
    "tpu.trace_stop"() : () -> ()
    %cst_113 = arith.constant dense<0xFF800000> : vector<8xf32>
    %291 = vector.multi_reduction <maximumf>, %290, %cst_113 [1] : vector<8x8xf32> to vector<8xf32>
    %292 = vector.shape_cast %291 : vector<8xf32> to vector<8x1xf32>
    %293 = vector.broadcast %292 : vector<8x1xf32> to vector<8x8xf32>
    %294 = arith.subf %290, %293 : vector<8x8xf32>
    %295 = math.exp %294 : vector<8x8xf32>
    %cst_114 = arith.constant dense<0.000000e+00> : vector<8xf32>
    %296 = vector.multi_reduction <add>, %295, %cst_114 [1] : vector<8x8xf32> to vector<8xf32>
    %297 = vector.shape_cast %296 : vector<8xf32> to vector<8x1xf32>
    %298 = vector.broadcast %297 : vector<8x1xf32> to vector<8x8xf32>
    %299 = arith.divf %295, %298 : vector<8x8xf32>
    %300 = arith.truncf %299 : vector<8x8xf32> to vector<8x8xbf16>
    %cst_115 = arith.constant dense<0.000000e+00> : vector<8x16xf32>
    %301 = tpu.matmul %300, %289, %cst_115 {dimension_numbers = #tpu.dot_dimension_numbers<[1], [0], [0], [1], [0, 0, 1, 1], [], []>} : vector<8x8xbf16>, vector<8x16xbf16>, vector<8x16xf32> -> vector<8x16xf32>
    %c0_116 = arith.constant 0 : index
    %c16_117 = arith.constant 16 : index
    %302 = vector.load %arg12[%c0_116, %c16_117] : memref<8x128xf32, #tpu.memory_space<vmem>>, vector<8x16xf32>
    tpu.vector_store %arg12[%c0_116, %c16_117], %301 {strides = array<i32>} : memref<8x128xf32, #tpu.memory_space<vmem>>, vector<8x16xf32>,
    %303 = vector.extract_strided_slice %264 {offsets = [0, 32], sizes = [8, 16], strides = [1, 1]} : vector<8x384xf32> to vector<8x16xf32>
    %304 = arith.truncf %303 : vector<8x16xf32> to vector<8x16xbf16>
    %305 = vector.extract_strided_slice %264 {offsets = [0, 160], sizes = [8, 16], strides = [1, 1]} : vector<8x384xf32> to vector<8x16xf32>
    %306 = arith.truncf %305 : vector<8x16xf32> to vector<8x16xbf16>
    %307 = vector.extract_strided_slice %264 {offsets = [0, 288], sizes = [8, 16], strides = [1, 1]} : vector<8x384xf32> to vector<8x16xf32>
    %308 = arith.truncf %307 : vector<8x16xf32> to vector<8x16xbf16>
    "tpu.trace_start"() <{level = 10 : i32, message = "qd,kd->qk"}> : () -> ()
    %cst_118 = arith.constant dense<0.000000e+00> : vector<8x8xf32>
    %309 = tpu.matmul %304, %306, %cst_118 {dimension_numbers = #tpu.dot_dimension_numbers<[1], [1], [0], [0], [0, 0, 1, 0], [], []>} : vector<8x16xbf16>, vector<8x16xbf16>, vector<8x8xf32> -> vector<8x8xf32>
    "tpu.trace_stop"() : () -> ()
    %cst_119 = arith.constant dense<0xFF800000> : vector<8xf32>
    %310 = vector.multi_reduction <maximumf>, %309, %cst_119 [1] : vector<8x8xf32> to vector<8xf32>
    %311 = vector.shape_cast %310 : vector<8xf32> to vector<8x1xf32>
    %312 = vector.broadcast %311 : vector<8x1xf32> to vector<8x8xf32>
    %313 = arith.subf %309, %312 : vector<8x8xf32>
    %314 = math.exp %313 : vector<8x8xf32>
    %cst_120 = arith.constant dense<0.000000e+00> : vector<8xf32>
    %315 = vector.multi_reduction <add>, %314, %cst_120 [1] : vector<8x8xf32> to vector<8xf32>
    %316 = vector.shape_cast %315 : vector<8xf32> to vector<8x1xf32>
    %317 = vector.broadcast %316 : vector<8x1xf32> to vector<8x8xf32>
    %318 = arith.divf %314, %317 : vector<8x8xf32>
    %319 = arith.truncf %318 : vector<8x8xf32> to vector<8x8xbf16>
    %cst_121 = arith.constant dense<0.000000e+00> : vector<8x16xf32>
    %320 = tpu.matmul %319, %308, %cst_121 {dimension_numbers = #tpu.dot_dimension_numbers<[1], [0], [0], [1], [0, 0, 1, 1], [], []>} : vector<8x8xbf16>, vector<8x16xbf16>, vector<8x16xf32> -> vector<8x16xf32>
    %c0_122 = arith.constant 0 : index
    %c32_123 = arith.constant 32 : index
    %321 = vector.load %arg12[%c0_122, %c32_123] : memref<8x128xf32, #tpu.memory_space<vmem>>, vector<8x16xf32>
    tpu.vector_store %arg12[%c0_122, %c32_123], %320 {strides = array<i32>} : memref<8x128xf32, #tpu.memory_space<vmem>>, vector<8x16xf32>,
    %322 = vector.extract_strided_slice %264 {offsets = [0, 48], sizes = [8, 16], strides = [1, 1]} : vector<8x384xf32> to vector<8x16xf32>
    %323 = arith.truncf %322 : vector<8x16xf32> to vector<8x16xbf16>
    %324 = vector.extract_strided_slice %264 {offsets = [0, 176], sizes = [8, 16], strides = [1, 1]} : vector<8x384xf32> to vector<8x16xf32>
    %325 = arith.truncf %324 : vector<8x16xf32> to vector<8x16xbf16>
    %326 = vector.extract_strided_slice %264 {offsets = [0, 304], sizes = [8, 16], strides = [1, 1]} : vector<8x384xf32> to vector<8x16xf32>
    %327 = arith.truncf %326 : vector<8x16xf32> to vector<8x16xbf16>
    "tpu.trace_start"() <{level = 10 : i32, message = "qd,kd->qk"}> : () -> ()
    %cst_124 = arith.constant dense<0.000000e+00> : vector<8x8xf32>
    %328 = tpu.matmul %323, %325, %cst_124 {dimension_numbers = #tpu.dot_dimension_numbers<[1], [1], [0], [0], [0, 0, 1, 0], [], []>} : vector<8x16xbf16>, vector<8x16xbf16>, vector<8x8xf32> -> vector<8x8xf32>
    "tpu.trace_stop"() : () -> ()
    %cst_125 = arith.constant dense<0xFF800000> : vector<8xf32>
    %329 = vector.multi_reduction <maximumf>, %328, %cst_125 [1] : vector<8x8xf32> to vector<8xf32>
    %330 = vector.shape_cast %329 : vector<8xf32> to vector<8x1xf32>
    %331 = vector.broadcast %330 : vector<8x1xf32> to vector<8x8xf32>
    %332 = arith.subf %328, %331 : vector<8x8xf32>
    %333 = math.exp %332 : vector<8x8xf32>
    %cst_126 = arith.constant dense<0.000000e+00> : vector<8xf32>
    %334 = vector.multi_reduction <add>, %333, %cst_126 [1] : vector<8x8xf32> to vector<8xf32>
    %335 = vector.shape_cast %334 : vector<8xf32> to vector<8x1xf32>
    %336 = vector.broadcast %335 : vector<8x1xf32> to vector<8x8xf32>
    %337 = arith.divf %333, %336 : vector<8x8xf32>
    %338 = arith.truncf %337 : vector<8x8xf32> to vector<8x8xbf16>
    %cst_127 = arith.constant dense<0.000000e+00> : vector<8x16xf32>
    %339 = tpu.matmul %338, %327, %cst_127 {dimension_numbers = #tpu.dot_dimension_numbers<[1], [0], [0], [1], [0, 0, 1, 1], [], []>} : vector<8x8xbf16>, vector<8x16xbf16>, vector<8x16xf32> -> vector<8x16xf32>
    %c0_128 = arith.constant 0 : index
    %c48_129 = arith.constant 48 : index
    %340 = vector.load %arg12[%c0_128, %c48_129] : memref<8x128xf32, #tpu.memory_space<vmem>>, vector<8x16xf32>
    tpu.vector_store %arg12[%c0_128, %c48_129], %339 {strides = array<i32>} : memref<8x128xf32, #tpu.memory_space<vmem>>, vector<8x16xf32>,
    %341 = vector.extract_strided_slice %264 {offsets = [0, 64], sizes = [8, 16], strides = [1, 1]} : vector<8x384xf32> to vector<8x16xf32>
    %342 = arith.truncf %341 : vector<8x16xf32> to vector<8x16xbf16>
    %343 = vector.extract_strided_slice %264 {offsets = [0, 192], sizes = [8, 16], strides = [1, 1]} : vector<8x384xf32> to vector<8x16xf32>
    %344 = arith.truncf %343 : vector<8x16xf32> to vector<8x16xbf16>
    %345 = vector.extract_strided_slice %264 {offsets = [0, 320], sizes = [8, 16], strides = [1, 1]} : vector<8x384xf32> to vector<8x16xf32>
    %346 = arith.truncf %345 : vector<8x16xf32> to vector<8x16xbf16>
    "tpu.trace_start"() <{level = 10 : i32, message = "qd,kd->qk"}> : () -> ()
    %cst_130 = arith.constant dense<0.000000e+00> : vector<8x8xf32>
    %347 = tpu.matmul %342, %344, %cst_130 {dimension_numbers = #tpu.dot_dimension_numbers<[1], [1], [0], [0], [0, 0, 1, 0], [], []>} : vector<8x16xbf16>, vector<8x16xbf16>, vector<8x8xf32> -> vector<8x8xf32>
    "tpu.trace_stop"() : () -> ()
    %cst_131 = arith.constant dense<0xFF800000> : vector<8xf32>
    %348 = vector.multi_reduction <maximumf>, %347, %cst_131 [1] : vector<8x8xf32> to vector<8xf32>
    %349 = vector.shape_cast %348 : vector<8xf32> to vector<8x1xf32>
    %350 = vector.broadcast %349 : vector<8x1xf32> to vector<8x8xf32>
    %351 = arith.subf %347, %350 : vector<8x8xf32>
    %352 = math.exp %351 : vector<8x8xf32>
    %cst_132 = arith.constant dense<0.000000e+00> : vector<8xf32>
    %353 = vector.multi_reduction <add>, %352, %cst_132 [1] : vector<8x8xf32> to vector<8xf32>
    %354 = vector.shape_cast %353 : vector<8xf32> to vector<8x1xf32>
    %355 = vector.broadcast %354 : vector<8x1xf32> to vector<8x8xf32>
    %356 = arith.divf %352, %355 : vector<8x8xf32>
    %357 = arith.truncf %356 : vector<8x8xf32> to vector<8x8xbf16>
    %cst_133 = arith.constant dense<0.000000e+00> : vector<8x16xf32>
    %358 = tpu.matmul %357, %346, %cst_133 {dimension_numbers = #tpu.dot_dimension_numbers<[1], [0], [0], [1], [0, 0, 1, 1], [], []>} : vector<8x8xbf16>, vector<8x16xbf16>, vector<8x16xf32> -> vector<8x16xf32>
    %c0_134 = arith.constant 0 : index
    %c64_135 = arith.constant 64 : index
    %359 = vector.load %arg12[%c0_134, %c64_135] : memref<8x128xf32, #tpu.memory_space<vmem>>, vector<8x16xf32>
    tpu.vector_store %arg12[%c0_134, %c64_135], %358 {strides = array<i32>} : memref<8x128xf32, #tpu.memory_space<vmem>>, vector<8x16xf32>,
    %360 = vector.extract_strided_slice %264 {offsets = [0, 80], sizes = [8, 16], strides = [1, 1]} : vector<8x384xf32> to vector<8x16xf32>
    %361 = arith.truncf %360 : vector<8x16xf32> to vector<8x16xbf16>
    %362 = vector.extract_strided_slice %264 {offsets = [0, 208], sizes = [8, 16], strides = [1, 1]} : vector<8x384xf32> to vector<8x16xf32>
    %363 = arith.truncf %362 : vector<8x16xf32> to vector<8x16xbf16>
    %364 = vector.extract_strided_slice %264 {offsets = [0, 336], sizes = [8, 16], strides = [1, 1]} : vector<8x384xf32> to vector<8x16xf32>
    %365 = arith.truncf %364 : vector<8x16xf32> to vector<8x16xbf16>
    "tpu.trace_start"() <{level = 10 : i32, message = "qd,kd->qk"}> : () -> ()
    %cst_136 = arith.constant dense<0.000000e+00> : vector<8x8xf32>
    %366 = tpu.matmul %361, %363, %cst_136 {dimension_numbers = #tpu.dot_dimension_numbers<[1], [1], [0], [0], [0, 0, 1, 0], [], []>} : vector<8x16xbf16>, vector<8x16xbf16>, vector<8x8xf32> -> vector<8x8xf32>
    "tpu.trace_stop"() : () -> ()
    %cst_137 = arith.constant dense<0xFF800000> : vector<8xf32>
    %367 = vector.multi_reduction <maximumf>, %366, %cst_137 [1] : vector<8x8xf32> to vector<8xf32>
    %368 = vector.shape_cast %367 : vector<8xf32> to vector<8x1xf32>
    %369 = vector.broadcast %368 : vector<8x1xf32> to vector<8x8xf32>
    %370 = arith.subf %366, %369 : vector<8x8xf32>
    %371 = math.exp %370 : vector<8x8xf32>
    %cst_138 = arith.constant dense<0.000000e+00> : vector<8xf32>
    %372 = vector.multi_reduction <add>, %371, %cst_138 [1] : vector<8x8xf32> to vector<8xf32>
    %373 = vector.shape_cast %372 : vector<8xf32> to vector<8x1xf32>
    %374 = vector.broadcast %373 : vector<8x1xf32> to vector<8x8xf32>
    %375 = arith.divf %371, %374 : vector<8x8xf32>
    %376 = arith.truncf %375 : vector<8x8xf32> to vector<8x8xbf16>
    %cst_139 = arith.constant dense<0.000000e+00> : vector<8x16xf32>
    %377 = tpu.matmul %376, %365, %cst_139 {dimension_numbers = #tpu.dot_dimension_numbers<[1], [0], [0], [1], [0, 0, 1, 1], [], []>} : vector<8x8xbf16>, vector<8x16xbf16>, vector<8x16xf32> -> vector<8x16xf32>
    %c0_140 = arith.constant 0 : index
    %c80_141 = arith.constant 80 : index
    %378 = vector.load %arg12[%c0_140, %c80_141] : memref<8x128xf32, #tpu.memory_space<vmem>>, vector<8x16xf32>
    tpu.vector_store %arg12[%c0_140, %c80_141], %377 {strides = array<i32>} : memref<8x128xf32, #tpu.memory_space<vmem>>, vector<8x16xf32>,
    %379 = vector.extract_strided_slice %264 {offsets = [0, 96], sizes = [8, 16], strides = [1, 1]} : vector<8x384xf32> to vector<8x16xf32>
    %380 = arith.truncf %379 : vector<8x16xf32> to vector<8x16xbf16>
    %381 = vector.extract_strided_slice %264 {offsets = [0, 224], sizes = [8, 16], strides = [1, 1]} : vector<8x384xf32> to vector<8x16xf32>
    %382 = arith.truncf %381 : vector<8x16xf32> to vector<8x16xbf16>
    %383 = vector.extract_strided_slice %264 {offsets = [0, 352], sizes = [8, 16], strides = [1, 1]} : vector<8x384xf32> to vector<8x16xf32>
    %384 = arith.truncf %383 : vector<8x16xf32> to vector<8x16xbf16>
    "tpu.trace_start"() <{level = 10 : i32, message = "qd,kd->qk"}> : () -> ()
    %cst_142 = arith.constant dense<0.000000e+00> : vector<8x8xf32>
    %385 = tpu.matmul %380, %382, %cst_142 {dimension_numbers = #tpu.dot_dimension_numbers<[1], [1], [0], [0], [0, 0, 1, 0], [], []>} : vector<8x16xbf16>, vector<8x16xbf16>, vector<8x8xf32> -> vector<8x8xf32>
    "tpu.trace_stop"() : () -> ()
    %cst_143 = arith.constant dense<0xFF800000> : vector<8xf32>
    %386 = vector.multi_reduction <maximumf>, %385, %cst_143 [1] : vector<8x8xf32> to vector<8xf32>
    %387 = vector.shape_cast %386 : vector<8xf32> to vector<8x1xf32>
    %388 = vector.broadcast %387 : vector<8x1xf32> to vector<8x8xf32>
    %389 = arith.subf %385, %388 : vector<8x8xf32>
    %390 = math.exp %389 : vector<8x8xf32>
    %cst_144 = arith.constant dense<0.000000e+00> : vector<8xf32>
    %391 = vector.multi_reduction <add>, %390, %cst_144 [1] : vector<8x8xf32> to vector<8xf32>
    %392 = vector.shape_cast %391 : vector<8xf32> to vector<8x1xf32>
    %393 = vector.broadcast %392 : vector<8x1xf32> to vector<8x8xf32>
    %394 = arith.divf %390, %393 : vector<8x8xf32>
    %395 = arith.truncf %394 : vector<8x8xf32> to vector<8x8xbf16>
    %cst_145 = arith.constant dense<0.000000e+00> : vector<8x16xf32>
    %396 = tpu.matmul %395, %384, %cst_145 {dimension_numbers = #tpu.dot_dimension_numbers<[1], [0], [0], [1], [0, 0, 1, 1], [], []>} : vector<8x8xbf16>, vector<8x16xbf16>, vector<8x16xf32> -> vector<8x16xf32>
    %c0_146 = arith.constant 0 : index
    %c96_147 = arith.constant 96 : index
    %397 = vector.load %arg12[%c0_146, %c96_147] : memref<8x128xf32, #tpu.memory_space<vmem>>, vector<8x16xf32>
    tpu.vector_store %arg12[%c0_146, %c96_147], %396 {strides = array<i32>} : memref<8x128xf32, #tpu.memory_space<vmem>>, vector<8x16xf32>,
    %398 = vector.extract_strided_slice %264 {offsets = [0, 112], sizes = [8, 16], strides = [1, 1]} : vector<8x384xf32> to vector<8x16xf32>
    %399 = arith.truncf %398 : vector<8x16xf32> to vector<8x16xbf16>
    %400 = vector.extract_strided_slice %264 {offsets = [0, 240], sizes = [8, 16], strides = [1, 1]} : vector<8x384xf32> to vector<8x16xf32>
    %401 = arith.truncf %400 : vector<8x16xf32> to vector<8x16xbf16>
    %402 = vector.extract_strided_slice %264 {offsets = [0, 368], sizes = [8, 16], strides = [1, 1]} : vector<8x384xf32> to vector<8x16xf32>
    %403 = arith.truncf %402 : vector<8x16xf32> to vector<8x16xbf16>
    "tpu.trace_start"() <{level = 10 : i32, message = "qd,kd->qk"}> : () -> ()
    %cst_148 = arith.constant dense<0.000000e+00> : vector<8x8xf32>
    %404 = tpu.matmul %399, %401, %cst_148 {dimension_numbers = #tpu.dot_dimension_numbers<[1], [1], [0], [0], [0, 0, 1, 0], [], []>} : vector<8x16xbf16>, vector<8x16xbf16>, vector<8x8xf32> -> vector<8x8xf32>
    "tpu.trace_stop"() : () -> ()
    %cst_149 = arith.constant dense<0xFF800000> : vector<8xf32>
    %405 = vector.multi_reduction <maximumf>, %404, %cst_149 [1] : vector<8x8xf32> to vector<8xf32>
    %406 = vector.shape_cast %405 : vector<8xf32> to vector<8x1xf32>
    %407 = vector.broadcast %406 : vector<8x1xf32> to vector<8x8xf32>
    %408 = arith.subf %404, %407 : vector<8x8xf32>
    %409 = math.exp %408 : vector<8x8xf32>
    %cst_150 = arith.constant dense<0.000000e+00> : vector<8xf32>
    %410 = vector.multi_reduction <add>, %409, %cst_150 [1] : vector<8x8xf32> to vector<8xf32>
    %411 = vector.shape_cast %410 : vector<8xf32> to vector<8x1xf32>
    %412 = vector.broadcast %411 : vector<8x1xf32> to vector<8x8xf32>
    %413 = arith.divf %409, %412 : vector<8x8xf32>
    %414 = arith.truncf %413 : vector<8x8xf32> to vector<8x8xbf16>
    %cst_151 = arith.constant dense<0.000000e+00> : vector<8x16xf32>
    %415 = tpu.matmul %414, %403, %cst_151 {dimension_numbers = #tpu.dot_dimension_numbers<[1], [0], [0], [1], [0, 0, 1, 1], [], []>} : vector<8x8xbf16>, vector<8x16xbf16>, vector<8x16xf32> -> vector<8x16xf32>
    %c0_152 = arith.constant 0 : index
    %c112_153 = arith.constant 112 : index
    %416 = vector.load %arg12[%c0_152, %c112_153] : memref<8x128xf32, #tpu.memory_space<vmem>>, vector<8x16xf32>
    tpu.vector_store %arg12[%c0_152, %c112_153], %415 {strides = array<i32>} : memref<8x128xf32, #tpu.memory_space<vmem>>, vector<8x16xf32>,
    %c0_154 = arith.constant 0 : index
    %c0_155 = arith.constant 0 : index
    %417 = vector.load %arg12[%c0_154, %c0_155] : memref<8x128xf32, #tpu.memory_space<vmem>>, vector<8x128xf32>
    %418 = arith.truncf %417 : vector<8x128xf32> to vector<8x128xbf16>
    %cst_156 = arith.constant dense<0.000000e+00> : vector<8x128xf32>
    %419 = tpu.matmul %418, %246, %cst_156 {dimension_numbers = #tpu.dot_dimension_numbers<[1], [0], [0], [1], [0, 0, 1, 1], [], []>} : vector<8x128xbf16>, vector<128x128xbf16>, vector<8x128xf32> -> vector<8x128xf32>
    %420 = vector.broadcast %255 : vector<1x128xf32> to vector<8x128xf32>
    %421 = arith.addf %419, %420 : vector<8x128xf32>
    %422 = arith.addf %240, %421 : vector<8x128xf32>
    %cst_157 = arith.constant dense<0.000000e+00> : vector<8xf32>
    %423 = vector.multi_reduction <add>, %422, %cst_157 [1] : vector<8x128xf32> to vector<8xf32>
    %424 = vector.shape_cast %423 : vector<8xf32> to vector<8x1xf32>
    %cst_158 = arith.constant 1.280000e+02 : f32
    %425 = vector.broadcast %cst_158 : f32 to vector<8x1xf32>
    %426 = arith.divf %424, %425 : vector<8x1xf32>
    %427 = vector.broadcast %426 : vector<8x1xf32> to vector<8x128xf32>
    %428 = arith.subf %422, %427 : vector<8x128xf32>
    %429 = arith.mulf %428, %428 : vector<8x128xf32>
    %cst_159 = arith.constant dense<0.000000e+00> : vector<8xf32>
    %430 = vector.multi_reduction <add>, %429, %cst_159 [1] : vector<8x128xf32> to vector<8xf32>
    %431 = vector.shape_cast %430 : vector<8xf32> to vector<8x1xf32>
    %cst_160 = arith.constant 1.280000e+02 : f32
    %432 = vector.broadcast %cst_160 : f32 to vector<8x1xf32>
    %433 = arith.divf %431, %432 : vector<8x1xf32>
    %cst_161 = arith.constant 9.99999974E-6 : f32
    %434 = vector.broadcast %cst_161 : f32 to vector<8x1xf32>
    %435 = arith.addf %433, %434 : vector<8x1xf32>
    %436 = math.rsqrt %435 : vector<8x1xf32>
    %437 = vector.broadcast %436 : vector<8x1xf32> to vector<8x128xf32>
    %438 = arith.mulf %428, %437 : vector<8x128xf32>
    %439 = vector.broadcast %257 : vector<1x128xf32> to vector<8x128xf32>
    %440 = arith.mulf %438, %439 : vector<8x128xf32>
    %441 = vector.broadcast %258 : vector<1x128xf32> to vector<8x128xf32>
    %442 = arith.addf %440, %441 : vector<8x128xf32>
    %443 = arith.truncf %442 : vector<8x128xf32> to vector<8x128xbf16>
    %cst_162 = arith.constant dense<0.000000e+00> : vector<8x256xf32>
    %444 = tpu.matmul %443, %248, %cst_162 {dimension_numbers = #tpu.dot_dimension_numbers<[1], [0], [0], [1], [0, 0, 1, 1], [], []>} : vector<8x128xbf16>, vector<128x256xbf16>, vector<8x256xf32> -> vector<8x256xf32>
    %445 = vector.broadcast %252 : vector<1x256xf32> to vector<8x256xf32>
    %446 = arith.addf %444, %445 : vector<8x256xf32>
    %cst_163 = arith.constant 0.000000e+00 : f32
    %447 = vector.broadcast %cst_163 : f32 to vector<8x256xf32>
    %448 = arith.maximumf %446, %447 : vector<8x256xf32>
    %449 = arith.truncf %448 : vector<8x256xf32> to vector<8x256xbf16>
    %cst_164 = arith.constant dense<0.000000e+00> : vector<8x128xf32>
    %450 = tpu.matmul %449, %250, %cst_164 {dimension_numbers = #tpu.dot_dimension_numbers<[1], [0], [0], [1], [0, 0, 1, 1], [], []>} : vector<8x256xbf16>, vector<256x128xbf16>, vector<8x128xf32> -> vector<8x128xf32>
    %451 = vector.broadcast %256 : vector<1x128xf32> to vector<8x128xf32>
    %452 = arith.addf %450, %451 : vector<8x128xf32>
    %453 = arith.addf %442, %452 : vector<8x128xf32>
    %cst_165 = arith.constant dense<0.000000e+00> : vector<8xf32>
    %454 = vector.multi_reduction <add>, %453, %cst_165 [1] : vector<8x128xf32> to vector<8xf32>
    %455 = vector.shape_cast %454 : vector<8xf32> to vector<8x1xf32>
    %cst_166 = arith.constant 1.280000e+02 : f32
    %456 = vector.broadcast %cst_166 : f32 to vector<8x1xf32>
    %457 = arith.divf %455, %456 : vector<8x1xf32>
    %458 = vector.broadcast %457 : vector<8x1xf32> to vector<8x128xf32>
    %459 = arith.subf %453, %458 : vector<8x128xf32>
    %460 = arith.mulf %459, %459 : vector<8x128xf32>
    %cst_167 = arith.constant dense<0.000000e+00> : vector<8xf32>
    %461 = vector.multi_reduction <add>, %460, %cst_167 [1] : vector<8x128xf32> to vector<8xf32>
    %462 = vector.shape_cast %461 : vector<8xf32> to vector<8x1xf32>
    %cst_168 = arith.constant 1.280000e+02 : f32
    %463 = vector.broadcast %cst_168 : f32 to vector<8x1xf32>
    %464 = arith.divf %462, %463 : vector<8x1xf32>
    %cst_169 = arith.constant 9.99999974E-6 : f32
    %465 = vector.broadcast %cst_169 : f32 to vector<8x1xf32>
    %466 = arith.addf %464, %465 : vector<8x1xf32>
    %467 = math.rsqrt %466 : vector<8x1xf32>
    %468 = vector.broadcast %467 : vector<8x1xf32> to vector<8x128xf32>
    %469 = arith.mulf %459, %468 : vector<8x128xf32>
    %470 = vector.broadcast %259 : vector<1x128xf32> to vector<8x128xf32>
    %471 = arith.mulf %469, %470 : vector<8x128xf32>
    %472 = vector.broadcast %260 : vector<1x128xf32> to vector<8x128xf32>
    %473 = arith.addf %471, %472 : vector<8x128xf32>
    %c0_170 = arith.constant 0 : index
    %c0_171 = arith.constant 0 : index
    %c0_172 = arith.constant 0 : index
    %474 = vector.load %arg11[%c0_170, %c0_171, %c0_172] : memref<1x8x128xf32, #tpu.memory_space<vmem>>, vector<1x8x128xf32>
    %475 = vector.shape_cast %474 : vector<1x8x128xf32> to vector<8x128xf32>
    %476 = vector.shape_cast %473 : vector<8x128xf32> to vector<1x8x128xf32>
    tpu.vector_store %arg11[%c0_170, %c0_171, %c0_172], %476 {strides = array<i32>} : memref<1x8x128xf32, #tpu.memory_space<vmem>>, vector<1x8x128xf32>,
    return
  }
  func.func @transform_0(%arg0: i32) -> (i32, i32, i32) {
    %c0_i32 = arith.constant 0 : i32
    %c0_i32_0 = arith.constant 0 : i32
    %c0_i32_1 = arith.constant 0 : i32
    return %arg0, %c0_i32, %c0_i32_0 : i32, i32, i32
  }
  func.func @transform_1(%arg0: i32) -> (i32, i32) {
    %c0_i32 = arith.constant 0 : i32
    %c0_i32_0 = arith.constant 0 : i32
    %c0_i32_1 = arith.constant 0 : i32
    return %c0_i32, %c0_i32_0 : i32, i32
  }
  func.func @transform_2(%arg0: i32) -> (i32, i32) {
    %c0_i32 = arith.constant 0 : i32
    %c0_i32_0 = arith.constant 0 : i32
    %c0_i32_1 = arith.constant 0 : i32
    return %c0_i32, %c0_i32_0 : i32, i32
  }
  func.func @transform_3(%arg0: i32) -> (i32, i32, i32) {
    %c0_i32 = arith.constant 0 : i32
    %c0_i32_0 = arith.constant 0 : i32
    %c0_i32_1 = arith.constant 0 : i32
    %c0_i32_2 = arith.constant 0 : i32
    return %c0_i32, %c0_i32_0, %c0_i32_1 : i32, i32, i32
  }
  func.func @transform_4(%arg0: i32) -> (i32, i32, i32) {
    %c0_i32 = arith.constant 0 : i32
    %c0_i32_0 = arith.constant 0 : i32
    %c0_i32_1 = arith.constant 0 : i32
    %c0_i32_2 = arith.constant 0 : i32
    return %c0_i32, %c0_i32_0, %c0_i32_1 : i32, i32, i32
  }
  func.func @transform_5(%arg0: i32) -> (i32, i32, i32) {
    %c0_i32 = arith.constant 0 : i32
    %c0_i32_0 = arith.constant 0 : i32
    %c0_i32_1 = arith.constant 0 : i32
    %c0_i32_2 = arith.constant 0 : i32
    return %c0_i32, %c0_i32_0, %c0_i32_1 : i32, i32, i32
  }
  func.func @transform_6(%arg0: i32) -> (i32, i32, i32) {
    %c0_i32 = arith.constant 0 : i32
    %c0_i32_0 = arith.constant 0 : i32
    %c0_i32_1 = arith.constant 0 : i32
    %c0_i32_2 = arith.constant 0 : i32
    return %c0_i32, %c0_i32_0, %c0_i32_1 : i32, i32, i32
  }
  func.func @transform_7(%arg0: i32) -> (i32, i32, i32) {
    %c0_i32 = arith.constant 0 : i32
    %c0_i32_0 = arith.constant 0 : i32
    %c0_i32_1 = arith.constant 0 : i32
    %c0_i32_2 = arith.constant 0 : i32
    return %c0_i32, %c0_i32_0, %c0_i32_1 : i32, i32, i32
  }
  func.func @transform_8(%arg0: i32) -> (i32, i32, i32) {
    %c0_i32 = arith.constant 0 : i32
    %c0_i32_0 = arith.constant 0 : i32
    %c0_i32_1 = arith.constant 0 : i32
    %c0_i32_2 = arith.constant 0 : i32
    return %c0_i32, %c0_i32_0, %c0_i32_1 : i32, i32, i32
  }
  func.func @transform_9(%arg0: i32) -> (i32, i32, i32) {
    %c0_i32 = arith.constant 0 : i32
    %c0_i32_0 = arith.constant 0 : i32
    %c0_i32_1 = arith.constant 0 : i32
    %c0_i32_2 = arith.constant 0 : i32
    return %c0_i32, %c0_i32_0, %c0_i32_1 : i32, i32, i32
  }
  func.func @transform_10(%arg0: i32) -> (i32, i32, i32) {
    %c0_i32 = arith.constant 0 : i32
    %c0_i32_0 = arith.constant 0 : i32
    %c0_i32_1 = arith.constant 0 : i32
    return %arg0, %c0_i32, %c0_i32_0 : i32, i32, i32
  }
}

</mosaic_0001>

<llo_original>
// kernel: transformer_forward.1
$region0: #{transformer_forward.1}
  #allocation0 [shape = 'u32[]', space=smem, size = 0x4, offset = 0x4, fixed_abs, tag = 'smem constant byte address 0x4 - core index']
  #allocation1 [shape = 'u32[144,128]{1,0:T(1,128)}', space=vmem, size = 0x12000, scoped, tag = 'internal scratch']
  #allocation2 [shape = 'f32[8,128]{1,0:T(8,128)}', space=vmem, size = 0x1000, scoped, tag = 'scratch operand']
  %s0 = inlined_call_operand.vmem [shape: f32[2,8,16], index: 0, kind: input, shape index: {}]
  %s1 = inlined_call_operand.vmem [shape: bf16[16,128], index: 1, kind: input, shape index: {}]
  %s2 = inlined_call_operand.vmem [shape: f32[1,128], index: 2, kind: input, shape index: {}]
  %s3 = inlined_call_operand.hbm [shape: bf16[2,128,384], index: 3, kind: input, shape index: {}]
  %s4 = inlined_call_operand.vmem [shape: f32[2,1,384], index: 4, kind: input, shape index: {}]
  %s5 = inlined_call_operand.hbm [shape: bf16[2,128,128], index: 5, kind: input, shape index: {}]
  %s6 = inlined_call_operand.hbm [shape: bf16[2,128,256], index: 6, kind: input, shape index: {}]
  %s7 = inlined_call_operand.hbm [shape: f32[2,1,256], index: 7, kind: input, shape index: {}]
  %s8 = inlined_call_operand.hbm [shape: bf16[2,256,128], index: 8, kind: input, shape index: {}]
  %s9 = inlined_call_operand.vmem [shape: f32[2,6,128], index: 9, kind: input, shape index: {}]
  %s10 = inlined_call_operand.hbm [shape: f32[2,8,128], index: 10, kind: output, shape index: {}]
  %s11 = sld [smem:[#allocation0]]
  $region93: #{transformer_forward.1} parent=0
    _
  %s13 = ssub.s32 1, %s11
  %s14 = scalar_select 0, %s13, %s11
  $region1: #{transformer_forward.1} parent=0
    #allocation3 [shape = 'u8[196608]{0}', space=vmem, size = 0x30000, scoped, tag = 'input window, operand 3, single buffered']
    #allocation4 [shape = 's32[2]{0}', space=sflag, size = 0x8, scoped, tag = 'scoped memory for transformer_forward.1']
    #allocation5 [shape = 's32[2]{0}', space=sflag, size = 0x8, scoped, tag = 'scoped memory for transformer_forward.1']
    #allocation6 [shape = 'u8[65536]{0}', space=vmem, size = 0x10000, scoped, tag = 'input window, operand 5, single buffered']
    #allocation7 [shape = 's32[1]{0}', space=sflag, size = 0x4, scoped, tag = 'scoped memory for transformer_forward.1']
    #allocation8 [shape = 'u8[131072]{0}', space=vmem, size = 0x20000, scoped, tag = 'input window, operand 6, single buffered']
    #allocation9 [shape = 'u8[2048]{0}', space=vmem, size = 0x800, scoped, tag = 'input window, operand 7, single buffered']
    #allocation10 [shape = 's32[1]{0}', space=sflag, size = 0x4, scoped, tag = 'scoped memory for transformer_forward.1']
    #allocation11 [shape = 'u8[131072]{0}', space=vmem, size = 0x20000, scoped, tag = 'input window, operand 8, single buffered']
    #allocation12 [shape = 'u8[8192]{0}', space=vmem, size = 0x2000, scoped, tag = 'output window, operand 0']
    %15 = vsyncpa [#allocation4], 0
    %16 = vsyncpa [#allocation7], 0
    %17 = vsyncpa [#allocation10], 0
    %18 = vsyncpa [#allocation5], 0
    %s19 = scalar_lea.sflag [#allocation5], 1
    %20 = vsyncpa %s19, 0
    loop: start=0, step=1, limit=4
    $region2: #{transformer_forward.1} parent=1 // loop_pre_header
      _
    $region3: #{transformer_forward.1} parent=1 // loop_header
      %s22 = sphi 0, %s26
      %p23 = scmp.ge.s32.totalorder %s22, 4
      %s32 = sphi 0, %s34
      %s35 = sphi 0, %s32
      %s36 = sphi 0, %s35
      %s52 = sphi 0, %s36
      %s56 = sphi 0, %s56
      %s58 = sphi 0, %s56
      %s59 = sphi 0, %s58
      %s73 = sphi 0, %s59
      %s77 = sphi 0, %s77
      %s79 = sphi 0, %s77
      %s80 = sphi 0, %s79
      %s94 = sphi 0, %s80
      %s98 = sphi 0, %s98
      %s100 = sphi 0, %s98
      %s101 = sphi 0, %s100
      %s115 = sphi 0, %s101
      %s119 = sphi 0, %s119
      %s121 = sphi 0, %s119
      %s122 = sphi 0, %s121
      %s136 = sphi 0, %s122
      %s140 = sphi 0, %s140
      %s142 = sphi 0, %s140
      %s143 = sphi 0, %s142
      %s157 = sphi 0, %s143
      %s161 = sphi 0, %s161
      %s163 = sphi 0, %s161
      %s164 = sphi 0, %s163
      %s178 = sphi 0, %s164
      %s182 = sphi 0, %s182
      %s184 = sphi 0, %s182
      %s185 = sphi 0, %s184
      %s199 = sphi 0, %s185
      %s203 = sphi 0, %s203
      %s205 = sphi 0, %s203
      %s206 = sphi 0, %s205
      %s220 = sphi 0, %s206
      %s224 = sphi 0, %s224
      %s226 = sphi 0, %s224
      %s227 = sphi 0, %s226
      %s241 = sphi 0, %s227
      %s247 = sphi 0, %s249
      %s250 = sphi 0, %s247
      %s251 = sphi 0, %s250
      %s267 = sphi 0, %s251
    $region4: #{transformer_forward.1} parent=1 // loop_header_branch
      %25 = sbr.rel (%p23) target = $region8
    $region5: #{transformer_forward.1} parent=1 // loop_body
      %s27 = ssub.s32 %s22, 1
      %s28 = ssub.s32 %s22, 2
      %s29 = sadd.s32 %s22, 1
      %s30 = ssub.s32 %s22, %s29
      %p31 = scmp.eq.s32.totalorder %s30, 0
      %s33 = sadd.s32 %s32, 1
      %s34 = scalar_select %p31, %s32, %s33
      %p37 = pneg %p31
      %p38 = scmp.eq.s32.totalorder %s22, 1
      %p39 = por %p37, %p38
      %p40 = scmp.ne.s32.totalorder %s32, %s35
      %p41 = scmp.eq.s32.totalorder %s22, 0
      %p42 = por %p40, %p41
      %p43 = scmp.ne.s32.totalorder %s32, %s35
      %p44 = scmp.eq.s32.totalorder %s27, 1
      %p45 = por %p43, %p44
      %p46 = scmp.ne.s32.totalorder %s35, %s36
      %p47 = scmp.eq.s32.totalorder %s27, 0
      %p48 = por %p46, %p47
      %p49 = scmp.ne.s32.totalorder %s35, %s36
      %p50 = scmp.eq.s32.totalorder %s28, 1
      %p51 = por %p49, %p50
      %p53 = scmp.ne.s32.totalorder %s36, %s52
      %p54 = scmp.eq.s32.totalorder %s28, 0
      %p55 = por %p53, %p54
      %s57 = sadd.s32 %s56, 1
      %p60 = scmp.eq.s32.totalorder %s22, 1
      %p61 = scmp.ne.s32.totalorder %s56, %s58
      %p62 = scmp.eq.s32.totalorder %s22, 0
      %p63 = por %p61, %p62
      %p64 = scmp.ne.s32.totalorder %s56, %s58
      %p65 = scmp.eq.s32.totalorder %s27, 1
      %p66 = por %p64, %p65
      %p67 = scmp.ne.s32.totalorder %s58, %s59
      %p68 = scmp.eq.s32.totalorder %s27, 0
      %p69 = por %p67, %p68
      %p70 = scmp.ne.s32.totalorder %s58, %s59
      %p71 = scmp.eq.s32.totalorder %s28, 1
      %p72 = por %p70, %p71
      %p74 = scmp.ne.s32.totalorder %s59, %s73
      %p75 = scmp.eq.s32.totalorder %s28, 0
      %p76 = por %p74, %p75
      %s78 = sadd.s32 %s77, 1
      %p81 = scmp.eq.s32.totalorder %s22, 1
      %p82 = scmp.ne.s32.totalorder %s77, %s79
      %p83 = scmp.eq.s32.totalorder %s22, 0
      %p84 = por %p82, %p83
      %p85 = scmp.ne.s32.totalorder %s77, %s79
      %p86 = scmp.eq.s32.totalorder %s27, 1
      %p87 = por %p85, %p86
      %p88 = scmp.ne.s32.totalorder %s79, %s80
      %p89 = scmp.eq.s32.totalorder %s27, 0
      %p90 = por %p88, %p89
      %p91 = scmp.ne.s32.totalorder %s79, %s80
      %p92 = scmp.eq.s32.totalorder %s28, 1
      %p93 = por %p91, %p92
      %p95 = scmp.ne.s32.totalorder %s80, %s94
      %p96 = scmp.eq.s32.totalorder %s28, 0
      %p97 = por %p95, %p96
      %s99 = sadd.s32 %s98, 1
      %p102 = scmp.eq.s32.totalorder %s22, 1
      %p103 = scmp.ne.s32.totalorder %s98, %s100
      %p104 = scmp.eq.s32.totalorder %s22, 0
      %p105 = por %p103, %p104
      %p106 = scmp.ne.s32.totalorder %s98, %s100
      %p107 = scmp.eq.s32.totalorder %s27, 1
      %p108 = por %p106, %p107
      %p109 = scmp.ne.s32.totalorder %s100, %s101
      %p110 = scmp.eq.s32.totalorder %s27, 0
      %p111 = por %p109, %p110
      %p112 = scmp.ne.s32.totalorder %s100, %s101
      %p113 = scmp.eq.s32.totalorder %s28, 1
      %p114 = por %p112, %p113
      %p116 = scmp.ne.s32.totalorder %s101, %s115
      %p117 = scmp.eq.s32.totalorder %s28, 0
      %p118 = por %p116, %p117
      %s120 = sadd.s32 %s119, 1
      %p123 = scmp.eq.s32.totalorder %s22, 1
      %p124 = scmp.ne.s32.totalorder %s119, %s121
      %p125 = scmp.eq.s32.totalorder %s22, 0
      %p126 = por %p124, %p125
      %p127 = scmp.ne.s32.totalorder %s119, %s121
      %p128 = scmp.eq.s32.totalorder %s27, 1
      %p129 = por %p127, %p128
      %p130 = scmp.ne.s32.totalorder %s121, %s122
      %p131 = scmp.eq.s32.totalorder %s27, 0
      %p132 = por %p130, %p131
      %p133 = scmp.ne.s32.totalorder %s121, %s122
      %p134 = scmp.eq.s32.totalorder %s28, 1
      %p135 = por %p133, %p134
      %p137 = scmp.ne.s32.totalorder %s122, %s136
      %p138 = scmp.eq.s32.totalorder %s28, 0
      %p139 = por %p137, %p138
      %s141 = sadd.s32 %s140, 1
      %p144 = scmp.eq.s32.totalorder %s22, 1
      %p145 = scmp.ne.s32.totalorder %s140, %s142
      %p146 = scmp.eq.s32.totalorder %s22, 0
      %p147 = por %p145, %p146
      %p148 = scmp.ne.s32.totalorder %s140, %s142
      %p149 = scmp.eq.s32.totalorder %s27, 1
      %p150 = por %p148, %p149
      %p151 = scmp.ne.s32.totalorder %s142, %s143
      %p152 = scmp.eq.s32.totalorder %s27, 0
      %p153 = por %p151, %p152
      %p154 = scmp.ne.s32.totalorder %s142, %s143
      %p155 = scmp.eq.s32.totalorder %s28, 1
      %p156 = por %p154, %p155
      %p158 = scmp.ne.s32.totalorder %s143, %s157
      %p159 = scmp.eq.s32.totalorder %s28, 0
      %p160 = por %p158, %p159
      %s162 = sadd.s32 %s161, 1
      %p165 = scmp.eq.s32.totalorder %s22, 1
      %p166 = scmp.ne.s32.totalorder %s161, %s163
      %p167 = scmp.eq.s32.totalorder %s22, 0
      %p168 = por %p166, %p167
      %p169 = scmp.ne.s32.totalorder %s161, %s163
      %p170 = scmp.eq.s32.totalorder %s27, 1
      %p171 = por %p169, %p170
      %p172 = scmp.ne.s32.totalorder %s163, %s164
      %p173 = scmp.eq.s32.totalorder %s27, 0
      %p174 = por %p172, %p173
      %p175 = scmp.ne.s32.totalorder %s163, %s164
      %p176 = scmp.eq.s32.totalorder %s28, 1
      %p177 = por %p175, %p176
      %p179 = scmp.ne.s32.totalorder %s164, %s178
      %p180 = scmp.eq.s32.totalorder %s28, 0
      %p181 = por %p179, %p180
      %s183 = sadd.s32 %s182, 1
      %p186 = scmp.eq.s32.totalorder %s22, 1
      %p187 = scmp.ne.s32.totalorder %s182, %s184
      %p188 = scmp.eq.s32.totalorder %s22, 0
      %p189 = por %p187, %p188
      %p190 = scmp.ne.s32.totalorder %s182, %s184
      %p191 = scmp.eq.s32.totalorder %s27, 1
      %p192 = por %p190, %p191
      %p193 = scmp.ne.s32.totalorder %s184, %s185
      %p194 = scmp.eq.s32.totalorder %s27, 0
      %p195 = por %p193, %p194
      %p196 = scmp.ne.s32.totalorder %s184, %s185
      %p197 = scmp.eq.s32.totalorder %s28, 1
      %p198 = por %p196, %p197
      %p200 = scmp.ne.s32.totalorder %s185, %s199
      %p201 = scmp.eq.s32.totalorder %s28, 0
      %p202 = por %p200, %p201
      %s204 = sadd.s32 %s203, 1
      %p207 = scmp.eq.s32.totalorder %s22, 1
      %p208 = scmp.ne.s32.totalorder %s203, %s205
      %p209 = scmp.eq.s32.totalorder %s22, 0
      %p210 = por %p208, %p209
      %p211 = scmp.ne.s32.totalorder %s203, %s205
      %p212 = scmp.eq.s32.totalorder %s27, 1
      %p213 = por %p211, %p212
      %p214 = scmp.ne.s32.totalorder %s205, %s206
      %p215 = scmp.eq.s32.totalorder %s27, 0
      %p216 = por %p214, %p215
      %p217 = scmp.ne.s32.totalorder %s205, %s206
      %p218 = scmp.eq.s32.totalorder %s28, 1
      %p219 = por %p217, %p218
      %p221 = scmp.ne.s32.totalorder %s206, %s220
      %p222 = scmp.eq.s32.totalorder %s28, 0
      %p223 = por %p221, %p222
      %s225 = sadd.s32 %s224, 1
      %p228 = scmp.eq.s32.totalorder %s22, 1
      %p229 = scmp.ne.s32.totalorder %s224, %s226
      %p230 = scmp.eq.s32.totalorder %s22, 0
      %p231 = por %p229, %p230
      %p232 = scmp.ne.s32.totalorder %s224, %s226
      %p233 = scmp.eq.s32.totalorder %s27, 1
      %p234 = por %p232, %p233
      %p235 = scmp.ne.s32.totalorder %s226, %s227
      %p236 = scmp.eq.s32.totalorder %s27, 0
      %p237 = por %p235, %p236
      %p238 = scmp.ne.s32.totalorder %s226, %s227
      %p239 = scmp.eq.s32.totalorder %s28, 1
      %p240 = por %p238, %p239
      %p242 = scmp.ne.s32.totalorder %s227, %s241
      %p243 = scmp.eq.s32.totalorder %s28, 0
      %p244 = por %p242, %p243
      %s245 = ssub.s32 %s22, %s29
      %p246 = scmp.eq.s32.totalorder %s245, 0
      %s248 = sadd.s32 %s247, 1
      %s249 = scalar_select %p246, %s247, %s248
      %p252 = pneg %p246
      %p253 = scmp.eq.s32.totalorder %s22, 1
      %p254 = por %p252, %p253
      %p255 = scmp.ne.s32.totalorder %s247, %s250
      %p256 = scmp.eq.s32.totalorder %s22, 0
      %p257 = por %p255, %p256
      %p258 = scmp.ne.s32.totalorder %s247, %s250
      %p259 = scmp.eq.s32.totalorder %s27, 1
      %p260 = por %p258, %p259
      %p261 = scmp.ne.s32.totalorder %s250, %s251
      %p262 = scmp.eq.s32.totalorder %s27, 0
      %p263 = por %p261, %p262
      %p264 = scmp.ne.s32.totalorder %s250, %s251
      %p265 = scmp.eq.s32.totalorder %s28, 1
      %p266 = por %p264, %p265
      %p268 = scmp.ne.s32.totalorder %s251, %s267
      %p269 = scmp.eq.s32.totalorder %s28, 0
      %p270 = por %p268, %p269
      %p271 = scmp.le.s32.totalorder 1, %s22
      %p272 = scmp.lt.s32.totalorder %s22, 3
      %p273 = pnand %p271, %p272
      %p274 = pneg %p273
      // Predicated region
      $region9: #{transformer_forward.1} parent=5 // pred_check
        _
      $region10: #{transformer_forward.1} parent=5 // pred_check_branch
        %276 = sbr.rel (%p273) target = $region12
      $region11: #{transformer_forward.1} parent=5 // pred_region
        %s277 = ssub.s32 %s22, 1
        // Predicated region
        $region13: #{transformer_forward.1} parent=11 // pred_check
          %p278 = pneg %p69
        $region14: #{transformer_forward.1} parent=11 // pred_check_branch
          %280 = sbr.rel (%p278) target = $region16
        $region15: #{transformer_forward.1} parent=11 // pred_region
          _
        $region16: #{transformer_forward.1} parent=11 // pred_fallthru
          _
        // Predicated region
        $region17: #{transformer_forward.1} parent=11 // pred_check
          %p281 = pneg %p90
        $region18: #{transformer_forward.1} parent=11 // pred_check_branch
          %283 = sbr.rel (%p281) target = $region20
        $region19: #{transformer_forward.1} parent=11 // pred_region
          _
        $region20: #{transformer_forward.1} parent=11 // pred_fallthru
          _
        // Predicated region
        $region21: #{transformer_forward.1} parent=11 // pred_check
          %p284 = pneg %p111
        $region22: #{transformer_forward.1} parent=11 // pred_check_branch
          %286 = sbr.rel (%p284) target = $region24
        $region23: #{transformer_forward.1} parent=11 // pred_region
          %s288 = ssub.s32 6144, 6144
          %289 = vsyncadd [#allocation4], %s288
          %s290 = sshll.u32 [#allocation3], 4
          %s291 = int_to_ptr.vmem [resolvable:$true] %s290
          %296 = dma.hbm_to_vmem [thread:$0]  %s3, 6144, %s291, [#allocation4], 192, 192, 12
        $region24: #{transformer_forward.1} parent=11 // pred_fallthru
          _
        // Predicated region
        $region25: #{transformer_forward.1} parent=11 // pred_check
          %p297 = pneg %p132
        $region26: #{transformer_forward.1} parent=11 // pred_check_branch
          %299 = sbr.rel (%p297) target = $region28
        $region27: #{transformer_forward.1} parent=11 // pred_region
          _
        $region28: #{transformer_forward.1} parent=11 // pred_fallthru
          _
        // Predicated region
        $region29: #{transformer_forward.1} parent=11 // pred_check
          %p300 = pneg %p153
        $region30: #{transformer_forward.1} parent=11 // pred_check_branch
          %302 = sbr.rel (%p300) target = $region32
        $region31: #{transformer_forward.1} parent=11 // pred_region
          %s304 = ssub.s32 2048, 2048
          %305 = vsyncadd [#allocation7], %s304
          %s306 = sshll.u32 [#allocation6], 4
          %s307 = int_to_ptr.vmem [resolvable:$true] %s306
          %312 = dma.hbm_to_vmem [thread:$0]  %s5, 2048, %s307, [#allocation7], 64, 64, 4
        $region32: #{transformer_forward.1} parent=11 // pred_fallthru
          _
        // Predicated region
        $region33: #{transformer_forward.1} parent=11 // pred_check
          %p313 = pneg %p174
        $region34: #{transformer_forward.1} parent=11 // pred_check_branch
          %315 = sbr.rel (%p313) target = $region36
        $region35: #{transformer_forward.1} parent=11 // pred_region
          %s317 = ssub.s32 4096, 4096
          %318 = vsyncadd [#allocation7], %s317
          %s319 = sshll.u32 [#allocation8], 4
          %s320 = int_to_ptr.vmem [resolvable:$true] %s319
          %325 = dma.hbm_to_vmem [thread:$0]  %s6, 4096, %s320, [#allocation7], 128, 128, 8
        $region36: #{transformer_forward.1} parent=11 // pred_fallthru
          _
        // Predicated region
        $region37: #{transformer_forward.1} parent=11 // pred_check
          %p326 = pneg %p195
        $region38: #{transformer_forward.1} parent=11 // pred_check_branch
          %328 = sbr.rel (%p326) target = $region40
        $region39: #{transformer_forward.1} parent=11 // pred_region
          %s330 = ssub.s32 64, 64
          %331 = vsyncadd [#allocation10], %s330
          %s332 = sshll.u32 [#allocation9], 4
          %s333 = int_to_ptr.vmem [resolvable:$true] %s332
          %338 = dma.hbm_to_vmem [thread:$0]  %s7, 64, %s333, [#allocation10], 32, 32, 2
        $region40: #{transformer_forward.1} parent=11 // pred_fallthru
          _
        // Predicated region
        $region41: #{transformer_forward.1} parent=11 // pred_check
          %p339 = pneg %p216
        $region42: #{transformer_forward.1} parent=11 // pred_check_branch
          %341 = sbr.rel (%p339) target = $region44
        $region43: #{transformer_forward.1} parent=11 // pred_region
          %s343 = ssub.s32 4096, 4096
          %344 = vsyncadd [#allocation10], %s343
          %s345 = sshll.u32 [#allocation11], 4
          %s346 = int_to_ptr.vmem [resolvable:$true] %s345
          %351 = dma.hbm_to_vmem [thread:$0]  %s8, 4096, %s346, [#allocation10], 64, 64, 4
        $region44: #{transformer_forward.1} parent=11 // pred_fallthru
          _
        // Predicated region
        $region45: #{transformer_forward.1} parent=11 // pred_check
          %p352 = pneg %p237
        $region46: #{transformer_forward.1} parent=11 // pred_check_branch
          %354 = sbr.rel (%p352) target = $region48
        $region47: #{transformer_forward.1} parent=11 // pred_region
          _
        $region48: #{transformer_forward.1} parent=11 // pred_fallthru
          _
      $region12: #{transformer_forward.1} parent=5 // pred_fallthru
        _
      %p355 = scmp.lt.s32.totalorder %s22, 2
      // Predicated region
      $region49: #{transformer_forward.1} parent=5 // pred_check
        %p356 = pneg %p355
      $region50: #{transformer_forward.1} parent=5 // pred_check_branch
        %358 = sbr.rel (%p356) target = $region52
      $region51: #{transformer_forward.1} parent=5 // pred_region
        // Predicated region
        $region53: #{transformer_forward.1} parent=51 // pred_check
          %p359 = pneg %p42
        $region54: #{transformer_forward.1} parent=51 // pred_check_branch
          %361 = sbr.rel (%p359) target = $region56
        $region55: #{transformer_forward.1} parent=51 // pred_region
          %p362 = scmp.lt.s32.totalorder %s22, 1
          %s363 = scalar_select %p362, %s22, 1
          %s364 = smul.addr %s363, 8
          %s365 = scalar_lea.vmem %s0, %s364
        $region56: #{transformer_forward.1} parent=51 // pred_fallthru
          _
      $region52: #{transformer_forward.1} parent=5 // pred_fallthru
        _
      %p366 = scmp.le.s32.totalorder 1, %s22
      %p367 = scmp.lt.s32.totalorder %s22, 3
      %p368 = pnand %p366, %p367
      %p369 = pneg %p368
      // Predicated region
      $region57: #{transformer_forward.1} parent=5 // pred_check
        _
      $region58: #{transformer_forward.1} parent=5 // pred_check_branch
        %371 = sbr.rel (%p368) target = $region60
      $region59: #{transformer_forward.1} parent=5 // pred_region
        %s372 = ssub.s32 %s22, 1
        // Predicated region
        $region61: #{transformer_forward.1} parent=59 // pred_check
          %p373 = pneg %p111
        $region62: #{transformer_forward.1} parent=59 // pred_check_branch
          %375 = sbr.rel (%p373) target = $region64
        $region63: #{transformer_forward.1} parent=59 // pred_region
          %376 = dma.done [#allocation4], 6144
        $region64: #{transformer_forward.1} parent=59 // pred_fallthru
          _
        // Predicated region
        $region65: #{transformer_forward.1} parent=59 // pred_check
          %p377 = pneg %p153
        $region66: #{transformer_forward.1} parent=59 // pred_check_branch
          %379 = sbr.rel (%p377) target = $region68
        $region67: #{transformer_forward.1} parent=59 // pred_region
          %380 = dma.done [#allocation7], 2048
        $region68: #{transformer_forward.1} parent=59 // pred_fallthru
          _
        // Predicated region
        $region69: #{transformer_forward.1} parent=59 // pred_check
          %p381 = pneg %p174
        $region70: #{transformer_forward.1} parent=59 // pred_check_branch
          %383 = sbr.rel (%p381) target = $region72
        $region71: #{transformer_forward.1} parent=59 // pred_region
          %384 = dma.done [#allocation7], 4096
        $region72: #{transformer_forward.1} parent=59 // pred_fallthru
          _
        // Predicated region
        $region73: #{transformer_forward.1} parent=59 // pred_check
          %p385 = pneg %p195
        $region74: #{transformer_forward.1} parent=59 // pred_check_branch
          %387 = sbr.rel (%p385) target = $region76
        $region75: #{transformer_forward.1} parent=59 // pred_region
          %388 = dma.done [#allocation10], 64
        $region76: #{transformer_forward.1} parent=59 // pred_fallthru
          _
        // Predicated region
        $region77: #{transformer_forward.1} parent=59 // pred_check
          %p389 = pneg %p216
        $region78: #{transformer_forward.1} parent=59 // pred_check_branch
          %391 = sbr.rel (%p389) target = $region80
        $region79: #{transformer_forward.1} parent=59 // pred_region
          %392 = dma.done [#allocation10], 4096
        $region80: #{transformer_forward.1} parent=59 // pred_fallthru
          _
        %p393 = scmp.lt.s32.totalorder %s27, 1
        %s394 = scalar_select %p393, %s27, 1
        %s395 = smul.addr %s394, 8
        %s396 = scalar_lea.vmem %s0, %s395
        %p397 = pneg %p48
        %p398 = pneg %p45
        %p399 = pneg %p69
        %p400 = pneg %p66
        %p401 = pneg %p90
        %p402 = pneg %p87
        %p403 = pneg %p111
        %p404 = pneg %p108
        %p405 = pneg %p132
        %p406 = pneg %p129
        %p407 = pneg %p153
        %p408 = pneg %p150
        %p409 = pneg %p174
        %p410 = pneg %p171
        %p411 = pneg %p195
        %p412 = pneg %p192
        %p413 = pneg %p216
        %p414 = pneg %p213
        %p415 = pneg %p237
        %p416 = pneg %p234
        %p417 = pneg %p263
        %p418 = pneg %p260
        %s419 = sand.u32 %s250, 1
        %s420 = scalar_lea.sflag [#allocation5], %s419
        %s421 = sand.u32 %s250, 1
        %s422 = smul.addr %s421, 8
        %s423 = scalar_lea.vmem [#allocation12], %s422
        %p424 = scmp.lt.s32.totalorder %s27, 1
        %s425 = scalar_select %p424, %s27, 1
        %s426 = smul.addr %s425, 8
        %s427 = scalar_lea.vmem %s0, %s426
        %v429 = vld [vmem:[%s427] sm:$0xff]
        %v430 = vpack.c.bf16 %v429, %v429
        %v431 = vld [vmem:[%s1] sm:$0xf]
        %v432 = vld [vmem:[%s1 + $0x4] sm:$0xf]
        %v433 = vld [vmem:[%s2] sm:$0x1]
        %v435 = vlaneseq
        %v436 = vshrl.u32 %v435, 7
        %v437 = vsub.s32 0, %v436
        %v438 = vrot.slane %v433, %v437
        %v442 = vunpack.c.l.b16 %v431
        %v443 = vunpack.c.l.b16 %v432
        %v444 = vpack.c.b16 %v443, %v442
        %vm446 = vcmask 130048
        %v448 = vsel %vm446, %v430, 0
        %450 = vmatprep.subr.bf16.mxu0 0
        %451 = vmatpush1.bf16.msra.mxu0 %v444
        %452 = vmatprep.subr.bf16.mxu0 0
        %453 = vmatpush1.bf16.msra.mxu0 0
        %454 = vmatprep.subr.bf16.mxu0 0
        %455 = vmatpush1.bf16.msra.mxu0 0
        %456 = vmatprep.subr.bf16.mxu0 0
        %457 = vmatpush1.bf16.msra.mxu0 0
        %458 = vmatprep.subr.bf16.mxu0 0
        %459 = vmatpush1.bf16.msra.mxu0 0
        %460 = vmatprep.subr.bf16.mxu0 0
        %461 = vmatpush1.bf16.msra.mxu0 0
        %462 = vmatprep.subr.bf16.mxu0 0
        %463 = vmatpush1.bf16.msra.mxu0 0
        %464 = vmatprep.subr.bf16.mxu0 0
        %465 = vmatpush1.bf16.msra.mxu0 0
        %466 = vmatprep.subr.bf16.mxu0 0
        %467 = vmatpush1.bf16.msra.mxu0 0
        %468 = vmatprep.subr.bf16.mxu0 0
        %469 = vmatpush1.bf16.msra.mxu0 0
        %470 = vmatprep.subr.bf16.mxu0 0
        %471 = vmatpush1.bf16.msra.mxu0 0
        %472 = vmatprep.subr.bf16.mxu0 0
        %473 = vmatpush1.bf16.msra.mxu0 0
        %474 = vmatprep.subr.bf16.mxu0 0
        %475 = vmatpush1.bf16.msra.mxu0 0
        %476 = vmatprep.subr.bf16.mxu0 0
        %477 = vmatpush1.bf16.msra.mxu0 0
        %478 = vmatprep.subr.bf16.mxu0 0
        %479 = vmatpush1.bf16.msra.mxu0 0
        %480 = vmatprep.subr.bf16.mxu0 0
        %481 = vmatpush1.bf16.msra.mxu0 0
        %482 = vmatprep.mubr.bf16.mxu0 0
        %483 = vmatmul.mubr.bf16.gmra.mrb[0].mxu0 %v448
        %v484 = vpop.f32.mrb[0].mxu0
        %v485 = vadd.f32 %v438, %v484
        %v486 = vpop.f32.mrb[0].mxu0
        %v487 = vpop.f32.mrb[0].mxu0
        %v488 = vpop.f32.mrb[0].mxu0
        %489 = vdwg.mxu0
        %v490 = vld [vmem:[#allocation3] sm:$0xff]
        %v491 = vld [vmem:[#allocation3 + $0x8] sm:$0xf]
        %v492 = vld [vmem:[#allocation3 + $0xc] sm:$0xff]
        %v493 = vld [vmem:[#allocation3 + $0x14] sm:$0xf]
        %v494 = vld [vmem:[#allocation3 + $0x18] sm:$0xff]
        %v495 = vld [vmem:[#allocation3 + $0x20] sm:$0xf]
        %v496 = vld [vmem:[#allocation3 + $0x24] sm:$0xff]
        %v497 = vld [vmem:[#allocation3 + $0x2c] sm:$0xf]
        %v498 = vld [vmem:[#allocation3 + $0x30] sm:$0xff]
        %v499 = vld [vmem:[#allocation3 + $0x38] sm:$0xf]
        %v500 = vld [vmem:[#allocation3 + $0x3c] sm:$0xff]
        %v501 = vld [vmem:[#allocation3 + $0x44] sm:$0xf]
        %v502 = vld [vmem:[#allocation3 + $0x48] sm:$0xff]
        %v503 = vld [vmem:[#allocation3 + $0x50] sm:$0xf]
        %v504 = vld [vmem:[#allocation3 + $0x54] sm:$0xff]
        %v505 = vld [vmem:[#allocation3 + $0x5c] sm:$0xf]
        %v506 = vld [vmem:[#allocation3 + $0x60] sm:$0xff]
        %v507 = vld [vmem:[#allocation3 + $0x68] sm:$0xf]
        %v508 = vld [vmem:[#allocation3 + $0x6c] sm:$0xff]
        %v509 = vld [vmem:[#allocation3 + $0x74] sm:$0xf]
        %v510 = vld [vmem:[#allocation3 + $0x78] sm:$0xff]
        %v511 = vld [vmem:[#allocation3 + $0x80] sm:$0xf]
        %v512 = vld [vmem:[#allocation3 + $0x84] sm:$0xff]
        %v513 = vld [vmem:[#allocation3 + $0x8c] sm:$0xf]
        %v514 = vld [vmem:[#allocation3 + $0x90] sm:$0xff]
        %v515 = vld [vmem:[#allocation3 + $0x98] sm:$0xf]
        %v516 = vld [vmem:[#allocation3 + $0x9c] sm:$0xff]
        %v517 = vld [vmem:[#allocation3 + $0xa4] sm:$0xf]
        %v518 = vld [vmem:[#allocation3 + $0xa8] sm:$0xff]
        %v519 = vld [vmem:[#allocation3 + $0xb0] sm:$0xf]
        %v520 = vld [vmem:[#allocation3 + $0xb4] sm:$0xff]
        %v521 = vld [vmem:[#allocation3 + $0xbc] sm:$0xf]
        %v522 = vld [vmem:[%s4] sm:$0x7]
        %v523 = vld [vmem:[#allocation6] sm:$0xf]
        %v524 = vld [vmem:[#allocation6 + $0x4] sm:$0xf]
        %v525 = vld [vmem:[#allocation6 + $0x8] sm:$0xf]
        %v526 = vld [vmem:[#allocation6 + $0xc] sm:$0xf]
        %v527 = vld [vmem:[#allocation6 + $0x10] sm:$0xf]
        %v528 = vld [vmem:[#allocation6 + $0x14] sm:$0xf]
        %v529 = vld [vmem:[#allocation6 + $0x18] sm:$0xf]
        %v530 = vld [vmem:[#allocation6 + $0x1c] sm:$0xf]
        %v531 = vld [vmem:[#allocation6 + $0x20] sm:$0xf]
        %v532 = vld [vmem:[#allocation6 + $0x24] sm:$0xf]
        %v533 = vld [vmem:[#allocation6 + $0x28] sm:$0xf]
        %v534 = vld [vmem:[#allocation6 + $0x2c] sm:$0xf]
        %v535 = vld [vmem:[#allocation6 + $0x30] sm:$0xf]
        %v536 = vld [vmem:[#allocation6 + $0x34] sm:$0xf]
        %v537 = vld [vmem:[#allocation6 + $0x38] sm:$0xf]
        %v538 = vld [vmem:[#allocation6 + $0x3c] sm:$0xf]
        %v539 = vld [vmem:[#allocation8] sm:$0xff]
        %v540 = vld [vmem:[#allocation8 + $0x8] sm:$0xff]
        %v541 = vld [vmem:[#allocation8 + $0x10] sm:$0xff]
        %v542 = vld [vmem:[#allocation8 + $0x18] sm:$0xff]
        %v543 = vld [vmem:[#allocation8 + $0x20] sm:$0xff]
        %v544 = vld [vmem:[#allocation8 + $0x28] sm:$0xff]
        %v545 = vld [vmem:[#allocation8 + $0x30] sm:$0xff]
        %v546 = vld [vmem:[#allocation8 + $0x38] sm:$0xff]
        %v547 = vld [vmem:[#allocation8 + $0x40] sm:$0xff]
        %v548 = vld [vmem:[#allocation8 + $0x48] sm:$0xff]
        %v549 = vld [vmem:[#allocation8 + $0x50] sm:$0xff]
        %v550 = vld [vmem:[#allocation8 + $0x58] sm:$0xff]
        %v551 = vld [vmem:[#allocation8 + $0x60] sm:$0xff]
        %v552 = vld [vmem:[#allocation8 + $0x68] sm:$0xff]
        %v553 = vld [vmem:[#allocation8 + $0x70] sm:$0xff]
        %v554 = vld [vmem:[#allocation8 + $0x78] sm:$0xff]
        %v555 = vld [vmem:[#allocation11] sm:$0xf]
        %v556 = vld [vmem:[#allocation11 + $0x4] sm:$0xf]
        %v557 = vld [vmem:[#allocation11 + $0x8] sm:$0xf]
        %v558 = vld [vmem:[#allocation11 + $0xc] sm:$0xf]
        %v559 = vld [vmem:[#allocation11 + $0x10] sm:$0xf]
        %v560 = vld [vmem:[#allocation11 + $0x14] sm:$0xf]
        %v561 = vld [vmem:[#allocation11 + $0x18] sm:$0xf]
        %v562 = vld [vmem:[#allocation11 + $0x1c] sm:$0xf]
        %v563 = vld [vmem:[#allocation11 + $0x20] sm:$0xf]
        %v564 = vld [vmem:[#allocation11 + $0x24] sm:$0xf]
        %v565 = vld [vmem:[#allocation11 + $0x28] sm:$0xf]
        %v566 = vld [vmem:[#allocation11 + $0x2c] sm:$0xf]
        %v567 = vld [vmem:[#allocation11 + $0x30] sm:$0xf]
        %v568 = vld [vmem:[#allocation11 + $0x34] sm:$0xf]
        %v569 = vld [vmem:[#allocation11 + $0x38] sm:$0xf]
        %v570 = vld [vmem:[#allocation11 + $0x3c] sm:$0xf]
        %v571 = vld [vmem:[#allocation11 + $0x40] sm:$0xf]
        %v572 = vld [vmem:[#allocation11 + $0x44] sm:$0xf]
        %v573 = vld [vmem:[#allocation11 + $0x48] sm:$0xf]
        %v574 = vld [vmem:[#allocation11 + $0x4c] sm:$0xf]
        %v575 = vld [vmem:[#allocation11 + $0x50] sm:$0xf]
        %v576 = vld [vmem:[#allocation11 + $0x54] sm:$0xf]
        %v577 = vld [vmem:[#allocation11 + $0x58] sm:$0xf]
        %v578 = vld [vmem:[#allocation11 + $0x5c] sm:$0xf]
        %v579 = vld [vmem:[#allocation11 + $0x60] sm:$0xf]
        %v580 = vld [vmem:[#allocation11 + $0x64] sm:$0xf]
        %v581 = vld [vmem:[#allocation11 + $0x68] sm:$0xf]
        %v582 = vld [vmem:[#allocation11 + $0x6c] sm:$0xf]
        %v583 = vld [vmem:[#allocation11 + $0x70] sm:$0xf]
        %v584 = vld [vmem:[#allocation11 + $0x74] sm:$0xf]
        %v585 = vld [vmem:[#allocation11 + $0x78] sm:$0xf]
        %v586 = vld [vmem:[#allocation11 + $0x7c] sm:$0xf]
        %v587 = vld [vmem:[#allocation9] sm:$0x3]
        %v588 = vld [vmem:[%s9] sm:$0x3f]
        %v589 = vpack.c.bf16 %v485, %v485
        %v591 = vlaneseq
        %v592 = vshrl.u32 %v591, 7
        %v593 = vsub.s32 0, %v592
        %v594 = vrot.slane %v522, %v593
        %v595 = vlaneseq
        %v596 = vshrl.u32 %v595, 7
        %v597 = vsub.s32 1, %v596
        %v598 = vrot.slane %v522, %v597
        %v599 = vlaneseq
        %v600 = vshrl.u32 %v599, 7
        %v601 = vsub.s32 2, %v600
        %v602 = vrot.slane %v522, %v601
        %v638 = vunpack.c.l.b16 %v490
        %v639 = vunpack.c.h.b16 %v490
        %v640 = vunpack.c.l.b16 %v491
        %v641 = vunpack.c.l.b16 %v492
        %v642 = vunpack.c.h.b16 %v492
        %v643 = vunpack.c.l.b16 %v493
        %v644 = vunpack.c.l.b16 %v494
        %v645 = vunpack.c.h.b16 %v494
        %v646 = vunpack.c.l.b16 %v495
        %v647 = vunpack.c.l.b16 %v496
        %v648 = vunpack.c.h.b16 %v496
        %v649 = vunpack.c.l.b16 %v497
        %v650 = vunpack.c.l.b16 %v498
        %v651 = vunpack.c.h.b16 %v498
        %v652 = vunpack.c.l.b16 %v499
        %v653 = vunpack.c.l.b16 %v500
        %v654 = vunpack.c.h.b16 %v500
        %v655 = vunpack.c.l.b16 %v501
        %v656 = vunpack.c.l.b16 %v502
        %v657 = vunpack.c.h.b16 %v502
        %v658 = vunpack.c.l.b16 %v503
        %v659 = vunpack.c.l.b16 %v504
        %v660 = vunpack.c.h.b16 %v504
        %v661 = vunpack.c.l.b16 %v505
        %v662 = vunpack.c.l.b16 %v506
        %v663 = vunpack.c.h.b16 %v506
        %v664 = vunpack.c.l.b16 %v507
        %v665 = vunpack.c.l.b16 %v508
        %v666 = vunpack.c.h.b16 %v508
        %v667 = vunpack.c.l.b16 %v509
        %v668 = vunpack.c.l.b16 %v510
        %v669 = vunpack.c.h.b16 %v510
        %v670 = vunpack.c.l.b16 %v511
        %v671 = vunpack.c.l.b16 %v512
        %v672 = vunpack.c.h.b16 %v512
        %v673 = vunpack.c.l.b16 %v513
        %v674 = vunpack.c.l.b16 %v514
        %v675 = vunpack.c.h.b16 %v514
        %v676 = vunpack.c.l.b16 %v515
        %v677 = vunpack.c.l.b16 %v516
        %v678 = vunpack.c.h.b16 %v516
        %v679 = vunpack.c.l.b16 %v517
        %v680 = vunpack.c.l.b16 %v518
        %v681 = vunpack.c.h.b16 %v518
        %v682 = vunpack.c.l.b16 %v519
        %v683 = vunpack.c.l.b16 %v520
        %v684 = vunpack.c.h.b16 %v520
        %v685 = vunpack.c.l.b16 %v521
        %v686 = vpack.c.b16 %v641, %v638
        %v687 = vpack.c.b16 %v642, %v639
        %v688 = vpack.c.b16 %v643, %v640
        %v689 = vpack.c.b16 %v647, %v644
        %v690 = vpack.c.b16 %v648, %v645
        %v691 = vpack.c.b16 %v649, %v646
        %v692 = vpack.c.b16 %v653, %v650
        %v693 = vpack.c.b16 %v654, %v651
        %v694 = vpack.c.b16 %v655, %v652
        %v695 = vpack.c.b16 %v659, %v656
        %v696 = vpack.c.b16 %v660, %v657
        %v697 = vpack.c.b16 %v661, %v658
        %v698 = vpack.c.b16 %v665, %v662
        %v699 = vpack.c.b16 %v666, %v663
        %v700 = vpack.c.b16 %v667, %v664
        %v701 = vpack.c.b16 %v671, %v668
        %v702 = vpack.c.b16 %v672, %v669
        %v703 = vpack.c.b16 %v673, %v670
        %v704 = vpack.c.b16 %v677, %v674
        %v705 = vpack.c.b16 %v678, %v675
        %v706 = vpack.c.b16 %v679, %v676
        %v707 = vpack.c.b16 %v683, %v680
        %v708 = vpack.c.b16 %v684, %v681
        %v709 = vpack.c.b16 %v685, %v682
        %734 = vmatprep.subr.bf16.mxu0 %v687
        %735 = vmatpush1.bf16.msra.mxu0 %v686
        %736 = vmatprep.subr.bf16.mxu0 %v690
        %737 = vmatpush1.bf16.msra.mxu0 %v689
        %738 = vmatprep.subr.bf16.mxu0 %v693
        %739 = vmatpush1.bf16.msra.mxu0 %v692
        %740 = vmatprep.subr.bf16.mxu0 %v696
        %741 = vmatpush1.bf16.msra.mxu0 %v695
        %742 = vmatprep.subr.bf16.mxu0 %v699
        %743 = vmatpush1.bf16.msra.mxu0 %v698
        %744 = vmatprep.subr.bf16.mxu0 %v702
        %745 = vmatpush1.bf16.msra.mxu0 %v701
        %746 = vmatprep.subr.bf16.mxu0 %v705
        %747 = vmatpush1.bf16.msra.mxu0 %v704
        %748 = vmatprep.subr.bf16.mxu0 %v708
        %749 = vmatpush1.bf16.msra.mxu0 %v707
        %750 = vmatprep.subr.bf16.mxu0 0
        %751 = vmatpush1.bf16.msra.mxu0 0
        %752 = vmatprep.subr.bf16.mxu0 0
        %753 = vmatpush1.bf16.msra.mxu0 0
        %754 = vmatprep.subr.bf16.mxu0 0
        %755 = vmatpush1.bf16.msra.mxu0 0
        %756 = vmatprep.subr.bf16.mxu0 0
        %757 = vmatpush1.bf16.msra.mxu0 0
        %758 = vmatprep.subr.bf16.mxu0 0
        %759 = vmatpush1.bf16.msra.mxu0 0
        %760 = vmatprep.subr.bf16.mxu0 0
        %761 = vmatpush1.bf16.msra.mxu0 0
        %762 = vmatprep.subr.bf16.mxu0 0
        %763 = vmatpush1.bf16.msra.mxu0 0
        %764 = vmatprep.subr.bf16.mxu0 0
        %765 = vmatpush1.bf16.msra.mxu0 0
        %766 = vmatprep.mubr.bf16.mxu0 0
        %767 = vmatmul.mubr.bf16.gmra.mrb[0].mxu0 %v589
        %v768 = vpop.f32.mrb[0].mxu0
        %v769 = vadd.f32 %v594, %v768
        %v770 = vpop.f32.mrb[0].mxu0
        %v771 = vadd.f32 %v598, %v770
        %v772 = vpop.f32.mrb[0].mxu0
        %v773 = vpop.f32.mrb[0].mxu0
        %774 = vdwg.mxu0
        %775 = vmatprep.subr.bf16.mxu0 0
        %776 = vmatpush1.bf16.msra.mxu0 %v688
        %777 = vmatprep.subr.bf16.mxu0 0
        %778 = vmatpush1.bf16.msra.mxu0 %v691
        %779 = vmatprep.subr.bf16.mxu0 0
        %780 = vmatpush1.bf16.msra.mxu0 %v694
        %781 = vmatprep.subr.bf16.mxu0 0
        %782 = vmatpush1.bf16.msra.mxu0 %v697
        %783 = vmatprep.subr.bf16.mxu0 0
        %784 = vmatpush1.bf16.msra.mxu0 %v700
        %785 = vmatprep.subr.bf16.mxu0 0
        %786 = vmatpush1.bf16.msra.mxu0 %v703
        %787 = vmatprep.subr.bf16.mxu0 0
        %788 = vmatpush1.bf16.msra.mxu0 %v706
        %789 = vmatprep.subr.bf16.mxu0 0
        %790 = vmatpush1.bf16.msra.mxu0 %v709
        %791 = vmatprep.subr.bf16.mxu0 0
        %792 = vmatpush1.bf16.msra.mxu0 0
        %793 = vmatprep.subr.bf16.mxu0 0
        %794 = vmatpush1.bf16.msra.mxu0 0
        %795 = vmatprep.subr.bf16.mxu0 0
        %796 = vmatpush1.bf16.msra.mxu0 0
        %797 = vmatprep.subr.bf16.mxu0 0
        %798 = vmatpush1.bf16.msra.mxu0 0
        %799 = vmatprep.subr.bf16.mxu0 0
        %800 = vmatpush1.bf16.msra.mxu0 0
        %801 = vmatprep.subr.bf16.mxu0 0
        %802 = vmatpush1.bf16.msra.mxu0 0
        %803 = vmatprep.subr.bf16.mxu0 0
        %804 = vmatpush1.bf16.msra.mxu0 0
        %805 = vmatprep.subr.bf16.mxu0 0
        %806 = vmatpush1.bf16.msra.mxu0 0
        %807 = vmatprep.mubr.bf16.mxu0 0
        %808 = vmatmul.mubr.bf16.gmra.mrb[0].mxu0 %v589
        %v809 = vpop.f32.mrb[0].mxu0
        %v810 = vadd.f32 %v602, %v809
        %v811 = vpop.f32.mrb[0].mxu0
        %v812 = vpop.f32.mrb[0].mxu0
        %v813 = vpop.f32.mrb[0].mxu0
        %814 = vdwg.mxu0
        %v815 = vpack.c.bf16 %v769, %v769
        %v816 = vpack.c.bf16 %v771, %v771
        %v817 = vpack.c.bf16 %v810, %v810
        %v819 = vsel %vm446, %v815, 0
        %v822 = vsel %vm446, %v816, 0
        %824 = vmatprep.subr.bf16.mxu0 0
        %825 = vmatpush1.bf16.xpose.msra.mxu0 %v822
        %826 = vmatprep.subr.bf16.mxu0 0
        %827 = vmatpush1.bf16.xpose.msra.mxu0 0
        %828 = vmatprep.subr.bf16.mxu0 0
        %829 = vmatpush1.bf16.xpose.msra.mxu0 0
        %830 = vmatprep.subr.bf16.mxu0 0
        %831 = vmatpush1.bf16.xpose.msra.mxu0 0
        %832 = vmatprep.subr.bf16.mxu0 0
        %833 = vmatpush1.bf16.xpose.msra.mxu0 0
        %834 = vmatprep.subr.bf16.mxu0 0
        %835 = vmatpush1.bf16.xpose.msra.mxu0 0
        %836 = vmatprep.subr.bf16.mxu0 0
        %837 = vmatpush1.bf16.xpose.msra.mxu0 0
        %838 = vmatprep.subr.bf16.mxu0 0
        %839 = vmatpush1.bf16.xpose.msra.mxu0 0
        %840 = vmatprep.subr.bf16.mxu0 0
        %841 = vmatpush1.bf16.xpose.msra.mxu0 0
        %842 = vmatprep.subr.bf16.mxu0 0
        %843 = vmatpush1.bf16.xpose.msra.mxu0 0
        %844 = vmatprep.subr.bf16.mxu0 0
        %845 = vmatpush1.bf16.xpose.msra.mxu0 0
        %846 = vmatprep.subr.bf16.mxu0 0
        %847 = vmatpush1.bf16.xpose.msra.mxu0 0
        %848 = vmatprep.subr.bf16.mxu0 0
        %849 = vmatpush1.bf16.xpose.msra.mxu0 0
        %850 = vmatprep.subr.bf16.mxu0 0
        %851 = vmatpush1.bf16.xpose.msra.mxu0 0
        %852 = vmatprep.subr.bf16.mxu0 0
        %853 = vmatpush1.bf16.xpose.msra.mxu0 0
        %854 = vmatprep.subr.bf16.mxu0 0
        %855 = vmatpush1.bf16.xpose.msra.mxu0 0
        %856 = vmatprep.mubr.bf16.mxu0 0
        %857 = vmatmul.mubr.bf16.gmra.mrb[0].mxu0 %v819
        %v858 = vpop.f32.mrb[0].mxu0
        %v859 = vadd.f32 0.0, %v858
        %v860 = vpop.f32.mrb[0].mxu0
        %v861 = vpop.f32.mrb[0].mxu0
        %v862 = vpop.f32.mrb[0].mxu0
        %863 = vdwg.mxu0
        %vm864 = vcmask 64512
        %v865 = vsel %vm864, %v859, -inf
        %866 = vmax.xlane.f32.xlu0 %v865
        %v867 = vpop.xlane.xlu0 %866
        %v868 = vsub.f32 %v859, %v867
        %v869 = vmul.f32 %v868, 1.442695
        %v870 = vpow.pop %v869
        %v871 = vsel %vm864, %v870, 0.0
        %872 = vadd.xlane.f32.xlu0 %v871
        %v873 = vpop.xlane.xlu0 %872
        %v874 = vrcp.pop %v873
        %v875 = vmul.f32 %v870, %v874
        %v876 = vpack.c.bf16 %v875, %v875
        %v878 = vsel %vm864, %v876, 0
        %vm880 = vcmask 1043456
        %v882 = vsel %vm880, %v817, 0
        %884 = vmatprep.subr.bf16.mxu0 0
        %885 = vmatpush1.bf16.msra.mxu0 %v882
        %886 = vmatprep.subr.bf16.mxu0 0
        %887 = vmatpush1.bf16.msra.mxu0 0
        %888 = vmatprep.subr.bf16.mxu0 0
        %889 = vmatpush1.bf16.msra.mxu0 0
        %890 = vmatprep.subr.bf16.mxu0 0
        %891 = vmatpush1.bf16.msra.mxu0 0
        %892 = vmatprep.subr.bf16.mxu0 0
        %893 = vmatpush1.bf16.msra.mxu0 0
        %894 = vmatprep.subr.bf16.mxu0 0
        %895 = vmatpush1.bf16.msra.mxu0 0
        %896 = vmatprep.subr.bf16.mxu0 0
        %897 = vmatpush1.bf16.msra.mxu0 0
        %898 = vmatprep.subr.bf16.mxu0 0
        %899 = vmatpush1.bf16.msra.mxu0 0
        %900 = vmatprep.subr.bf16.mxu0 0
        %901 = vmatpush1.bf16.msra.mxu0 0
        %902 = vmatprep.subr.bf16.mxu0 0
        %903 = vmatpush1.bf16.msra.mxu0 0
        %904 = vmatprep.subr.bf16.mxu0 0
        %905 = vmatpush1.bf16.msra.mxu0 0
        %906 = vmatprep.subr.bf16.mxu0 0
        %907 = vmatpush1.bf16.msra.mxu0 0
        %908 = vmatprep.subr.bf16.mxu0 0
        %909 = vmatpush1.bf16.msra.mxu0 0
        %910 = vmatprep.subr.bf16.mxu0 0
        %911 = vmatpush1.bf16.msra.mxu0 0
        %912 = vmatprep.subr.bf16.mxu0 0
        %913 = vmatpush1.bf16.msra.mxu0 0
        %914 = vmatprep.subr.bf16.mxu0 0
        %915 = vmatpush1.bf16.msra.mxu0 0
        %916 = vmatprep.mubr.bf16.mxu0 0
        %917 = vmatmul.mubr.bf16.gmra.mrb[0].mxu0 %v878
        %v918 = vpop.f32.mrb[0].mxu0
        %v919 = vadd.f32 0.0, %v918
        %v920 = vpop.f32.mrb[0].mxu0
        %v921 = vpop.f32.mrb[0].mxu0
        %v922 = vpop.f32.mrb[0].mxu0
        %923 = vdwg.mxu0
        %924 = vst.msk [vmem:[#allocation2] sm:$0xff] %vm446, %v919
        %926 = vrot.lane.b32.xlu0 %v815, 112
        %v927 = vpop.permute.xlu0 %926
        %929 = vrot.lane.b32.xlu0 %v816, 112
        %v930 = vpop.permute.xlu0 %929
        %v932 = vsel %vm446, %v927, 0
        %v935 = vsel %vm446, %v930, 0
        %937 = vmatprep.subr.bf16.mxu0 0
        %938 = vmatpush1.bf16.xpose.msra.mxu0 %v935
        %939 = vmatprep.subr.bf16.mxu0 0
        %940 = vmatpush1.bf16.xpose.msra.mxu0 0
        %941 = vmatprep.subr.bf16.mxu0 0
        %942 = vmatpush1.bf16.xpose.msra.mxu0 0
        %943 = vmatprep.subr.bf16.mxu0 0
        %944 = vmatpush1.bf16.xpose.msra.mxu0 0
        %945 = vmatprep.subr.bf16.mxu0 0
        %946 = vmatpush1.bf16.xpose.msra.mxu0 0
        %947 = vmatprep.subr.bf16.mxu0 0
        %948 = vmatpush1.bf16.xpose.msra.mxu0 0
        %949 = vmatprep.subr.bf16.mxu0 0
        %950 = vmatpush1.bf16.xpose.msra.mxu0 0
        %951 = vmatprep.subr.bf16.mxu0 0
        %952 = vmatpush1.bf16.xpose.msra.mxu0 0
        %953 = vmatprep.subr.bf16.mxu0 0
        %954 = vmatpush1.bf16.xpose.msra.mxu0 0
        %955 = vmatprep.subr.bf16.mxu0 0
        %956 = vmatpush1.bf16.xpose.msra.mxu0 0
        %957 = vmatprep.subr.bf16.mxu0 0
        %958 = vmatpush1.bf16.xpose.msra.mxu0 0
        %959 = vmatprep.subr.bf16.mxu0 0
        %960 = vmatpush1.bf16.xpose.msra.mxu0 0
        %961 = vmatprep.subr.bf16.mxu0 0
        %962 = vmatpush1.bf16.xpose.msra.mxu0 0
        %963 = vmatprep.subr.bf16.mxu0 0
        %964 = vmatpush1.bf16.xpose.msra.mxu0 0
        %965 = vmatprep.subr.bf16.mxu0 0
        %966 = vmatpush1.bf16.xpose.msra.mxu0 0
        %967 = vmatprep.subr.bf16.mxu0 0
        %968 = vmatpush1.bf16.xpose.msra.mxu0 0
        %969 = vmatprep.mubr.bf16.mxu0 0
        %970 = vmatmul.mubr.bf16.gmra.mrb[0].mxu0 %v932
        %v971 = vpop.f32.mrb[0].mxu0
        %v972 = vadd.f32 0.0, %v971
        %v973 = vpop.f32.mrb[0].mxu0
        %v974 = vpop.f32.mrb[0].mxu0
        %v975 = vpop.f32.mrb[0].mxu0
        %976 = vdwg.mxu0
        %v977 = vsel %vm864, %v972, -inf
        %978 = vmax.xlane.f32.xlu0 %v977
        %v979 = vpop.xlane.xlu0 %978
        %v980 = vsub.f32 %v972, %v979
        %v981 = vmul.f32 %v980, 1.442695
        %v982 = vpow.pop %v981
        %v983 = vsel %vm864, %v982, 0.0
        %984 = vadd.xlane.f32.xlu0 %v983
        %v985 = vpop.xlane.xlu0 %984
        %v986 = vrcp.pop %v985
        %v987 = vmul.f32 %v982, %v986
        %v988 = vpack.c.bf16 %v987, %v987
        %990 = vrot.lane.b32.xlu0 %v817, 112
        %v991 = vpop.permute.xlu0 %990
        %v993 = vsel %vm864, %v988, 0
        %v996 = vsel %vm880, %v991, 0
        %998 = vmatprep.subr.bf16.mxu0 0
        %999 = vmatpush1.bf16.msra.mxu0 %v996
        %1000 = vmatprep.subr.bf16.mxu0 0
        %1001 = vmatpush1.bf16.msra.mxu0 0
        %1002 = vmatprep.subr.bf16.mxu0 0
        %1003 = vmatpush1.bf16.msra.mxu0 0
        %1004 = vmatprep.subr.bf16.mxu0 0
        %1005 = vmatpush1.bf16.msra.mxu0 0
        %1006 = vmatprep.subr.bf16.mxu0 0
        %1007 = vmatpush1.bf16.msra.mxu0 0
        %1008 = vmatprep.subr.bf16.mxu0 0
        %1009 = vmatpush1.bf16.msra.mxu0 0
        %1010 = vmatprep.subr.bf16.mxu0 0
        %1011 = vmatpush1.bf16.msra.mxu0 0
        %1012 = vmatprep.subr.bf16.mxu0 0
        %1013 = vmatpush1.bf16.msra.mxu0 0
        %1014 = vmatprep.subr.bf16.mxu0 0
        %1015 = vmatpush1.bf16.msra.mxu0 0
        %1016 = vmatprep.subr.bf16.mxu0 0
        %1017 = vmatpush1.bf16.msra.mxu0 0
        %1018 = vmatprep.subr.bf16.mxu0 0
        %1019 = vmatpush1.bf16.msra.mxu0 0
        %1020 = vmatprep.subr.bf16.mxu0 0
        %1021 = vmatpush1.bf16.msra.mxu0 0
        %1022 = vmatprep.subr.bf16.mxu0 0
        %1023 = vmatpush1.bf16.msra.mxu0 0
        %1024 = vmatprep.subr.bf16.mxu0 0
        %1025 = vmatpush1.bf16.msra.mxu0 0
        %1026 = vmatprep.subr.bf16.mxu0 0
        %1027 = vmatpush1.bf16.msra.mxu0 0
        %1028 = vmatprep.subr.bf16.mxu0 0
        %1029 = vmatpush1.bf16.msra.mxu0 0
        %1030 = vmatprep.mubr.bf16.mxu0 0
        %1031 = vmatmul.mubr.bf16.gmra.mrb[0].mxu0 %v993
        %v1032 = vpop.f32.mrb[0].mxu0
        %v1033 = vadd.f32 0.0, %v1032
        %v1034 = vpop.f32.mrb[0].mxu0
        %v1035 = vpop.f32.mrb[0].mxu0
        %v1036 = vpop.f32.mrb[0].mxu0
        %1037 = vdwg.mxu0
        %1039 = vrot.lane.b32.xlu0 %v1033, 16
        %v1040 = vpop.permute.xlu0 %1039
        %vm1042 = vcmask 261248
        %1043 = vst.msk [vmem:[#allocation2] sm:$0xff] %vm1042, %v1040
        %1044 = vrot.lane.b32.xlu0 %v815, 96
        %v1045 = vpop.permute.xlu0 %1044
        %1046 = vrot.lane.b32.xlu0 %v816, 96
        %v1047 = vpop.permute.xlu0 %1046
        %v1049 = vsel %vm446, %v1045, 0
        %v1052 = vsel %vm446, %v1047, 0
        %1054 = vmatprep.subr.bf16.mxu0 0
        %1055 = vmatpush1.bf16.xpose.msra.mxu0 %v1052
        %1056 = vmatprep.subr.bf16.mxu0 0
        %1057 = vmatpush1.bf16.xpose.msra.mxu0 0
        %1058 = vmatprep.subr.bf16.mxu0 0
        %1059 = vmatpush1.bf16.xpose.msra.mxu0 0
        %1060 = vmatprep.subr.bf16.mxu0 0
        %1061 = vmatpush1.bf16.xpose.msra.mxu0 0
        %1062 = vmatprep.subr.bf16.mxu0 0
        %1063 = vmatpush1.bf16.xpose.msra.mxu0 0
        %1064 = vmatprep.subr.bf16.mxu0 0
        %1065 = vmatpush1.bf16.xpose.msra.mxu0 0
        %1066 = vmatprep.subr.bf16.mxu0 0
        %1067 = vmatpush1.bf16.xpose.msra.mxu0 0
        %1068 = vmatprep.subr.bf16.mxu0 0
        %1069 = vmatpush1.bf16.xpose.msra.mxu0 0
        %1070 = vmatprep.subr.bf16.mxu0 0
        %1071 = vmatpush1.bf16.xpose.msra.mxu0 0
        %1072 = vmatprep.subr.bf16.mxu0 0
        %1073 = vmatpush1.bf16.xpose.msra.mxu0 0
        %1074 = vmatprep.subr.bf16.mxu0 0
        %1075 = vmatpush1.bf16.xpose.msra.mxu0 0
        %1076 = vmatprep.subr.bf16.mxu0 0
        %1077 = vmatpush1.bf16.xpose.msra.mxu0 0
        %1078 = vmatprep.subr.bf16.mxu0 0
        %1079 = vmatpush1.bf16.xpose.msra.mxu0 0
        %1080 = vmatprep.subr.bf16.mxu0 0
        %1081 = vmatpush1.bf16.xpose.msra.mxu0 0
        %1082 = vmatprep.subr.bf16.mxu0 0
        %1083 = vmatpush1.bf16.xpose.msra.mxu0 0
        %1084 = vmatprep.subr.bf16.mxu0 0
        %1085 = vmatpush1.bf16.xpose.msra.mxu0 0
        %1086 = vmatprep.mubr.bf16.mxu0 0
        %1087 = vmatmul.mubr.bf16.gmra.mrb[0].mxu0 %v1049
        %v1088 = vpop.f32.mrb[0].mxu0
        %v1089 = vadd.f32 0.0, %v1088
        %v1090 = vpop.f32.mrb[0].mxu0
        %v1091 = vpop.f32.mrb[0].mxu0
        %v1092 = vpop.f32.mrb[0].mxu0
        %1093 = vdwg.mxu0
        %v1094 = vsel %vm864, %v1089, -inf
        %1095 = vmax.xlane.f32.xlu0 %v1094
        %v1096 = vpop.xlane.xlu0 %1095
        %v1097 = vsub.f32 %v1089, %v1096
        %v1098 = vmul.f32 %v1097, 1.442695
        %v1099 = vpow.pop %v1098
        %v1100 = vsel %vm864, %v1099, 0.0
        %1101 = vadd.xlane.f32.xlu0 %v1100
        %v1102 = vpop.xlane.xlu0 %1101
        %v1103 = vrcp.pop %v1102
        %v1104 = vmul.f32 %v1099, %v1103
        %v1105 = vpack.c.bf16 %v1104, %v1104
        %1106 = vrot.lane.b32.xlu0 %v817, 96
        %v1107 = vpop.permute.xlu0 %1106
        %v1109 = vsel %vm864, %v1105, 0
        %v1112 = vsel %vm880, %v1107, 0
        %1114 = vmatprep.subr.bf16.mxu0 0
        %1115 = vmatpush1.bf16.msra.mxu0 %v1112
        %1116 = vmatprep.subr.bf16.mxu0 0
        %1117 = vmatpush1.bf16.msra.mxu0 0
        %1118 = vmatprep.subr.bf16.mxu0 0
        %1119 = vmatpush1.bf16.msra.mxu0 0
        %1120 = vmatprep.subr.bf16.mxu0 0
        %1121 = vmatpush1.bf16.msra.mxu0 0
        %1122 = vmatprep.subr.bf16.mxu0 0
        %1123 = vmatpush1.bf16.msra.mxu0 0
        %1124 = vmatprep.subr.bf16.mxu0 0
        %1125 = vmatpush1.bf16.msra.mxu0 0
        %1126 = vmatprep.subr.bf16.mxu0 0
        %1127 = vmatpush1.bf16.msra.mxu0 0
        %1128 = vmatprep.subr.bf16.mxu0 0
        %1129 = vmatpush1.bf16.msra.mxu0 0
        %1130 = vmatprep.subr.bf16.mxu0 0
        %1131 = vmatpush1.bf16.msra.mxu0 0
        %1132 = vmatprep.subr.bf16.mxu0 0
        %1133 = vmatpush1.bf16.msra.mxu0 0
        %1134 = vmatprep.subr.bf16.mxu0 0
        %1135 = vmatpush1.bf16.msra.mxu0 0
        %1136 = vmatprep.subr.bf16.mxu0 0
        %1137 = vmatpush1.bf16.msra.mxu0 0
        %1138 = vmatprep.subr.bf16.mxu0 0
        %1139 = vmatpush1.bf16.msra.mxu0 0
        %1140 = vmatprep.subr.bf16.mxu0 0
        %1141 = vmatpush1.bf16.msra.mxu0 0
        %1142 = vmatprep.subr.bf16.mxu0 0
        %1143 = vmatpush1.bf16.msra.mxu0 0
        %1144 = vmatprep.subr.bf16.mxu0 0
        %1145 = vmatpush1.bf16.msra.mxu0 0
        %1146 = vmatprep.mubr.bf16.mxu0 0
        %1147 = vmatmul.mubr.bf16.gmra.mrb[0].mxu0 %v1109
        %v1148 = vpop.f32.mrb[0].mxu0
        %v1149 = vadd.f32 0.0, %v1148
        %v1150 = vpop.f32.mrb[0].mxu0
        %v1151 = vpop.f32.mrb[0].mxu0
        %v1152 = vpop.f32.mrb[0].mxu0
        %1153 = vdwg.mxu0
        %1155 = vrot.lane.b32.xlu0 %v1149, 32
        %v1156 = vpop.permute.xlu0 %1155
        %vm1158 = vcmask 392448
        %1159 = vst.msk [vmem:[#allocation2] sm:$0xff] %vm1158, %v1156
        %1160 = vrot.lane.b32.xlu0 %v815, 80
        %v1161 = vpop.permute.xlu0 %1160
        %1162 = vrot.lane.b32.xlu0 %v816, 80
        %v1163 = vpop.permute.xlu0 %1162
        %v1165 = vsel %vm446, %v1161, 0
        %v1168 = vsel %vm446, %v1163, 0
        %1170 = vmatprep.subr.bf16.mxu0 0
        %1171 = vmatpush1.bf16.xpose.msra.mxu0 %v1168
        %1172 = vmatprep.subr.bf16.mxu0 0
        %1173 = vmatpush1.bf16.xpose.msra.mxu0 0
        %1174 = vmatprep.subr.bf16.mxu0 0
        %1175 = vmatpush1.bf16.xpose.msra.mxu0 0
        %1176 = vmatprep.subr.bf16.mxu0 0
        %1177 = vmatpush1.bf16.xpose.msra.mxu0 0
        %1178 = vmatprep.subr.bf16.mxu0 0
        %1179 = vmatpush1.bf16.xpose.msra.mxu0 0
        %1180 = vmatprep.subr.bf16.mxu0 0
        %1181 = vmatpush1.bf16.xpose.msra.mxu0 0
        %1182 = vmatprep.subr.bf16.mxu0 0
        %1183 = vmatpush1.bf16.xpose.msra.mxu0 0
        %1184 = vmatprep.subr.bf16.mxu0 0
        %1185 = vmatpush1.bf16.xpose.msra.mxu0 0
        %1186 = vmatprep.subr.bf16.mxu0 0
        %1187 = vmatpush1.bf16.xpose.msra.mxu0 0
        %1188 = vmatprep.subr.bf16.mxu0 0
        %1189 = vmatpush1.bf16.xpose.msra.mxu0 0
        %1190 = vmatprep.subr.bf16.mxu0 0
        %1191 = vmatpush1.bf16.xpose.msra.mxu0 0
        %1192 = vmatprep.subr.bf16.mxu0 0
        %1193 = vmatpush1.bf16.xpose.msra.mxu0 0
        %1194 = vmatprep.subr.bf16.mxu0 0
        %1195 = vmatpush1.bf16.xpose.msra.mxu0 0
        %1196 = vmatprep.subr.bf16.mxu0 0
        %1197 = vmatpush1.bf16.xpose.msra.mxu0 0
        %1198 = vmatprep.subr.bf16.mxu0 0
        %1199 = vmatpush1.bf16.xpose.msra.mxu0 0
        %1200 = vmatprep.subr.bf16.mxu0 0
        %1201 = vmatpush1.bf16.xpose.msra.mxu0 0
        %1202 = vmatprep.mubr.bf16.mxu0 0
        %1203 = vmatmul.mubr.bf16.gmra.mrb[0].mxu0 %v1165
        %v1204 = vpop.f32.mrb[0].mxu0
        %v1205 = vadd.f32 0.0, %v1204
        %v1206 = vpop.f32.mrb[0].mxu0
        %v1207 = vpop.f32.mrb[0].mxu0
        %v1208 = vpop.f32.mrb[0].mxu0
        %1209 = vdwg.mxu0
        %v1210 = vsel %vm864, %v1205, -inf
        %1211 = vmax.xlane.f32.xlu0 %v1210
        %v1212 = vpop.xlane.xlu0 %1211
        %v1213 = vsub.f32 %v1205, %v1212
        %v1214 = vmul.f32 %v1213, 1.442695
        %v1215 = vpow.pop %v1214
        %v1216 = vsel %vm864, %v1215, 0.0
        %1217 = vadd.xlane.f32.xlu0 %v1216
        %v1218 = vpop.xlane.xlu0 %1217
        %v1219 = vrcp.pop %v1218
        %v1220 = vmul.f32 %v1215, %v1219
        %v1221 = vpack.c.bf16 %v1220, %v1220
        %1222 = vrot.lane.b32.xlu0 %v817, 80
        %v1223 = vpop.permute.xlu0 %1222
        %v1225 = vsel %vm864, %v1221, 0
        %v1228 = vsel %vm880, %v1223, 0
        %1230 = vmatprep.subr.bf16.mxu0 0
        %1231 = vmatpush1.bf16.msra.mxu0 %v1228
        %1232 = vmatprep.subr.bf16.mxu0 0
        %1233 = vmatpush1.bf16.msra.mxu0 0
        %1234 = vmatprep.subr.bf16.mxu0 0
        %1235 = vmatpush1.bf16.msra.mxu0 0
        %1236 = vmatprep.subr.bf16.mxu0 0
        %1237 = vmatpush1.bf16.msra.mxu0 0
        %1238 = vmatprep.subr.bf16.mxu0 0
        %1239 = vmatpush1.bf16.msra.mxu0 0
        %1240 = vmatprep.subr.bf16.mxu0 0
        %1241 = vmatpush1.bf16.msra.mxu0 0
        %1242 = vmatprep.subr.bf16.mxu0 0
        %1243 = vmatpush1.bf16.msra.mxu0 0
        %1244 = vmatprep.subr.bf16.mxu0 0
        %1245 = vmatpush1.bf16.msra.mxu0 0
        %1246 = vmatprep.subr.bf16.mxu0 0
        %1247 = vmatpush1.bf16.msra.mxu0 0
        %1248 = vmatprep.subr.bf16.mxu0 0
        %1249 = vmatpush1.bf16.msra.mxu0 0
        %1250 = vmatprep.subr.bf16.mxu0 0
        %1251 = vmatpush1.bf16.msra.mxu0 0
        %1252 = vmatprep.subr.bf16.mxu0 0
        %1253 = vmatpush1.bf16.msra.mxu0 0
        %1254 = vmatprep.subr.bf16.mxu0 0
        %1255 = vmatpush1.bf16.msra.mxu0 0
        %1256 = vmatprep.subr.bf16.mxu0 0
        %1257 = vmatpush1.bf16.msra.mxu0 0
        %1258 = vmatprep.subr.bf16.mxu0 0
        %1259 = vmatpush1.bf16.msra.mxu0 0
        %1260 = vmatprep.subr.bf16.mxu0 0
        %1261 = vmatpush1.bf16.msra.mxu0 0
        %1262 = vmatprep.mubr.bf16.mxu0 0
        %1263 = vmatmul.mubr.bf16.gmra.mrb[0].mxu0 %v1225
        %v1264 = vpop.f32.mrb[0].mxu0
        %v1265 = vadd.f32 0.0, %v1264
        %v1266 = vpop.f32.mrb[0].mxu0
        %v1267 = vpop.f32.mrb[0].mxu0
        %v1268 = vpop.f32.mrb[0].mxu0
        %1269 = vdwg.mxu0
        %1271 = vrot.lane.b32.xlu0 %v1265, 48
        %v1272 = vpop.permute.xlu0 %1271
        %vm1274 = vcmask 523648
        %1275 = vst.msk [vmem:[#allocation2] sm:$0xff] %vm1274, %v1272
        %1276 = vrot.lane.b32.xlu0 %v815, 64
        %v1277 = vpop.permute.xlu0 %1276
        %1278 = vrot.lane.b32.xlu0 %v816, 64
        %v1279 = vpop.permute.xlu0 %1278
        %v1281 = vsel %vm446, %v1277, 0
        %v1284 = vsel %vm446, %v1279, 0
        %1286 = vmatprep.subr.bf16.mxu0 0
        %1287 = vmatpush1.bf16.xpose.msra.mxu0 %v1284
        %1288 = vmatprep.subr.bf16.mxu0 0
        %1289 = vmatpush1.bf16.xpose.msra.mxu0 0
        %1290 = vmatprep.subr.bf16.mxu0 0
        %1291 = vmatpush1.bf16.xpose.msra.mxu0 0
        %1292 = vmatprep.subr.bf16.mxu0 0
        %1293 = vmatpush1.bf16.xpose.msra.mxu0 0
        %1294 = vmatprep.subr.bf16.mxu0 0
        %1295 = vmatpush1.bf16.xpose.msra.mxu0 0
        %1296 = vmatprep.subr.bf16.mxu0 0
        %1297 = vmatpush1.bf16.xpose.msra.mxu0 0
        %1298 = vmatprep.subr.bf16.mxu0 0
        %1299 = vmatpush1.bf16.xpose.msra.mxu0 0
        %1300 = vmatprep.subr.bf16.mxu0 0
        %1301 = vmatpush1.bf16.xpose.msra.mxu0 0
        %1302 = vmatprep.subr.bf16.mxu0 0
        %1303 = vmatpush1.bf16.xpose.msra.mxu0 0
        %1304 = vmatprep.subr.bf16.mxu0 0
        %1305 = vmatpush1.bf16.xpose.msra.mxu0 0
        %1306 = vmatprep.subr.bf16.mxu0 0
        %1307 = vmatpush1.bf16.xpose.msra.mxu0 0
        %1308 = vmatprep.subr.bf16.mxu0 0
        %1309 = vmatpush1.bf16.xpose.msra.mxu0 0
        %1310 = vmatprep.subr.bf16.mxu0 0
        %1311 = vmatpush1.bf16.xpose.msra.mxu0 0
        %1312 = vmatprep.subr.bf16.mxu0 0
        %1313 = vmatpush1.bf16.xpose.msra.mxu0 0
        %1314 = vmatprep.subr.bf16.mxu0 0
        %1315 = vmatpush1.bf16.xpose.msra.mxu0 0
        %1316 = vmatprep.subr.bf16.mxu0 0
        %1317 = vmatpush1.bf16.xpose.msra.mxu0 0
        %1318 = vmatprep.mubr.bf16.mxu0 0
        %1319 = vmatmul.mubr.bf16.gmra.mrb[0].mxu0 %v1281
        %v1320 = vpop.f32.mrb[0].mxu0
        %v1321 = vadd.f32 0.0, %v1320
        %v1322 = vpop.f32.mrb[0].mxu0
        %v1323 = vpop.f32.mrb[0].mxu0
        %v1324 = vpop.f32.mrb[0].mxu0
        %1325 = vdwg.mxu0
        %v1326 = vsel %vm864, %v1321, -inf
        %1327 = vmax.xlane.f32.xlu0 %v1326
        %v1328 = vpop.xlane.xlu0 %1327
        %v1329 = vsub.f32 %v1321, %v1328
        %v1330 = vmul.f32 %v1329, 1.442695
        %v1331 = vpow.pop %v1330
        %v1332 = vsel %vm864, %v1331, 0.0
        %1333 = vadd.xlane.f32.xlu0 %v1332
        %v1334 = vpop.xlane.xlu0 %1333
        %v1335 = vrcp.pop %v1334
        %v1336 = vmul.f32 %v1331, %v1335
        %v1337 = vpack.c.bf16 %v1336, %v1336
        %1338 = vrot.lane.b32.xlu0 %v817, 64
        %v1339 = vpop.permute.xlu0 %1338
        %v1341 = vsel %vm864, %v1337, 0
        %v1344 = vsel %vm880, %v1339, 0
        %1346 = vmatprep.subr.bf16.mxu0 0
        %1347 = vmatpush1.bf16.msra.mxu0 %v1344
        %1348 = vmatprep.subr.bf16.mxu0 0
        %1349 = vmatpush1.bf16.msra.mxu0 0
        %1350 = vmatprep.subr.bf16.mxu0 0
        %1351 = vmatpush1.bf16.msra.mxu0 0
        %1352 = vmatprep.subr.bf16.mxu0 0
        %1353 = vmatpush1.bf16.msra.mxu0 0
        %1354 = vmatprep.subr.bf16.mxu0 0
        %1355 = vmatpush1.bf16.msra.mxu0 0
        %1356 = vmatprep.subr.bf16.mxu0 0
        %1357 = vmatpush1.bf16.msra.mxu0 0
        %1358 = vmatprep.subr.bf16.mxu0 0
        %1359 = vmatpush1.bf16.msra.mxu0 0
        %1360 = vmatprep.subr.bf16.mxu0 0
        %1361 = vmatpush1.bf16.msra.mxu0 0
        %1362 = vmatprep.subr.bf16.mxu0 0
        %1363 = vmatpush1.bf16.msra.mxu0 0
        %1364 = vmatprep.subr.bf16.mxu0 0
        %1365 = vmatpush1.bf16.msra.mxu0 0
        %1366 = vmatprep.subr.bf16.mxu0 0
        %1367 = vmatpush1.bf16.msra.mxu0 0
        %1368 = vmatprep.subr.bf16.mxu0 0
        %1369 = vmatpush1.bf16.msra.mxu0 0
        %1370 = vmatprep.subr.bf16.mxu0 0
        %1371 = vmatpush1.bf16.msra.mxu0 0
        %1372 = vmatprep.subr.bf16.mxu0 0
        %1373 = vmatpush1.bf16.msra.mxu0 0
        %1374 = vmatprep.subr.bf16.mxu0 0
        %1375 = vmatpush1.bf16.msra.mxu0 0
        %1376 = vmatprep.subr.bf16.mxu0 0
        %1377 = vmatpush1.bf16.msra.mxu0 0
        %1378 = vmatprep.mubr.bf16.mxu0 0
        %1379 = vmatmul.mubr.bf16.gmra.mrb[0].mxu0 %v1341
        %v1380 = vpop.f32.mrb[0].mxu0
        %v1381 = vadd.f32 0.0, %v1380
        %v1382 = vpop.f32.mrb[0].mxu0
        %v1383 = vpop.f32.mrb[0].mxu0
        %v1384 = vpop.f32.mrb[0].mxu0
        %1385 = vdwg.mxu0
        %1387 = vrot.lane.b32.xlu0 %v1381, 64
        %v1388 = vpop.permute.xlu0 %1387
        %vm1390 = vcmask 654848
        %1391 = vst.msk [vmem:[#allocation2] sm:$0xff] %vm1390, %v1388
        %1392 = vrot.lane.b32.xlu0 %v815, 48
        %v1393 = vpop.permute.xlu0 %1392
        %1394 = vrot.lane.b32.xlu0 %v816, 48
        %v1395 = vpop.permute.xlu0 %1394
        %v1397 = vsel %vm446, %v1393, 0
        %v1400 = vsel %vm446, %v1395, 0
        %1402 = vmatprep.subr.bf16.mxu0 0
        %1403 = vmatpush1.bf16.xpose.msra.mxu0 %v1400
        %1404 = vmatprep.subr.bf16.mxu0 0
        %1405 = vmatpush1.bf16.xpose.msra.mxu0 0
        %1406 = vmatprep.subr.bf16.mxu0 0
        %1407 = vmatpush1.bf16.xpose.msra.mxu0 0
        %1408 = vmatprep.subr.bf16.mxu0 0
        %1409 = vmatpush1.bf16.xpose.msra.mxu0 0
        %1410 = vmatprep.subr.bf16.mxu0 0
        %1411 = vmatpush1.bf16.xpose.msra.mxu0 0
        %1412 = vmatprep.subr.bf16.mxu0 0
        %1413 = vmatpush1.bf16.xpose.msra.mxu0 0
        %1414 = vmatprep.subr.bf16.mxu0 0
        %1415 = vmatpush1.bf16.xpose.msra.mxu0 0
        %1416 = vmatprep.subr.bf16.mxu0 0
        %1417 = vmatpush1.bf16.xpose.msra.mxu0 0
        %1418 = vmatprep.subr.bf16.mxu0 0
        %1419 = vmatpush1.bf16.xpose.msra.mxu0 0
        %1420 = vmatprep.subr.bf16.mxu0 0
        %1421 = vmatpush1.bf16.xpose.msra.mxu0 0
        %1422 = vmatprep.subr.bf16.mxu0 0
        %1423 = vmatpush1.bf16.xpose.msra.mxu0 0
        %1424 = vmatprep.subr.bf16.mxu0 0
        %1425 = vmatpush1.bf16.xpose.msra.mxu0 0
        %1426 = vmatprep.subr.bf16.mxu0 0
        %1427 = vmatpush1.bf16.xpose.msra.mxu0 0
        %1428 = vmatprep.subr.bf16.mxu0 0
        %1429 = vmatpush1.bf16.xpose.msra.mxu0 0
        %1430 = vmatprep.subr.bf16.mxu0 0
        %1431 = vmatpush1.bf16.xpose.msra.mxu0 0
        %1432 = vmatprep.subr.bf16.mxu0 0
        %1433 = vmatpush1.bf16.xpose.msra.mxu0 0
        %1434 = vmatprep.mubr.bf16.mxu0 0
        %1435 = vmatmul.mubr.bf16.gmra.mrb[0].mxu0 %v1397
        %v1436 = vpop.f32.mrb[0].mxu0
        %v1437 = vadd.f32 0.0, %v1436
        %v1438 = vpop.f32.mrb[0].mxu0
        %v1439 = vpop.f32.mrb[0].mxu0
        %v1440 = vpop.f32.mrb[0].mxu0
        %1441 = vdwg.mxu0
        %v1442 = vsel %vm864, %v1437, -inf
        %1443 = vmax.xlane.f32.xlu0 %v1442
        %v1444 = vpop.xlane.xlu0 %1443
        %v1445 = vsub.f32 %v1437, %v1444
        %v1446 = vmul.f32 %v1445, 1.442695
        %v1447 = vpow.pop %v1446
        %v1448 = vsel %vm864, %v1447, 0.0
        %1449 = vadd.xlane.f32.xlu0 %v1448
        %v1450 = vpop.xlane.xlu0 %1449
        %v1451 = vrcp.pop %v1450
        %v1452 = vmul.f32 %v1447, %v1451
        %v1453 = vpack.c.bf16 %v1452, %v1452
        %1454 = vrot.lane.b32.xlu0 %v817, 48
        %v1455 = vpop.permute.xlu0 %1454
        %v1457 = vsel %vm864, %v1453, 0
        %v1460 = vsel %vm880, %v1455, 0
        %1462 = vmatprep.subr.bf16.mxu0 0
        %1463 = vmatpush1.bf16.msra.mxu0 %v1460
        %1464 = vmatprep.subr.bf16.mxu0 0
        %1465 = vmatpush1.bf16.msra.mxu0 0
        %1466 = vmatprep.subr.bf16.mxu0 0
        %1467 = vmatpush1.bf16.msra.mxu0 0
        %1468 = vmatprep.subr.bf16.mxu0 0
        %1469 = vmatpush1.bf16.msra.mxu0 0
        %1470 = vmatprep.subr.bf16.mxu0 0
        %1471 = vmatpush1.bf16.msra.mxu0 0
        %1472 = vmatprep.subr.bf16.mxu0 0
        %1473 = vmatpush1.bf16.msra.mxu0 0
        %1474 = vmatprep.subr.bf16.mxu0 0
        %1475 = vmatpush1.bf16.msra.mxu0 0
        %1476 = vmatprep.subr.bf16.mxu0 0
        %1477 = vmatpush1.bf16.msra.mxu0 0
        %1478 = vmatprep.subr.bf16.mxu0 0
        %1479 = vmatpush1.bf16.msra.mxu0 0
        %1480 = vmatprep.subr.bf16.mxu0 0
        %1481 = vmatpush1.bf16.msra.mxu0 0
        %1482 = vmatprep.subr.bf16.mxu0 0
        %1483 = vmatpush1.bf16.msra.mxu0 0
        %1484 = vmatprep.subr.bf16.mxu0 0
        %1485 = vmatpush1.bf16.msra.mxu0 0
        %1486 = vmatprep.subr.bf16.mxu0 0
        %1487 = vmatpush1.bf16.msra.mxu0 0
        %1488 = vmatprep.subr.bf16.mxu0 0
        %1489 = vmatpush1.bf16.msra.mxu0 0
        %1490 = vmatprep.subr.bf16.mxu0 0
        %1491 = vmatpush1.bf16.msra.mxu0 0
        %1492 = vmatprep.subr.bf16.mxu0 0
        %1493 = vmatpush1.bf16.msra.mxu0 0
        %1494 = vmatprep.mubr.bf16.mxu0 0
        %1495 = vmatmul.mubr.bf16.gmra.mrb[0].mxu0 %v1457
        %v1496 = vpop.f32.mrb[0].mxu0
        %v1497 = vadd.f32 0.0, %v1496
        %v1498 = vpop.f32.mrb[0].mxu0
        %v1499 = vpop.f32.mrb[0].mxu0
        %v1500 = vpop.f32.mrb[0].mxu0
        %1501 = vdwg.mxu0
        %1503 = vrot.lane.b32.xlu0 %v1497, 80
        %v1504 = vpop.permute.xlu0 %1503
        %vm1506 = vcmask 786048
        %1507 = vst.msk [vmem:[#allocation2] sm:$0xff] %vm1506, %v1504
        %1508 = vrot.lane.b32.xlu0 %v815, 32
        %v1509 = vpop.permute.xlu0 %1508
        %1510 = vrot.lane.b32.xlu0 %v816, 32
        %v1511 = vpop.permute.xlu0 %1510
        %v1513 = vsel %vm446, %v1509, 0
        %v1516 = vsel %vm446, %v1511, 0
        %1518 = vmatprep.subr.bf16.mxu0 0
        %1519 = vmatpush1.bf16.xpose.msra.mxu0 %v1516
        %1520 = vmatprep.subr.bf16.mxu0 0
        %1521 = vmatpush1.bf16.xpose.msra.mxu0 0
        %1522 = vmatprep.subr.bf16.mxu0 0
        %1523 = vmatpush1.bf16.xpose.msra.mxu0 0
        %1524 = vmatprep.subr.bf16.mxu0 0
        %1525 = vmatpush1.bf16.xpose.msra.mxu0 0
        %1526 = vmatprep.subr.bf16.mxu0 0
        %1527 = vmatpush1.bf16.xpose.msra.mxu0 0
        %1528 = vmatprep.subr.bf16.mxu0 0
        %1529 = vmatpush1.bf16.xpose.msra.mxu0 0
        %1530 = vmatprep.subr.bf16.mxu0 0
        %1531 = vmatpush1.bf16.xpose.msra.mxu0 0
        %1532 = vmatprep.subr.bf16.mxu0 0
        %1533 = vmatpush1.bf16.xpose.msra.mxu0 0
        %1534 = vmatprep.subr.bf16.mxu0 0
        %1535 = vmatpush1.bf16.xpose.msra.mxu0 0
        %1536 = vmatprep.subr.bf16.mxu0 0
        %1537 = vmatpush1.bf16.xpose.msra.mxu0 0
        %1538 = vmatprep.subr.bf16.mxu0 0
        %1539 = vmatpush1.bf16.xpose.msra.mxu0 0
        %1540 = vmatprep.subr.bf16.mxu0 0
        %1541 = vmatpush1.bf16.xpose.msra.mxu0 0
        %1542 = vmatprep.subr.bf16.mxu0 0
        %1543 = vmatpush1.bf16.xpose.msra.mxu0 0
        %1544 = vmatprep.subr.bf16.mxu0 0
        %1545 = vmatpush1.bf16.xpose.msra.mxu0 0
        %1546 = vmatprep.subr.bf16.mxu0 0
        %1547 = vmatpush1.bf16.xpose.msra.mxu0 0
        %1548 = vmatprep.subr.bf16.mxu0 0
        %1549 = vmatpush1.bf16.xpose.msra.mxu0 0
        %1550 = vmatprep.mubr.bf16.mxu0 0
        %1551 = vmatmul.mubr.bf16.gmra.mrb[0].mxu0 %v1513
        %v1552 = vpop.f32.mrb[0].mxu0
        %v1553 = vadd.f32 0.0, %v1552
        %v1554 = vpop.f32.mrb[0].mxu0
        %v1555 = vpop.f32.mrb[0].mxu0
        %v1556 = vpop.f32.mrb[0].mxu0
        %1557 = vdwg.mxu0
        %v1558 = vsel %vm864, %v1553, -inf
        %1559 = vmax.xlane.f32.xlu0 %v1558
        %v1560 = vpop.xlane.xlu0 %1559
        %v1561 = vsub.f32 %v1553, %v1560
        %v1562 = vmul.f32 %v1561, 1.442695
        %v1563 = vpow.pop %v1562
        %v1564 = vsel %vm864, %v1563, 0.0
        %1565 = vadd.xlane.f32.xlu0 %v1564
        %v1566 = vpop.xlane.xlu0 %1565
        %v1567 = vrcp.pop %v1566
        %v1568 = vmul.f32 %v1563, %v1567
        %v1569 = vpack.c.bf16 %v1568, %v1568
        %1570 = vrot.lane.b32.xlu0 %v817, 32
        %v1571 = vpop.permute.xlu0 %1570
        %v1573 = vsel %vm864, %v1569, 0
        %v1576 = vsel %vm880, %v1571, 0
        %1578 = vmatprep.subr.bf16.mxu0 0
        %1579 = vmatpush1.bf16.msra.mxu0 %v1576
        %1580 = vmatprep.subr.bf16.mxu0 0
        %1581 = vmatpush1.bf16.msra.mxu0 0
        %1582 = vmatprep.subr.bf16.mxu0 0
        %1583 = vmatpush1.bf16.msra.mxu0 0
        %1584 = vmatprep.subr.bf16.mxu0 0
        %1585 = vmatpush1.bf16.msra.mxu0 0
        %1586 = vmatprep.subr.bf16.mxu0 0
        %1587 = vmatpush1.bf16.msra.mxu0 0
        %1588 = vmatprep.subr.bf16.mxu0 0
        %1589 = vmatpush1.bf16.msra.mxu0 0
        %1590 = vmatprep.subr.bf16.mxu0 0
        %1591 = vmatpush1.bf16.msra.mxu0 0
        %1592 = vmatprep.subr.bf16.mxu0 0
        %1593 = vmatpush1.bf16.msra.mxu0 0
        %1594 = vmatprep.subr.bf16.mxu0 0
        %1595 = vmatpush1.bf16.msra.mxu0 0
        %1596 = vmatprep.subr.bf16.mxu0 0
        %1597 = vmatpush1.bf16.msra.mxu0 0
        %1598 = vmatprep.subr.bf16.mxu0 0
        %1599 = vmatpush1.bf16.msra.mxu0 0
        %1600 = vmatprep.subr.bf16.mxu0 0
        %1601 = vmatpush1.bf16.msra.mxu0 0
        %1602 = vmatprep.subr.bf16.mxu0 0
        %1603 = vmatpush1.bf16.msra.mxu0 0
        %1604 = vmatprep.subr.bf16.mxu0 0
        %1605 = vmatpush1.bf16.msra.mxu0 0
        %1606 = vmatprep.subr.bf16.mxu0 0
        %1607 = vmatpush1.bf16.msra.mxu0 0
        %1608 = vmatprep.subr.bf16.mxu0 0
        %1609 = vmatpush1.bf16.msra.mxu0 0
        %1610 = vmatprep.mubr.bf16.mxu0 0
        %1611 = vmatmul.mubr.bf16.gmra.mrb[0].mxu0 %v1573
        %v1612 = vpop.f32.mrb[0].mxu0
        %v1613 = vadd.f32 0.0, %v1612
        %v1614 = vpop.f32.mrb[0].mxu0
        %v1615 = vpop.f32.mrb[0].mxu0
        %v1616 = vpop.f32.mrb[0].mxu0
        %1617 = vdwg.mxu0
        %1619 = vrot.lane.b32.xlu0 %v1613, 96
        %v1620 = vpop.permute.xlu0 %1619
        %vm1622 = vcmask 917248
        %1623 = vst.msk [vmem:[#allocation2] sm:$0xff] %vm1622, %v1620
        %1624 = vrot.lane.b32.xlu0 %v815, 16
        %v1625 = vpop.permute.xlu0 %1624
        %1626 = vrot.lane.b32.xlu0 %v816, 16
        %v1627 = vpop.permute.xlu0 %1626
        %v1629 = vsel %vm446, %v1625, 0
        %v1632 = vsel %vm446, %v1627, 0
        %1634 = vmatprep.subr.bf16.mxu0 0
        %1635 = vmatpush1.bf16.xpose.msra.mxu0 %v1632
        %1636 = vmatprep.subr.bf16.mxu0 0
        %1637 = vmatpush1.bf16.xpose.msra.mxu0 0
        %1638 = vmatprep.subr.bf16.mxu0 0
        %1639 = vmatpush1.bf16.xpose.msra.mxu0 0
        %1640 = vmatprep.subr.bf16.mxu0 0
        %1641 = vmatpush1.bf16.xpose.msra.mxu0 0
        %1642 = vmatprep.subr.bf16.mxu0 0
        %1643 = vmatpush1.bf16.xpose.msra.mxu0 0
        %1644 = vmatprep.subr.bf16.mxu0 0
        %1645 = vmatpush1.bf16.xpose.msra.mxu0 0
        %1646 = vmatprep.subr.bf16.mxu0 0
        %1647 = vmatpush1.bf16.xpose.msra.mxu0 0
        %1648 = vmatprep.subr.bf16.mxu0 0
        %1649 = vmatpush1.bf16.xpose.msra.mxu0 0
        %1650 = vmatprep.subr.bf16.mxu0 0
        %1651 = vmatpush1.bf16.xpose.msra.mxu0 0
        %1652 = vmatprep.subr.bf16.mxu0 0
        %1653 = vmatpush1.bf16.xpose.msra.mxu0 0
        %1654 = vmatprep.subr.bf16.mxu0 0
        %1655 = vmatpush1.bf16.xpose.msra.mxu0 0
        %1656 = vmatprep.subr.bf16.mxu0 0
        %1657 = vmatpush1.bf16.xpose.msra.mxu0 0
        %1658 = vmatprep.subr.bf16.mxu0 0
        %1659 = vmatpush1.bf16.xpose.msra.mxu0 0
        %1660 = vmatprep.subr.bf16.mxu0 0
        %1661 = vmatpush1.bf16.xpose.msra.mxu0 0
        %1662 = vmatprep.subr.bf16.mxu0 0
        %1663 = vmatpush1.bf16.xpose.msra.mxu0 0
        %1664 = vmatprep.subr.bf16.mxu0 0
        %1665 = vmatpush1.bf16.xpose.msra.mxu0 0
        %1666 = vmatprep.mubr.bf16.mxu0 0
        %1667 = vmatmul.mubr.bf16.gmra.mrb[0].mxu0 %v1629
        %v1668 = vpop.f32.mrb[0].mxu0
        %v1669 = vadd.f32 0.0, %v1668
        %v1670 = vpop.f32.mrb[0].mxu0
        %v1671 = vpop.f32.mrb[0].mxu0
        %v1672 = vpop.f32.mrb[0].mxu0
        %1673 = vdwg.mxu0
        %v1674 = vsel %vm864, %v1669, -inf
        %1675 = vmax.xlane.f32.xlu0 %v1674
        %v1676 = vpop.xlane.xlu0 %1675
        %v1677 = vsub.f32 %v1669, %v1676
        %v1678 = vmul.f32 %v1677, 1.442695
        %v1679 = vpow.pop %v1678
        %v1680 = vsel %vm864, %v1679, 0.0
        %1681 = vadd.xlane.f32.xlu0 %v1680
        %v1682 = vpop.xlane.xlu0 %1681
        %v1683 = vrcp.pop %v1682
        %v1684 = vmul.f32 %v1679, %v1683
        %v1685 = vpack.c.bf16 %v1684, %v1684
        %1686 = vrot.lane.b32.xlu0 %v817, 16
        %v1687 = vpop.permute.xlu0 %1686
        %v1689 = vsel %vm864, %v1685, 0
        %v1692 = vsel %vm880, %v1687, 0
        %1694 = vmatprep.subr.bf16.mxu0 0
        %1695 = vmatpush1.bf16.msra.mxu0 %v1692
        %1696 = vmatprep.subr.bf16.mxu0 0
        %1697 = vmatpush1.bf16.msra.mxu0 0
        %1698 = vmatprep.subr.bf16.mxu0 0
        %1699 = vmatpush1.bf16.msra.mxu0 0
        %1700 = vmatprep.subr.bf16.mxu0 0
        %1701 = vmatpush1.bf16.msra.mxu0 0
        %1702 = vmatprep.subr.bf16.mxu0 0
        %1703 = vmatpush1.bf16.msra.mxu0 0
        %1704 = vmatprep.subr.bf16.mxu0 0
        %1705 = vmatpush1.bf16.msra.mxu0 0
        %1706 = vmatprep.subr.bf16.mxu0 0
        %1707 = vmatpush1.bf16.msra.mxu0 0
        %1708 = vmatprep.subr.bf16.mxu0 0
        %1709 = vmatpush1.bf16.msra.mxu0 0
        %1710 = vmatprep.subr.bf16.mxu0 0
        %1711 = vmatpush1.bf16.msra.mxu0 0
        %1712 = vmatprep.subr.bf16.mxu0 0
        %1713 = vmatpush1.bf16.msra.mxu0 0
        %1714 = vmatprep.subr.bf16.mxu0 0
        %1715 = vmatpush1.bf16.msra.mxu0 0
        %1716 = vmatprep.subr.bf16.mxu0 0
        %1717 = vmatpush1.bf16.msra.mxu0 0
        %1718 = vmatprep.subr.bf16.mxu0 0
        %1719 = vmatpush1.bf16.msra.mxu0 0
        %1720 = vmatprep.subr.bf16.mxu0 0
        %1721 = vmatpush1.bf16.msra.mxu0 0
        %1722 = vmatprep.subr.bf16.mxu0 0
        %1723 = vmatpush1.bf16.msra.mxu0 0
        %1724 = vmatprep.subr.bf16.mxu0 0
        %1725 = vmatpush1.bf16.msra.mxu0 0
        %1726 = vmatprep.mubr.bf16.mxu0 0
        %1727 = vmatmul.mubr.bf16.gmra.mrb[0].mxu0 %v1689
        %v1728 = vpop.f32.mrb[0].mxu0
        %v1729 = vadd.f32 0.0, %v1728
        %v1730 = vpop.f32.mrb[0].mxu0
        %v1731 = vpop.f32.mrb[0].mxu0
        %v1732 = vpop.f32.mrb[0].mxu0
        %1733 = vdwg.mxu0
        %1735 = vrot.lane.b32.xlu0 %v1729, 112
        %v1736 = vpop.permute.xlu0 %1735
        %vm1738 = vcmask 1048448
        %1739 = vst.msk [vmem:[#allocation2] sm:$0xff] %vm1738, %v1736
        %v1740 = vld [vmem:[#allocation2] sm:$0xff]
        %v1741 = vpack.c.bf16 %v1740, %v1740
        %v1742 = vlaneseq
        %v1743 = vshrl.u32 %v1742, 7
        %v1744 = vsub.s32 0, %v1743
        %v1745 = vrot.slane %v588, %v1744
        %v1762 = vunpack.c.l.b16 %v523
        %v1763 = vunpack.c.l.b16 %v524
        %v1764 = vunpack.c.l.b16 %v525
        %v1765 = vunpack.c.l.b16 %v526
        %v1766 = vunpack.c.l.b16 %v527
        %v1767 = vunpack.c.l.b16 %v528
        %v1768 = vunpack.c.l.b16 %v529
        %v1769 = vunpack.c.l.b16 %v530
        %v1770 = vunpack.c.l.b16 %v531
        %v1771 = vunpack.c.l.b16 %v532
        %v1772 = vunpack.c.l.b16 %v533
        %v1773 = vunpack.c.l.b16 %v534
        %v1774 = vunpack.c.l.b16 %v535
        %v1775 = vunpack.c.l.b16 %v536
        %v1776 = vunpack.c.l.b16 %v537
        %v1777 = vunpack.c.l.b16 %v538
        %v1778 = vpack.c.b16 %v1763, %v1762
        %v1779 = vpack.c.b16 %v1765, %v1764
        %v1780 = vpack.c.b16 %v1767, %v1766
        %v1781 = vpack.c.b16 %v1769, %v1768
        %v1782 = vpack.c.b16 %v1771, %v1770
        %v1783 = vpack.c.b16 %v1773, %v1772
        %v1784 = vpack.c.b16 %v1775, %v1774
        %v1785 = vpack.c.b16 %v1777, %v1776
        %1794 = vmatprep.subr.bf16.mxu0 0
        %1795 = vmatpush1.bf16.msra.mxu0 %v1778
        %1796 = vmatprep.subr.bf16.mxu0 0
        %1797 = vmatpush1.bf16.msra.mxu0 %v1779
        %1798 = vmatprep.subr.bf16.mxu0 0
        %1799 = vmatpush1.bf16.msra.mxu0 %v1780
        %1800 = vmatprep.subr.bf16.mxu0 0
        %1801 = vmatpush1.bf16.msra.mxu0 %v1781
        %1802 = vmatprep.subr.bf16.mxu0 0
        %1803 = vmatpush1.bf16.msra.mxu0 %v1782
        %1804 = vmatprep.subr.bf16.mxu0 0
        %1805 = vmatpush1.bf16.msra.mxu0 %v1783
        %1806 = vmatprep.subr.bf16.mxu0 0
        %1807 = vmatpush1.bf16.msra.mxu0 %v1784
        %1808 = vmatprep.subr.bf16.mxu0 0
        %1809 = vmatpush1.bf16.msra.mxu0 %v1785
        %1810 = vmatprep.subr.bf16.mxu0 0
        %1811 = vmatpush1.bf16.msra.mxu0 0
        %1812 = vmatprep.subr.bf16.mxu0 0
        %1813 = vmatpush1.bf16.msra.mxu0 0
        %1814 = vmatprep.subr.bf16.mxu0 0
        %1815 = vmatpush1.bf16.msra.mxu0 0
        %1816 = vmatprep.subr.bf16.mxu0 0
        %1817 = vmatpush1.bf16.msra.mxu0 0
        %1818 = vmatprep.subr.bf16.mxu0 0
        %1819 = vmatpush1.bf16.msra.mxu0 0
        %1820 = vmatprep.subr.bf16.mxu0 0
        %1821 = vmatpush1.bf16.msra.mxu0 0
        %1822 = vmatprep.subr.bf16.mxu0 0
        %1823 = vmatpush1.bf16.msra.mxu0 0
        %1824 = vmatprep.subr.bf16.mxu0 0
        %1825 = vmatpush1.bf16.msra.mxu0 0
        %1826 = vmatprep.mubr.bf16.mxu0 0
        %1827 = vmatmul.mubr.bf16.gmra.mrb[0].mxu0 %v1741
        %v1828 = vpop.f32.mrb[0].mxu0
        %v1829 = vadd.f32 %v1745, %v1828
        %v1830 = vpop.f32.mrb[0].mxu0
        %v1831 = vpop.f32.mrb[0].mxu0
        %v1832 = vpop.f32.mrb[0].mxu0
        %1833 = vdwg.mxu0
        %v1834 = vadd.f32 %v485, %v1829
        %1835 = vadd.xlane.f32.xlu0 %v1834
        %v1836 = vpop.xlane.xlu0 %1835
        %v1837 = vrcp.pop 128.0
        %v1838 = vmul.f32 %v1836, %v1837
        %v1839 = vsub.f32 %v1834, %v1838
        %v1840 = vmul.f32 %v1839, %v1839
        %1841 = vadd.xlane.f32.xlu0 %v1840
        %v1842 = vpop.xlane.xlu0 %1841
        %v1843 = vmul.f32 %v1842, %v1837
        %v1844 = vadd.f32 %v1843, 1e-05
        %v1845 = vrsqrt.pop %v1844
        %v1846 = vmul.f32 %v1839, %v1845
        %v1847 = vlaneseq
        %v1848 = vshrl.u32 %v1847, 7
        %v1849 = vsub.s32 2, %v1848
        %v1850 = vrot.slane %v588, %v1849
        %v1851 = vmul.f32 %v1846, %v1850
        %v1852 = vlaneseq
        %v1853 = vshrl.u32 %v1852, 7
        %v1854 = vsub.s32 3, %v1853
        %v1855 = vrot.slane %v588, %v1854
        %v1856 = vadd.f32 %v1851, %v1855
        %v1857 = vpack.c.bf16 %v1856, %v1856
        %v1859 = vlaneseq
        %v1860 = vshrl.u32 %v1859, 7
        %v1861 = vsub.s32 0, %v1860
        %v1862 = vrot.slane %v587, %v1861
        %v1863 = vlaneseq
        %v1864 = vshrl.u32 %v1863, 7
        %v1865 = vsub.s32 1, %v1864
        %v1866 = vrot.slane %v587, %v1865
        %v1885 = vunpack.c.l.b16 %v539
        %v1886 = vunpack.c.h.b16 %v539
        %v1887 = vunpack.c.l.b16 %v540
        %v1888 = vunpack.c.h.b16 %v540
        %v1889 = vunpack.c.l.b16 %v541
        %v1890 = vunpack.c.h.b16 %v541
        %v1891 = vunpack.c.l.b16 %v542
        %v1892 = vunpack.c.h.b16 %v542
        %v1893 = vunpack.c.l.b16 %v543
        %v1894 = vunpack.c.h.b16 %v543
        %v1895 = vunpack.c.l.b16 %v544
        %v1896 = vunpack.c.h.b16 %v544
        %v1897 = vunpack.c.l.b16 %v545
        %v1898 = vunpack.c.h.b16 %v545
        %v1899 = vunpack.c.l.b16 %v546
        %v1900 = vunpack.c.h.b16 %v546
        %v1901 = vunpack.c.l.b16 %v547
        %v1902 = vunpack.c.h.b16 %v547
        %v1903 = vunpack.c.l.b16 %v548
        %v1904 = vunpack.c.h.b16 %v548
        %v1905 = vunpack.c.l.b16 %v549
        %v1906 = vunpack.c.h.b16 %v549
        %v1907 = vunpack.c.l.b16 %v550
        %v1908 = vunpack.c.h.b16 %v550
        %v1909 = vunpack.c.l.b16 %v551
        %v1910 = vunpack.c.h.b16 %v551
        %v1911 = vunpack.c.l.b16 %v552
        %v1912 = vunpack.c.h.b16 %v552
        %v1913 = vunpack.c.l.b16 %v553
        %v1914 = vunpack.c.h.b16 %v553
        %v1915 = vunpack.c.l.b16 %v554
        %v1916 = vunpack.c.h.b16 %v554
        %v1917 = vpack.c.b16 %v1887, %v1885
        %v1918 = vpack.c.b16 %v1888, %v1886
        %v1919 = vpack.c.b16 %v1891, %v1889
        %v1920 = vpack.c.b16 %v1892, %v1890
        %v1921 = vpack.c.b16 %v1895, %v1893
        %v1922 = vpack.c.b16 %v1896, %v1894
        %v1923 = vpack.c.b16 %v1899, %v1897
        %v1924 = vpack.c.b16 %v1900, %v1898
        %v1925 = vpack.c.b16 %v1903, %v1901
        %v1926 = vpack.c.b16 %v1904, %v1902
        %v1927 = vpack.c.b16 %v1907, %v1905
        %v1928 = vpack.c.b16 %v1908, %v1906
        %v1929 = vpack.c.b16 %v1911, %v1909
        %v1930 = vpack.c.b16 %v1912, %v1910
        %v1931 = vpack.c.b16 %v1915, %v1913
        %v1932 = vpack.c.b16 %v1916, %v1914
        %1949 = vmatprep.subr.bf16.mxu0 %v1918
        %1950 = vmatpush1.bf16.msra.mxu0 %v1917
        %1951 = vmatprep.subr.bf16.mxu0 %v1920
        %1952 = vmatpush1.bf16.msra.mxu0 %v1919
        %1953 = vmatprep.subr.bf16.mxu0 %v1922
        %1954 = vmatpush1.bf16.msra.mxu0 %v1921
        %1955 = vmatprep.subr.bf16.mxu0 %v1924
        %1956 = vmatpush1.bf16.msra.mxu0 %v1923
        %1957 = vmatprep.subr.bf16.mxu0 %v1926
        %1958 = vmatpush1.bf16.msra.mxu0 %v1925
        %1959 = vmatprep.subr.bf16.mxu0 %v1928
        %1960 = vmatpush1.bf16.msra.mxu0 %v1927
        %1961 = vmatprep.subr.bf16.mxu0 %v1930
        %1962 = vmatpush1.bf16.msra.mxu0 %v1929
        %1963 = vmatprep.subr.bf16.mxu0 %v1932
        %1964 = vmatpush1.bf16.msra.mxu0 %v1931
        %1965 = vmatprep.subr.bf16.mxu0 0
        %1966 = vmatpush1.bf16.msra.mxu0 0
        %1967 = vmatprep.subr.bf16.mxu0 0
        %1968 = vmatpush1.bf16.msra.mxu0 0
        %1969 = vmatprep.subr.bf16.mxu0 0
        %1970 = vmatpush1.bf16.msra.mxu0 0
        %1971 = vmatprep.subr.bf16.mxu0 0
        %1972 = vmatpush1.bf16.msra.mxu0 0
        %1973 = vmatprep.subr.bf16.mxu0 0
        %1974 = vmatpush1.bf16.msra.mxu0 0
        %1975 = vmatprep.subr.bf16.mxu0 0
        %1976 = vmatpush1.bf16.msra.mxu0 0
        %1977 = vmatprep.subr.bf16.mxu0 0
        %1978 = vmatpush1.bf16.msra.mxu0 0
        %1979 = vmatprep.subr.bf16.mxu0 0
        %1980 = vmatpush1.bf16.msra.mxu0 0
        %1981 = vmatprep.mubr.bf16.mxu0 0
        %1982 = vmatmul.mubr.bf16.gmra.mrb[0].mxu0 %v1857
        %v1983 = vpop.f32.mrb[0].mxu0
        %v1984 = vadd.f32 %v1862, %v1983
        %v1985 = vpop.f32.mrb[0].mxu0
        %v1986 = vadd.f32 %v1866, %v1985
        %v1987 = vpop.f32.mrb[0].mxu0
        %v1988 = vpop.f32.mrb[0].mxu0
        %1989 = vdwg.mxu0
        %v1990 = vmax.f32 %v1984, 0.0
        %v1991 = vmax.f32 %v1986, 0.0
        %v1992 = vpack.c.bf16 %v1990, %v1990
        %v1993 = vpack.c.bf16 %v1991, %v1991
        %v1994 = vlaneseq
        %v1995 = vshrl.u32 %v1994, 7
        %v1996 = vsub.s32 1, %v1995
        %v1997 = vrot.slane %v588, %v1996
        %v2030 = vunpack.c.l.b16 %v555
        %v2031 = vunpack.c.l.b16 %v556
        %v2032 = vunpack.c.l.b16 %v557
        %v2033 = vunpack.c.l.b16 %v558
        %v2034 = vunpack.c.l.b16 %v559
        %v2035 = vunpack.c.l.b16 %v560
        %v2036 = vunpack.c.l.b16 %v561
        %v2037 = vunpack.c.l.b16 %v562
        %v2038 = vunpack.c.l.b16 %v563
        %v2039 = vunpack.c.l.b16 %v564
        %v2040 = vunpack.c.l.b16 %v565
        %v2041 = vunpack.c.l.b16 %v566
        %v2042 = vunpack.c.l.b16 %v567
        %v2043 = vunpack.c.l.b16 %v568
        %v2044 = vunpack.c.l.b16 %v569
        %v2045 = vunpack.c.l.b16 %v570
        %v2046 = vunpack.c.l.b16 %v571
        %v2047 = vunpack.c.l.b16 %v572
        %v2048 = vunpack.c.l.b16 %v573
        %v2049 = vunpack.c.l.b16 %v574
        %v2050 = vunpack.c.l.b16 %v575
        %v2051 = vunpack.c.l.b16 %v576
        %v2052 = vunpack.c.l.b16 %v577
        %v2053 = vunpack.c.l.b16 %v578
        %v2054 = vunpack.c.l.b16 %v579
        %v2055 = vunpack.c.l.b16 %v580
        %v2056 = vunpack.c.l.b16 %v581
        %v2057 = vunpack.c.l.b16 %v582
        %v2058 = vunpack.c.l.b16 %v583
        %v2059 = vunpack.c.l.b16 %v584
        %v2060 = vunpack.c.l.b16 %v585
        %v2061 = vunpack.c.l.b16 %v586
        %v2062 = vpack.c.b16 %v2031, %v2030
        %v2063 = vpack.c.b16 %v2033, %v2032
        %v2064 = vpack.c.b16 %v2035, %v2034
        %v2065 = vpack.c.b16 %v2037, %v2036
        %v2066 = vpack.c.b16 %v2039, %v2038
        %v2067 = vpack.c.b16 %v2041, %v2040
        %v2068 = vpack.c.b16 %v2043, %v2042
        %v2069 = vpack.c.b16 %v2045, %v2044
        %v2070 = vpack.c.b16 %v2047, %v2046
        %v2071 = vpack.c.b16 %v2049, %v2048
        %v2072 = vpack.c.b16 %v2051, %v2050
        %v2073 = vpack.c.b16 %v2053, %v2052
        %v2074 = vpack.c.b16 %v2055, %v2054
        %v2075 = vpack.c.b16 %v2057, %v2056
        %v2076 = vpack.c.b16 %v2059, %v2058
        %v2077 = vpack.c.b16 %v2061, %v2060
        %2094 = vmatprep.subr.bf16.mxu0 0
        %2095 = vmatpush1.bf16.msra.mxu0 %v2062
        %2096 = vmatprep.subr.bf16.mxu0 0
        %2097 = vmatpush1.bf16.msra.mxu0 %v2063
        %2098 = vmatprep.subr.bf16.mxu0 0
        %2099 = vmatpush1.bf16.msra.mxu0 %v2064
        %2100 = vmatprep.subr.bf16.mxu0 0
        %2101 = vmatpush1.bf16.msra.mxu0 %v2065
        %2102 = vmatprep.subr.bf16.mxu0 0
        %2103 = vmatpush1.bf16.msra.mxu0 %v2066
        %2104 = vmatprep.subr.bf16.mxu0 0
        %2105 = vmatpush1.bf16.msra.mxu0 %v2067
        %2106 = vmatprep.subr.bf16.mxu0 0
        %2107 = vmatpush1.bf16.msra.mxu0 %v2068
        %2108 = vmatprep.subr.bf16.mxu0 0
        %2109 = vmatpush1.bf16.msra.mxu0 %v2069
        %2110 = vmatprep.subr.bf16.mxu0 0
        %2111 = vmatpush1.bf16.msra.mxu0 %v2070
        %2112 = vmatprep.subr.bf16.mxu0 0
        %2113 = vmatpush1.bf16.msra.mxu0 %v2071
        %2114 = vmatprep.subr.bf16.mxu0 0
        %2115 = vmatpush1.bf16.msra.mxu0 %v2072
        %2116 = vmatprep.subr.bf16.mxu0 0
        %2117 = vmatpush1.bf16.msra.mxu0 %v2073
        %2118 = vmatprep.subr.bf16.mxu0 0
        %2119 = vmatpush1.bf16.msra.mxu0 %v2074
        %2120 = vmatprep.subr.bf16.mxu0 0
        %2121 = vmatpush1.bf16.msra.mxu0 %v2075
        %2122 = vmatprep.subr.bf16.mxu0 0
        %2123 = vmatpush1.bf16.msra.mxu0 %v2076
        %2124 = vmatprep.subr.bf16.mxu0 0
        %2125 = vmatpush1.bf16.msra.mxu0 %v2077
        %2126 = vmatprep.mubr.bf16.mxu0 %v1993
        %2127 = vmatmul.mubr.bf16.gmra.mrb[0].mxu0 %v1992
        %v2128 = vpop.f32.mrb[0].mxu0
        %v2129 = vadd.f32 %v1997, %v2128
        %v2130 = vpop.f32.mrb[0].mxu0
        %v2131 = vpop.f32.mrb[0].mxu0
        %v2132 = vpop.f32.mrb[0].mxu0
        %2133 = vdwg.mxu0
        %v2134 = vadd.f32 %v1856, %v2129
        %2135 = vadd.xlane.f32.xlu0 %v2134
        %v2136 = vpop.xlane.xlu0 %2135
        %v2137 = vmul.f32 %v2136, %v1837
        %v2138 = vsub.f32 %v2134, %v2137
        %v2139 = vmul.f32 %v2138, %v2138
        %2140 = vadd.xlane.f32.xlu0 %v2139
        %v2141 = vpop.xlane.xlu0 %2140
        %v2142 = vmul.f32 %v2141, %v1837
        %v2143 = vadd.f32 %v2142, 1e-05
        %v2144 = vrsqrt.pop %v2143
        %v2145 = vmul.f32 %v2138, %v2144
        %v2146 = vlaneseq
        %v2147 = vshrl.u32 %v2146, 7
        %v2148 = vsub.s32 4, %v2147
        %v2149 = vrot.slane %v588, %v2148
        %v2150 = vmul.f32 %v2145, %v2149
        %v2151 = vlaneseq
        %v2152 = vshrl.u32 %v2151, 7
        %v2153 = vsub.s32 5, %v2152
        %v2154 = vrot.slane %v588, %v2153
        %v2155 = vadd.f32 %v2150, %v2154
        %s2156 = scalar_lea.vmem [#allocation3], 192
        %v2157 = vld [vmem:[%s2156] sm:$0xff]
        %v2158 = vld [vmem:[%s2156 + $0x8] sm:$0xf]
        %v2159 = vld [vmem:[%s2156 + $0xc] sm:$0xff]
        %v2160 = vld [vmem:[%s2156 + $0x14] sm:$0xf]
        %v2161 = vld [vmem:[%s2156 + $0x18] sm:$0xff]
        %v2162 = vld [vmem:[%s2156 + $0x20] sm:$0xf]
        %v2163 = vld [vmem:[%s2156 + $0x24] sm:$0xff]
        %v2164 = vld [vmem:[%s2156 + $0x2c] sm:$0xf]
        %v2165 = vld [vmem:[%s2156 + $0x30] sm:$0xff]
        %v2166 = vld [vmem:[%s2156 + $0x38] sm:$0xf]
        %v2167 = vld [vmem:[%s2156 + $0x3c] sm:$0xff]
        %v2168 = vld [vmem:[%s2156 + $0x44] sm:$0xf]
        %v2169 = vld [vmem:[%s2156 + $0x48] sm:$0xff]
        %v2170 = vld [vmem:[%s2156 + $0x50] sm:$0xf]
        %v2171 = vld [vmem:[%s2156 + $0x54] sm:$0xff]
        %v2172 = vld [vmem:[%s2156 + $0x5c] sm:$0xf]
        %v2173 = vld [vmem:[%s2156 + $0x60] sm:$0xff]
        %v2174 = vld [vmem:[%s2156 + $0x68] sm:$0xf]
        %v2175 = vld [vmem:[%s2156 + $0x6c] sm:$0xff]
        %v2176 = vld [vmem:[%s2156 + $0x74] sm:$0xf]
        %v2177 = vld [vmem:[%s2156 + $0x78] sm:$0xff]
        %v2178 = vld [vmem:[%s2156 + $0x80] sm:$0xf]
        %v2179 = vld [vmem:[%s2156 + $0x84] sm:$0xff]
        %v2180 = vld [vmem:[%s2156 + $0x8c] sm:$0xf]
        %v2181 = vld [vmem:[%s2156 + $0x90] sm:$0xff]
        %v2182 = vld [vmem:[%s2156 + $0x98] sm:$0xf]
        %v2183 = vld [vmem:[%s2156 + $0x9c] sm:$0xff]
        %v2184 = vld [vmem:[%s2156 + $0xa4] sm:$0xf]
        %v2185 = vld [vmem:[%s2156 + $0xa8] sm:$0xff]
        %v2186 = vld [vmem:[%s2156 + $0xb0] sm:$0xf]
        %v2187 = vld [vmem:[%s2156 + $0xb4] sm:$0xff]
        %v2188 = vld [vmem:[%s2156 + $0xbc] sm:$0xf]
        %s2189 = scalar_lea.vmem %s4, 3
        %v2190 = vld [vmem:[%s2189] sm:$0x7]
        %s2191 = scalar_lea.vmem [#allocation6], 64
        %v2192 = vld [vmem:[%s2191] sm:$0xf]
        %v2193 = vld [vmem:[%s2191 + $0x4] sm:$0xf]
        %v2194 = vld [vmem:[%s2191 + $0x8] sm:$0xf]
        %v2195 = vld [vmem:[%s2191 + $0xc] sm:$0xf]
        %v2196 = vld [vmem:[%s2191 + $0x10] sm:$0xf]
        %v2197 = vld [vmem:[%s2191 + $0x14] sm:$0xf]
        %v2198 = vld [vmem:[%s2191 + $0x18] sm:$0xf]
        %v2199 = vld [vmem:[%s2191 + $0x1c] sm:$0xf]
        %v2200 = vld [vmem:[%s2191 + $0x20] sm:$0xf]
        %v2201 = vld [vmem:[%s2191 + $0x24] sm:$0xf]
        %v2202 = vld [vmem:[%s2191 + $0x28] sm:$0xf]
        %v2203 = vld [vmem:[%s2191 + $0x2c] sm:$0xf]
        %v2204 = vld [vmem:[%s2191 + $0x30] sm:$0xf]
        %v2205 = vld [vmem:[%s2191 + $0x34] sm:$0xf]
        %v2206 = vld [vmem:[%s2191 + $0x38] sm:$0xf]
        %v2207 = vld [vmem:[%s2191 + $0x3c] sm:$0xf]
        %s2208 = scalar_lea.vmem [#allocation8], 128
        %v2209 = vld [vmem:[%s2208] sm:$0xff]
        %v2210 = vld [vmem:[%s2208 + $0x8] sm:$0xff]
        %v2211 = vld [vmem:[%s2208 + $0x10] sm:$0xff]
        %v2212 = vld [vmem:[%s2208 + $0x18] sm:$0xff]
        %v2213 = vld [vmem:[%s2208 + $0x20] sm:$0xff]
        %v2214 = vld [vmem:[%s2208 + $0x28] sm:$0xff]
        %v2215 = vld [vmem:[%s2208 + $0x30] sm:$0xff]
        %v2216 = vld [vmem:[%s2208 + $0x38] sm:$0xff]
        %v2217 = vld [vmem:[%s2208 + $0x40] sm:$0xff]
        %v2218 = vld [vmem:[%s2208 + $0x48] sm:$0xff]
        %v2219 = vld [vmem:[%s2208 + $0x50] sm:$0xff]
        %v2220 = vld [vmem:[%s2208 + $0x58] sm:$0xff]
        %v2221 = vld [vmem:[%s2208 + $0x60] sm:$0xff]
        %v2222 = vld [vmem:[%s2208 + $0x68] sm:$0xff]
        %v2223 = vld [vmem:[%s2208 + $0x70] sm:$0xff]
        %v2224 = vld [vmem:[%s2208 + $0x78] sm:$0xff]
        %s2225 = scalar_lea.vmem [#allocation11], 128
        %v2226 = vld [vmem:[%s2225] sm:$0xf]
        %v2227 = vld [vmem:[%s2225 + $0x4] sm:$0xf]
        %v2228 = vld [vmem:[%s2225 + $0x8] sm:$0xf]
        %v2229 = vld [vmem:[%s2225 + $0xc] sm:$0xf]
        %v2230 = vld [vmem:[%s2225 + $0x10] sm:$0xf]
        %v2231 = vld [vmem:[%s2225 + $0x14] sm:$0xf]
        %v2232 = vld [vmem:[%s2225 + $0x18] sm:$0xf]
        %v2233 = vld [vmem:[%s2225 + $0x1c] sm:$0xf]
        %v2234 = vld [vmem:[%s2225 + $0x20] sm:$0xf]
        %v2235 = vld [vmem:[%s2225 + $0x24] sm:$0xf]
        %v2236 = vld [vmem:[%s2225 + $0x28] sm:$0xf]
        %v2237 = vld [vmem:[%s2225 + $0x2c] sm:$0xf]
        %v2238 = vld [vmem:[%s2225 + $0x30] sm:$0xf]
        %v2239 = vld [vmem:[%s2225 + $0x34] sm:$0xf]
        %v2240 = vld [vmem:[%s2225 + $0x38] sm:$0xf]
        %v2241 = vld [vmem:[%s2225 + $0x3c] sm:$0xf]
        %v2242 = vld [vmem:[%s2225 + $0x40] sm:$0xf]
        %v2243 = vld [vmem:[%s2225 + $0x44] sm:$0xf]
        %v2244 = vld [vmem:[%s2225 + $0x48] sm:$0xf]
        %v2245 = vld [vmem:[%s2225 + $0x4c] sm:$0xf]
        %v2246 = vld [vmem:[%s2225 + $0x50] sm:$0xf]
        %v2247 = vld [vmem:[%s2225 + $0x54] sm:$0xf]
        %v2248 = vld [vmem:[%s2225 + $0x58] sm:$0xf]
        %v2249 = vld [vmem:[%s2225 + $0x5c] sm:$0xf]
        %v2250 = vld [vmem:[%s2225 + $0x60] sm:$0xf]
        %v2251 = vld [vmem:[%s2225 + $0x64] sm:$0xf]
        %v2252 = vld [vmem:[%s2225 + $0x68] sm:$0xf]
        %v2253 = vld [vmem:[%s2225 + $0x6c] sm:$0xf]
        %v2254 = vld [vmem:[%s2225 + $0x70] sm:$0xf]
        %v2255 = vld [vmem:[%s2225 + $0x74] sm:$0xf]
        %v2256 = vld [vmem:[%s2225 + $0x78] sm:$0xf]
        %v2257 = vld [vmem:[%s2225 + $0x7c] sm:$0xf]
        %s2258 = scalar_lea.vmem [#allocation9], 2
        %v2259 = vld [vmem:[%s2258] sm:$0x3]
        %s2260 = scalar_lea.vmem %s9, 8
        %v2261 = vld [vmem:[%s2260] sm:$0x3f]
        %v2262 = vpack.c.bf16 %v2155, %v2155
        %v2264 = vlaneseq
        %v2265 = vshrl.u32 %v2264, 7
        %v2266 = vsub.s32 0, %v2265
        %v2267 = vrot.slane %v2190, %v2266
        %v2268 = vlaneseq
        %v2269 = vshrl.u32 %v2268, 7
        %v2270 = vsub.s32 1, %v2269
        %v2271 = vrot.slane %v2190, %v2270
        %v2272 = vlaneseq
        %v2273 = vshrl.u32 %v2272, 7
        %v2274 = vsub.s32 2, %v2273
        %v2275 = vrot.slane %v2190, %v2274
        %v2311 = vunpack.c.l.b16 %v2157
        %v2312 = vunpack.c.h.b16 %v2157
        %v2313 = vunpack.c.l.b16 %v2158
        %v2314 = vunpack.c.l.b16 %v2159
        %v2315 = vunpack.c.h.b16 %v2159
        %v2316 = vunpack.c.l.b16 %v2160
        %v2317 = vunpack.c.l.b16 %v2161
        %v2318 = vunpack.c.h.b16 %v2161
        %v2319 = vunpack.c.l.b16 %v2162
        %v2320 = vunpack.c.l.b16 %v2163
        %v2321 = vunpack.c.h.b16 %v2163
        %v2322 = vunpack.c.l.b16 %v2164
        %v2323 = vunpack.c.l.b16 %v2165
        %v2324 = vunpack.c.h.b16 %v2165
        %v2325 = vunpack.c.l.b16 %v2166
        %v2326 = vunpack.c.l.b16 %v2167
        %v2327 = vunpack.c.h.b16 %v2167
        %v2328 = vunpack.c.l.b16 %v2168
        %v2329 = vunpack.c.l.b16 %v2169
        %v2330 = vunpack.c.h.b16 %v2169
        %v2331 = vunpack.c.l.b16 %v2170
        %v2332 = vunpack.c.l.b16 %v2171
        %v2333 = vunpack.c.h.b16 %v2171
        %v2334 = vunpack.c.l.b16 %v2172
        %v2335 = vunpack.c.l.b16 %v2173
        %v2336 = vunpack.c.h.b16 %v2173
        %v2337 = vunpack.c.l.b16 %v2174
        %v2338 = vunpack.c.l.b16 %v2175
        %v2339 = vunpack.c.h.b16 %v2175
        %v2340 = vunpack.c.l.b16 %v2176
        %v2341 = vunpack.c.l.b16 %v2177
        %v2342 = vunpack.c.h.b16 %v2177
        %v2343 = vunpack.c.l.b16 %v2178
        %v2344 = vunpack.c.l.b16 %v2179
        %v2345 = vunpack.c.h.b16 %v2179
        %v2346 = vunpack.c.l.b16 %v2180
        %v2347 = vunpack.c.l.b16 %v2181
        %v2348 = vunpack.c.h.b16 %v2181
        %v2349 = vunpack.c.l.b16 %v2182
        %v2350 = vunpack.c.l.b16 %v2183
        %v2351 = vunpack.c.h.b16 %v2183
        %v2352 = vunpack.c.l.b16 %v2184
        %v2353 = vunpack.c.l.b16 %v2185
        %v2354 = vunpack.c.h.b16 %v2185
        %v2355 = vunpack.c.l.b16 %v2186
        %v2356 = vunpack.c.l.b16 %v2187
        %v2357 = vunpack.c.h.b16 %v2187
        %v2358 = vunpack.c.l.b16 %v2188
        %v2359 = vpack.c.b16 %v2314, %v2311
        %v2360 = vpack.c.b16 %v2315, %v2312
        %v2361 = vpack.c.b16 %v2316, %v2313
        %v2362 = vpack.c.b16 %v2320, %v2317
        %v2363 = vpack.c.b16 %v2321, %v2318
        %v2364 = vpack.c.b16 %v2322, %v2319
        %v2365 = vpack.c.b16 %v2326, %v2323
        %v2366 = vpack.c.b16 %v2327, %v2324
        %v2367 = vpack.c.b16 %v2328, %v2325
        %v2368 = vpack.c.b16 %v2332, %v2329
        %v2369 = vpack.c.b16 %v2333, %v2330
        %v2370 = vpack.c.b16 %v2334, %v2331
        %v2371 = vpack.c.b16 %v2338, %v2335
        %v2372 = vpack.c.b16 %v2339, %v2336
        %v2373 = vpack.c.b16 %v2340, %v2337
        %v2374 = vpack.c.b16 %v2344, %v2341
        %v2375 = vpack.c.b16 %v2345, %v2342
        %v2376 = vpack.c.b16 %v2346, %v2343
        %v2377 = vpack.c.b16 %v2350, %v2347
        %v2378 = vpack.c.b16 %v2351, %v2348
        %v2379 = vpack.c.b16 %v2352, %v2349
        %v2380 = vpack.c.b16 %v2356, %v2353
        %v2381 = vpack.c.b16 %v2357, %v2354
        %v2382 = vpack.c.b16 %v2358, %v2355
        %2407 = vmatprep.subr.bf16.mxu0 %v2360
        %2408 = vmatpush1.bf16.msra.mxu0 %v2359
        %2409 = vmatprep.subr.bf16.mxu0 %v2363
        %2410 = vmatpush1.bf16.msra.mxu0 %v2362
        %2411 = vmatprep.subr.bf16.mxu0 %v2366
        %2412 = vmatpush1.bf16.msra.mxu0 %v2365
        %2413 = vmatprep.subr.bf16.mxu0 %v2369
        %2414 = vmatpush1.bf16.msra.mxu0 %v2368
        %2415 = vmatprep.subr.bf16.mxu0 %v2372
        %2416 = vmatpush1.bf16.msra.mxu0 %v2371
        %2417 = vmatprep.subr.bf16.mxu0 %v2375
        %2418 = vmatpush1.bf16.msra.mxu0 %v2374
        %2419 = vmatprep.subr.bf16.mxu0 %v2378
        %2420 = vmatpush1.bf16.msra.mxu0 %v2377
        %2421 = vmatprep.subr.bf16.mxu0 %v2381
        %2422 = vmatpush1.bf16.msra.mxu0 %v2380
        %2423 = vmatprep.subr.bf16.mxu0 0
        %2424 = vmatpush1.bf16.msra.mxu0 0
        %2425 = vmatprep.subr.bf16.mxu0 0
        %2426 = vmatpush1.bf16.msra.mxu0 0
        %2427 = vmatprep.subr.bf16.mxu0 0
        %2428 = vmatpush1.bf16.msra.mxu0 0
        %2429 = vmatprep.subr.bf16.mxu0 0
        %2430 = vmatpush1.bf16.msra.mxu0 0
        %2431 = vmatprep.subr.bf16.mxu0 0
        %2432 = vmatpush1.bf16.msra.mxu0 0
        %2433 = vmatprep.subr.bf16.mxu0 0
        %2434 = vmatpush1.bf16.msra.mxu0 0
        %2435 = vmatprep.subr.bf16.mxu0 0
        %2436 = vmatpush1.bf16.msra.mxu0 0
        %2437 = vmatprep.subr.bf16.mxu0 0
        %2438 = vmatpush1.bf16.msra.mxu0 0
        %2439 = vmatprep.mubr.bf16.mxu0 0
        %2440 = vmatmul.mubr.bf16.gmra.mrb[0].mxu0 %v2262
        %v2441 = vpop.f32.mrb[0].mxu0
        %v2442 = vadd.f32 %v2267, %v2441
        %v2443 = vpop.f32.mrb[0].mxu0
        %v2444 = vadd.f32 %v2271, %v2443
        %v2445 = vpop.f32.mrb[0].mxu0
        %v2446 = vpop.f32.mrb[0].mxu0
        %2447 = vdwg.mxu0
        %2448 = vmatprep.subr.bf16.mxu0 0
        %2449 = vmatpush1.bf16.msra.mxu0 %v2361
        %2450 = vmatprep.subr.bf16.mxu0 0
        %2451 = vmatpush1.bf16.msra.mxu0 %v2364
        %2452 = vmatprep.subr.bf16.mxu0 0
        %2453 = vmatpush1.bf16.msra.mxu0 %v2367
        %2454 = vmatprep.subr.bf16.mxu0 0
        %2455 = vmatpush1.bf16.msra.mxu0 %v2370
        %2456 = vmatprep.subr.bf16.mxu0 0
        %2457 = vmatpush1.bf16.msra.mxu0 %v2373
        %2458 = vmatprep.subr.bf16.mxu0 0
        %2459 = vmatpush1.bf16.msra.mxu0 %v2376
        %2460 = vmatprep.subr.bf16.mxu0 0
        %2461 = vmatpush1.bf16.msra.mxu0 %v2379
        %2462 = vmatprep.subr.bf16.mxu0 0
        %2463 = vmatpush1.bf16.msra.mxu0 %v2382
        %2464 = vmatprep.subr.bf16.mxu0 0
        %2465 = vmatpush1.bf16.msra.mxu0 0
        %2466 = vmatprep.subr.bf16.mxu0 0
        %2467 = vmatpush1.bf16.msra.mxu0 0
        %2468 = vmatprep.subr.bf16.mxu0 0
        %2469 = vmatpush1.bf16.msra.mxu0 0
        %2470 = vmatprep.subr.bf16.mxu0 0
        %2471 = vmatpush1.bf16.msra.mxu0 0
        %2472 = vmatprep.subr.bf16.mxu0 0
        %2473 = vmatpush1.bf16.msra.mxu0 0
        %2474 = vmatprep.subr.bf16.mxu0 0
        %2475 = vmatpush1.bf16.msra.mxu0 0
        %2476 = vmatprep.subr.bf16.mxu0 0
        %2477 = vmatpush1.bf16.msra.mxu0 0
        %2478 = vmatprep.subr.bf16.mxu0 0
        %2479 = vmatpush1.bf16.msra.mxu0 0
        %2480 = vmatprep.mubr.bf16.mxu0 0
        %2481 = vmatmul.mubr.bf16.gmra.mrb[0].mxu0 %v2262
        %v2482 = vpop.f32.mrb[0].mxu0
        %v2483 = vadd.f32 %v2275, %v2482
        %v2484 = vpop.f32.mrb[0].mxu0
        %v2485 = vpop.f32.mrb[0].mxu0
        %v2486 = vpop.f32.mrb[0].mxu0
        %2487 = vdwg.mxu0
        %v2488 = vpack.c.bf16 %v2442, %v2442
        %v2489 = vpack.c.bf16 %v2444, %v2444
        %v2490 = vpack.c.bf16 %v2483, %v2483
        %v2492 = vsel %vm446, %v2488, 0
        %v2495 = vsel %vm446, %v2489, 0
        %2497 = vmatprep.subr.bf16.mxu0 0
        %2498 = vmatpush1.bf16.xpose.msra.mxu0 %v2495
        %2499 = vmatprep.subr.bf16.mxu0 0
        %2500 = vmatpush1.bf16.xpose.msra.mxu0 0
        %2501 = vmatprep.subr.bf16.mxu0 0
        %2502 = vmatpush1.bf16.xpose.msra.mxu0 0
        %2503 = vmatprep.subr.bf16.mxu0 0
        %2504 = vmatpush1.bf16.xpose.msra.mxu0 0
        %2505 = vmatprep.subr.bf16.mxu0 0
        %2506 = vmatpush1.bf16.xpose.msra.mxu0 0
        %2507 = vmatprep.subr.bf16.mxu0 0
        %2508 = vmatpush1.bf16.xpose.msra.mxu0 0
        %2509 = vmatprep.subr.bf16.mxu0 0
        %2510 = vmatpush1.bf16.xpose.msra.mxu0 0
        %2511 = vmatprep.subr.bf16.mxu0 0
        %2512 = vmatpush1.bf16.xpose.msra.mxu0 0
        %2513 = vmatprep.subr.bf16.mxu0 0
        %2514 = vmatpush1.bf16.xpose.msra.mxu0 0
        %2515 = vmatprep.subr.bf16.mxu0 0
        %2516 = vmatpush1.bf16.xpose.msra.mxu0 0
        %2517 = vmatprep.subr.bf16.mxu0 0
        %2518 = vmatpush1.bf16.xpose.msra.mxu0 0
        %2519 = vmatprep.subr.bf16.mxu0 0
        %2520 = vmatpush1.bf16.xpose.msra.mxu0 0
        %2521 = vmatprep.subr.bf16.mxu0 0
        %2522 = vmatpush1.bf16.xpose.msra.mxu0 0
        %2523 = vmatprep.subr.bf16.mxu0 0
        %2524 = vmatpush1.bf16.xpose.msra.mxu0 0
        %2525 = vmatprep.subr.bf16.mxu0 0
        %2526 = vmatpush1.bf16.xpose.msra.mxu0 0
        %2527 = vmatprep.subr.bf16.mxu0 0
        %2528 = vmatpush1.bf16.xpose.msra.mxu0 0
        %2529 = vmatprep.mubr.bf16.mxu0 0
        %2530 = vmatmul.mubr.bf16.gmra.mrb[0].mxu0 %v2492
        %v2531 = vpop.f32.mrb[0].mxu0
        %v2532 = vadd.f32 0.0, %v2531
        %v2533 = vpop.f32.mrb[0].mxu0
        %v2534 = vpop.f32.mrb[0].mxu0
        %v2535 = vpop.f32.mrb[0].mxu0
        %2536 = vdwg.mxu0
        %v2537 = vsel %vm864, %v2532, -inf
        %2538 = vmax.xlane.f32.xlu0 %v2537
        %v2539 = vpop.xlane.xlu0 %2538
        %v2540 = vsub.f32 %v2532, %v2539
        %v2541 = vmul.f32 %v2540, 1.442695
        %v2542 = vpow.pop %v2541
        %v2543 = vsel %vm864, %v2542, 0.0
        %2544 = vadd.xlane.f32.xlu0 %v2543
        %v2545 = vpop.xlane.xlu0 %2544
        %v2546 = vrcp.pop %v2545
        %v2547 = vmul.f32 %v2542, %v2546
        %v2548 = vpack.c.bf16 %v2547, %v2547
        %v2550 = vsel %vm864, %v2548, 0
        %v2553 = vsel %vm880, %v2490, 0
        %2555 = vmatprep.subr.bf16.mxu0 0
        %2556 = vmatpush1.bf16.msra.mxu0 %v2553
        %2557 = vmatprep.subr.bf16.mxu0 0
        %2558 = vmatpush1.bf16.msra.mxu0 0
        %2559 = vmatprep.subr.bf16.mxu0 0
        %2560 = vmatpush1.bf16.msra.mxu0 0
        %2561 = vmatprep.subr.bf16.mxu0 0
        %2562 = vmatpush1.bf16.msra.mxu0 0
        %2563 = vmatprep.subr.bf16.mxu0 0
        %2564 = vmatpush1.bf16.msra.mxu0 0
        %2565 = vmatprep.subr.bf16.mxu0 0
        %2566 = vmatpush1.bf16.msra.mxu0 0
        %2567 = vmatprep.subr.bf16.mxu0 0
        %2568 = vmatpush1.bf16.msra.mxu0 0
        %2569 = vmatprep.subr.bf16.mxu0 0
        %2570 = vmatpush1.bf16.msra.mxu0 0
        %2571 = vmatprep.subr.bf16.mxu0 0
        %2572 = vmatpush1.bf16.msra.mxu0 0
        %2573 = vmatprep.subr.bf16.mxu0 0
        %2574 = vmatpush1.bf16.msra.mxu0 0
        %2575 = vmatprep.subr.bf16.mxu0 0
        %2576 = vmatpush1.bf16.msra.mxu0 0
        %2577 = vmatprep.subr.bf16.mxu0 0
        %2578 = vmatpush1.bf16.msra.mxu0 0
        %2579 = vmatprep.subr.bf16.mxu0 0
        %2580 = vmatpush1.bf16.msra.mxu0 0
        %2581 = vmatprep.subr.bf16.mxu0 0
        %2582 = vmatpush1.bf16.msra.mxu0 0
        %2583 = vmatprep.subr.bf16.mxu0 0
        %2584 = vmatpush1.bf16.msra.mxu0 0
        %2585 = vmatprep.subr.bf16.mxu0 0
        %2586 = vmatpush1.bf16.msra.mxu0 0
        %2587 = vmatprep.mubr.bf16.mxu0 0
        %2588 = vmatmul.mubr.bf16.gmra.mrb[0].mxu0 %v2550
        %v2589 = vpop.f32.mrb[0].mxu0
        %v2590 = vadd.f32 0.0, %v2589
        %v2591 = vpop.f32.mrb[0].mxu0
        %v2592 = vpop.f32.mrb[0].mxu0
        %v2593 = vpop.f32.mrb[0].mxu0
        %2594 = vdwg.mxu0
        %2595 = vst.msk [vmem:[#allocation2] sm:$0xff] %vm446, %v2590
        %2597 = vrot.lane.b32.xlu0 %v2488, 112
        %v2598 = vpop.permute.xlu0 %2597
        %2600 = vrot.lane.b32.xlu0 %v2489, 112
        %v2601 = vpop.permute.xlu0 %2600
        %v2603 = vsel %vm446, %v2598, 0
        %v2606 = vsel %vm446, %v2601, 0
        %2608 = vmatprep.subr.bf16.mxu0 0
        %2609 = vmatpush1.bf16.xpose.msra.mxu0 %v2606
        %2610 = vmatprep.subr.bf16.mxu0 0
        %2611 = vmatpush1.bf16.xpose.msra.mxu0 0
        %2612 = vmatprep.subr.bf16.mxu0 0
        %2613 = vmatpush1.bf16.xpose.msra.mxu0 0
        %2614 = vmatprep.subr.bf16.mxu0 0
        %2615 = vmatpush1.bf16.xpose.msra.mxu0 0
        %2616 = vmatprep.subr.bf16.mxu0 0
        %2617 = vmatpush1.bf16.xpose.msra.mxu0 0
        %2618 = vmatprep.subr.bf16.mxu0 0
        %2619 = vmatpush1.bf16.xpose.msra.mxu0 0
        %2620 = vmatprep.subr.bf16.mxu0 0
        %2621 = vmatpush1.bf16.xpose.msra.mxu0 0
        %2622 = vmatprep.subr.bf16.mxu0 0
        %2623 = vmatpush1.bf16.xpose.msra.mxu0 0
        %2624 = vmatprep.subr.bf16.mxu0 0
        %2625 = vmatpush1.bf16.xpose.msra.mxu0 0
        %2626 = vmatprep.subr.bf16.mxu0 0
        %2627 = vmatpush1.bf16.xpose.msra.mxu0 0
        %2628 = vmatprep.subr.bf16.mxu0 0
        %2629 = vmatpush1.bf16.xpose.msra.mxu0 0
        %2630 = vmatprep.subr.bf16.mxu0 0
        %2631 = vmatpush1.bf16.xpose.msra.mxu0 0
        %2632 = vmatprep.subr.bf16.mxu0 0
        %2633 = vmatpush1.bf16.xpose.msra.mxu0 0
        %2634 = vmatprep.subr.bf16.mxu0 0
        %2635 = vmatpush1.bf16.xpose.msra.mxu0 0
        %2636 = vmatprep.subr.bf16.mxu0 0
        %2637 = vmatpush1.bf16.xpose.msra.mxu0 0
        %2638 = vmatprep.subr.bf16.mxu0 0
        %2639 = vmatpush1.bf16.xpose.msra.mxu0 0
        %2640 = vmatprep.mubr.bf16.mxu0 0
        %2641 = vmatmul.mubr.bf16.gmra.mrb[0].mxu0 %v2603
        %v2642 = vpop.f32.mrb[0].mxu0
        %v2643 = vadd.f32 0.0, %v2642
        %v2644 = vpop.f32.mrb[0].mxu0
        %v2645 = vpop.f32.mrb[0].mxu0
        %v2646 = vpop.f32.mrb[0].mxu0
        %2647 = vdwg.mxu0
        %v2648 = vsel %vm864, %v2643, -inf
        %2649 = vmax.xlane.f32.xlu0 %v2648
        %v2650 = vpop.xlane.xlu0 %2649
        %v2651 = vsub.f32 %v2643, %v2650
        %v2652 = vmul.f32 %v2651, 1.442695
        %v2653 = vpow.pop %v2652
        %v2654 = vsel %vm864, %v2653, 0.0
        %2655 = vadd.xlane.f32.xlu0 %v2654
        %v2656 = vpop.xlane.xlu0 %2655
        %v2657 = vrcp.pop %v2656
        %v2658 = vmul.f32 %v2653, %v2657
        %v2659 = vpack.c.bf16 %v2658, %v2658
        %2661 = vrot.lane.b32.xlu0 %v2490, 112
        %v2662 = vpop.permute.xlu0 %2661
        %v2664 = vsel %vm864, %v2659, 0
        %v2667 = vsel %vm880, %v2662, 0
        %2669 = vmatprep.subr.bf16.mxu0 0
        %2670 = vmatpush1.bf16.msra.mxu0 %v2667
        %2671 = vmatprep.subr.bf16.mxu0 0
        %2672 = vmatpush1.bf16.msra.mxu0 0
        %2673 = vmatprep.subr.bf16.mxu0 0
        %2674 = vmatpush1.bf16.msra.mxu0 0
        %2675 = vmatprep.subr.bf16.mxu0 0
        %2676 = vmatpush1.bf16.msra.mxu0 0
        %2677 = vmatprep.subr.bf16.mxu0 0
        %2678 = vmatpush1.bf16.msra.mxu0 0
        %2679 = vmatprep.subr.bf16.mxu0 0
        %2680 = vmatpush1.bf16.msra.mxu0 0
        %2681 = vmatprep.subr.bf16.mxu0 0
        %2682 = vmatpush1.bf16.msra.mxu0 0
        %2683 = vmatprep.subr.bf16.mxu0 0
        %2684 = vmatpush1.bf16.msra.mxu0 0
        %2685 = vmatprep.subr.bf16.mxu0 0
        %2686 = vmatpush1.bf16.msra.mxu0 0
        %2687 = vmatprep.subr.bf16.mxu0 0
        %2688 = vmatpush1.bf16.msra.mxu0 0
        %2689 = vmatprep.subr.bf16.mxu0 0
        %2690 = vmatpush1.bf16.msra.mxu0 0
        %2691 = vmatprep.subr.bf16.mxu0 0
        %2692 = vmatpush1.bf16.msra.mxu0 0
        %2693 = vmatprep.subr.bf16.mxu0 0
        %2694 = vmatpush1.bf16.msra.mxu0 0
        %2695 = vmatprep.subr.bf16.mxu0 0
        %2696 = vmatpush1.bf16.msra.mxu0 0
        %2697 = vmatprep.subr.bf16.mxu0 0
        %2698 = vmatpush1.bf16.msra.mxu0 0
        %2699 = vmatprep.subr.bf16.mxu0 0
        %2700 = vmatpush1.bf16.msra.mxu0 0
        %2701 = vmatprep.mubr.bf16.mxu0 0
        %2702 = vmatmul.mubr.bf16.gmra.mrb[0].mxu0 %v2664
        %v2703 = vpop.f32.mrb[0].mxu0
        %v2704 = vadd.f32 0.0, %v2703
        %v2705 = vpop.f32.mrb[0].mxu0
        %v2706 = vpop.f32.mrb[0].mxu0
        %v2707 = vpop.f32.mrb[0].mxu0
        %2708 = vdwg.mxu0
        %2710 = vrot.lane.b32.xlu0 %v2704, 16
        %v2711 = vpop.permute.xlu0 %2710
        %2713 = vst.msk [vmem:[#allocation2] sm:$0xff] %vm1042, %v2711
        %2714 = vrot.lane.b32.xlu0 %v2488, 96
        %v2715 = vpop.permute.xlu0 %2714
        %2716 = vrot.lane.b32.xlu0 %v2489, 96
        %v2717 = vpop.permute.xlu0 %2716
        %v2719 = vsel %vm446, %v2715, 0
        %v2722 = vsel %vm446, %v2717, 0
        %2724 = vmatprep.subr.bf16.mxu0 0
        %2725 = vmatpush1.bf16.xpose.msra.mxu0 %v2722
        %2726 = vmatprep.subr.bf16.mxu0 0
        %2727 = vmatpush1.bf16.xpose.msra.mxu0 0
        %2728 = vmatprep.subr.bf16.mxu0 0
        %2729 = vmatpush1.bf16.xpose.msra.mxu0 0
        %2730 = vmatprep.subr.bf16.mxu0 0
        %2731 = vmatpush1.bf16.xpose.msra.mxu0 0
        %2732 = vmatprep.subr.bf16.mxu0 0
        %2733 = vmatpush1.bf16.xpose.msra.mxu0 0
        %2734 = vmatprep.subr.bf16.mxu0 0
        %2735 = vmatpush1.bf16.xpose.msra.mxu0 0
        %2736 = vmatprep.subr.bf16.mxu0 0
        %2737 = vmatpush1.bf16.xpose.msra.mxu0 0
        %2738 = vmatprep.subr.bf16.mxu0 0
        %2739 = vmatpush1.bf16.xpose.msra.mxu0 0
        %2740 = vmatprep.subr.bf16.mxu0 0
        %2741 = vmatpush1.bf16.xpose.msra.mxu0 0
        %2742 = vmatprep.subr.bf16.mxu0 0
        %2743 = vmatpush1.bf16.xpose.msra.mxu0 0
        %2744 = vmatprep.subr.bf16.mxu0 0
        %2745 = vmatpush1.bf16.xpose.msra.mxu0 0
        %2746 = vmatprep.subr.bf16.mxu0 0
        %2747 = vmatpush1.bf16.xpose.msra.mxu0 0
        %2748 = vmatprep.subr.bf16.mxu0 0
        %2749 = vmatpush1.bf16.xpose.msra.mxu0 0
        %2750 = vmatprep.subr.bf16.mxu0 0
        %2751 = vmatpush1.bf16.xpose.msra.mxu0 0
        %2752 = vmatprep.subr.bf16.mxu0 0
        %2753 = vmatpush1.bf16.xpose.msra.mxu0 0
        %2754 = vmatprep.subr.bf16.mxu0 0
        %2755 = vmatpush1.bf16.xpose.msra.mxu0 0
        %2756 = vmatprep.mubr.bf16.mxu0 0
        %2757 = vmatmul.mubr.bf16.gmra.mrb[0].mxu0 %v2719
        %v2758 = vpop.f32.mrb[0].mxu0
        %v2759 = vadd.f32 0.0, %v2758
        %v2760 = vpop.f32.mrb[0].mxu0
        %v2761 = vpop.f32.mrb[0].mxu0
        %v2762 = vpop.f32.mrb[0].mxu0
        %2763 = vdwg.mxu0
        %v2764 = vsel %vm864, %v2759, -inf
        %2765 = vmax.xlane.f32.xlu0 %v2764
        %v2766 = vpop.xlane.xlu0 %2765
        %v2767 = vsub.f32 %v2759, %v2766
        %v2768 = vmul.f32 %v2767, 1.442695
        %v2769 = vpow.pop %v2768
        %v2770 = vsel %vm864, %v2769, 0.0
        %2771 = vadd.xlane.f32.xlu0 %v2770
        %v2772 = vpop.xlane.xlu0 %2771
        %v2773 = vrcp.pop %v2772
        %v2774 = vmul.f32 %v2769, %v2773
        %v2775 = vpack.c.bf16 %v2774, %v2774
        %2776 = vrot.lane.b32.xlu0 %v2490, 96
        %v2777 = vpop.permute.xlu0 %2776
        %v2779 = vsel %vm864, %v2775, 0
        %v2782 = vsel %vm880, %v2777, 0
        %2784 = vmatprep.subr.bf16.mxu0 0
        %2785 = vmatpush1.bf16.msra.mxu0 %v2782
        %2786 = vmatprep.subr.bf16.mxu0 0
        %2787 = vmatpush1.bf16.msra.mxu0 0
        %2788 = vmatprep.subr.bf16.mxu0 0
        %2789 = vmatpush1.bf16.msra.mxu0 0
        %2790 = vmatprep.subr.bf16.mxu0 0
        %2791 = vmatpush1.bf16.msra.mxu0 0
        %2792 = vmatprep.subr.bf16.mxu0 0
        %2793 = vmatpush1.bf16.msra.mxu0 0
        %2794 = vmatprep.subr.bf16.mxu0 0
        %2795 = vmatpush1.bf16.msra.mxu0 0
        %2796 = vmatprep.subr.bf16.mxu0 0
        %2797 = vmatpush1.bf16.msra.mxu0 0
        %2798 = vmatprep.subr.bf16.mxu0 0
        %2799 = vmatpush1.bf16.msra.mxu0 0
        %2800 = vmatprep.subr.bf16.mxu0 0
        %2801 = vmatpush1.bf16.msra.mxu0 0
        %2802 = vmatprep.subr.bf16.mxu0 0
        %2803 = vmatpush1.bf16.msra.mxu0 0
        %2804 = vmatprep.subr.bf16.mxu0 0
        %2805 = vmatpush1.bf16.msra.mxu0 0
        %2806 = vmatprep.subr.bf16.mxu0 0
        %2807 = vmatpush1.bf16.msra.mxu0 0
        %2808 = vmatprep.subr.bf16.mxu0 0
        %2809 = vmatpush1.bf16.msra.mxu0 0
        %2810 = vmatprep.subr.bf16.mxu0 0
        %2811 = vmatpush1.bf16.msra.mxu0 0
        %2812 = vmatprep.subr.bf16.mxu0 0
        %2813 = vmatpush1.bf16.msra.mxu0 0
        %2814 = vmatprep.subr.bf16.mxu0 0
        %2815 = vmatpush1.bf16.msra.mxu0 0
        %2816 = vmatprep.mubr.bf16.mxu0 0
        %2817 = vmatmul.mubr.bf16.gmra.mrb[0].mxu0 %v2779
        %v2818 = vpop.f32.mrb[0].mxu0
        %v2819 = vadd.f32 0.0, %v2818
        %v2820 = vpop.f32.mrb[0].mxu0
        %v2821 = vpop.f32.mrb[0].mxu0
        %v2822 = vpop.f32.mrb[0].mxu0
        %2823 = vdwg.mxu0
        %2825 = vrot.lane.b32.xlu0 %v2819, 32
        %v2826 = vpop.permute.xlu0 %2825
        %2828 = vst.msk [vmem:[#allocation2] sm:$0xff] %vm1158, %v2826
        %2829 = vrot.lane.b32.xlu0 %v2488, 80
        %v2830 = vpop.permute.xlu0 %2829
        %2831 = vrot.lane.b32.xlu0 %v2489, 80
        %v2832 = vpop.permute.xlu0 %2831
        %v2834 = vsel %vm446, %v2830, 0
        %v2837 = vsel %vm446, %v2832, 0
        %2839 = vmatprep.subr.bf16.mxu0 0
        %2840 = vmatpush1.bf16.xpose.msra.mxu0 %v2837
        %2841 = vmatprep.subr.bf16.mxu0 0
        %2842 = vmatpush1.bf16.xpose.msra.mxu0 0
        %2843 = vmatprep.subr.bf16.mxu0 0
        %2844 = vmatpush1.bf16.xpose.msra.mxu0 0
        %2845 = vmatprep.subr.bf16.mxu0 0
        %2846 = vmatpush1.bf16.xpose.msra.mxu0 0
        %2847 = vmatprep.subr.bf16.mxu0 0
        %2848 = vmatpush1.bf16.xpose.msra.mxu0 0
        %2849 = vmatprep.subr.bf16.mxu0 0
        %2850 = vmatpush1.bf16.xpose.msra.mxu0 0
        %2851 = vmatprep.subr.bf16.mxu0 0
        %2852 = vmatpush1.bf16.xpose.msra.mxu0 0
        %2853 = vmatprep.subr.bf16.mxu0 0
        %2854 = vmatpush1.bf16.xpose.msra.mxu0 0
        %2855 = vmatprep.subr.bf16.mxu0 0
        %2856 = vmatpush1.bf16.xpose.msra.mxu0 0
        %2857 = vmatprep.subr.bf16.mxu0 0
        %2858 = vmatpush1.bf16.xpose.msra.mxu0 0
        %2859 = vmatprep.subr.bf16.mxu0 0
        %2860 = vmatpush1.bf16.xpose.msra.mxu0 0
        %2861 = vmatprep.subr.bf16.mxu0 0
        %2862 = vmatpush1.bf16.xpose.msra.mxu0 0
        %2863 = vmatprep.subr.bf16.mxu0 0
        %2864 = vmatpush1.bf16.xpose.msra.mxu0 0
        %2865 = vmatprep.subr.bf16.mxu0 0
        %2866 = vmatpush1.bf16.xpose.msra.mxu0 0
        %2867 = vmatprep.subr.bf16.mxu0 0
        %2868 = vmatpush1.bf16.xpose.msra.mxu0 0
        %2869 = vmatprep.subr.bf16.mxu0 0
        %2870 = vmatpush1.bf16.xpose.msra.mxu0 0
        %2871 = vmatprep.mubr.bf16.mxu0 0
        %2872 = vmatmul.mubr.bf16.gmra.mrb[0].mxu0 %v2834
        %v2873 = vpop.f32.mrb[0].mxu0
        %v2874 = vadd.f32 0.0, %v2873
        %v2875 = vpop.f32.mrb[0].mxu0
        %v2876 = vpop.f32.mrb[0].mxu0
        %v2877 = vpop.f32.mrb[0].mxu0
        %2878 = vdwg.mxu0
        %v2879 = vsel %vm864, %v2874, -inf
        %2880 = vmax.xlane.f32.xlu0 %v2879
        %v2881 = vpop.xlane.xlu0 %2880
        %v2882 = vsub.f32 %v2874, %v2881
        %v2883 = vmul.f32 %v2882, 1.442695
        %v2884 = vpow.pop %v2883
        %v2885 = vsel %vm864, %v2884, 0.0
        %2886 = vadd.xlane.f32.xlu0 %v2885
        %v2887 = vpop.xlane.xlu0 %2886
        %v2888 = vrcp.pop %v2887
        %v2889 = vmul.f32 %v2884, %v2888
        %v2890 = vpack.c.bf16 %v2889, %v2889
        %2891 = vrot.lane.b32.xlu0 %v2490, 80
        %v2892 = vpop.permute.xlu0 %2891
        %v2894 = vsel %vm864, %v2890, 0
        %v2897 = vsel %vm880, %v2892, 0
        %2899 = vmatprep.subr.bf16.mxu0 0
        %2900 = vmatpush1.bf16.msra.mxu0 %v2897
        %2901 = vmatprep.subr.bf16.mxu0 0
        %2902 = vmatpush1.bf16.msra.mxu0 0
        %2903 = vmatprep.subr.bf16.mxu0 0
        %2904 = vmatpush1.bf16.msra.mxu0 0
        %2905 = vmatprep.subr.bf16.mxu0 0
        %2906 = vmatpush1.bf16.msra.mxu0 0
        %2907 = vmatprep.subr.bf16.mxu0 0
        %2908 = vmatpush1.bf16.msra.mxu0 0
        %2909 = vmatprep.subr.bf16.mxu0 0
        %2910 = vmatpush1.bf16.msra.mxu0 0
        %2911 = vmatprep.subr.bf16.mxu0 0
        %2912 = vmatpush1.bf16.msra.mxu0 0
        %2913 = vmatprep.subr.bf16.mxu0 0
        %2914 = vmatpush1.bf16.msra.mxu0 0
        %2915 = vmatprep.subr.bf16.mxu0 0
        %2916 = vmatpush1.bf16.msra.mxu0 0
        %2917 = vmatprep.subr.bf16.mxu0 0
        %2918 = vmatpush1.bf16.msra.mxu0 0
        %2919 = vmatprep.subr.bf16.mxu0 0
        %2920 = vmatpush1.bf16.msra.mxu0 0
        %2921 = vmatprep.subr.bf16.mxu0 0
        %2922 = vmatpush1.bf16.msra.mxu0 0
        %2923 = vmatprep.subr.bf16.mxu0 0
        %2924 = vmatpush1.bf16.msra.mxu0 0
        %2925 = vmatprep.subr.bf16.mxu0 0
        %2926 = vmatpush1.bf16.msra.mxu0 0
        %2927 = vmatprep.subr.bf16.mxu0 0
        %2928 = vmatpush1.bf16.msra.mxu0 0
        %2929 = vmatprep.subr.bf16.mxu0 0
        %2930 = vmatpush1.bf16.msra.mxu0 0
        %2931 = vmatprep.mubr.bf16.mxu0 0
        %2932 = vmatmul.mubr.bf16.gmra.mrb[0].mxu0 %v2894
        %v2933 = vpop.f32.mrb[0].mxu0
        %v2934 = vadd.f32 0.0, %v2933
        %v2935 = vpop.f32.mrb[0].mxu0
        %v2936 = vpop.f32.mrb[0].mxu0
        %v2937 = vpop.f32.mrb[0].mxu0
        %2938 = vdwg.mxu0
        %2940 = vrot.lane.b32.xlu0 %v2934, 48
        %v2941 = vpop.permute.xlu0 %2940
        %2943 = vst.msk [vmem:[#allocation2] sm:$0xff] %vm1274, %v2941
        %2944 = vrot.lane.b32.xlu0 %v2488, 64
        %v2945 = vpop.permute.xlu0 %2944
        %2946 = vrot.lane.b32.xlu0 %v2489, 64
        %v2947 = vpop.permute.xlu0 %2946
        %v2949 = vsel %vm446, %v2945, 0
        %v2952 = vsel %vm446, %v2947, 0
        %2954 = vmatprep.subr.bf16.mxu0 0
        %2955 = vmatpush1.bf16.xpose.msra.mxu0 %v2952
        %2956 = vmatprep.subr.bf16.mxu0 0
        %2957 = vmatpush1.bf16.xpose.msra.mxu0 0
        %2958 = vmatprep.subr.bf16.mxu0 0
        %2959 = vmatpush1.bf16.xpose.msra.mxu0 0
        %2960 = vmatprep.subr.bf16.mxu0 0
        %2961 = vmatpush1.bf16.xpose.msra.mxu0 0
        %2962 = vmatprep.subr.bf16.mxu0 0
        %2963 = vmatpush1.bf16.xpose.msra.mxu0 0
        %2964 = vmatprep.subr.bf16.mxu0 0
        %2965 = vmatpush1.bf16.xpose.msra.mxu0 0
        %2966 = vmatprep.subr.bf16.mxu0 0
        %2967 = vmatpush1.bf16.xpose.msra.mxu0 0
        %2968 = vmatprep.subr.bf16.mxu0 0
        %2969 = vmatpush1.bf16.xpose.msra.mxu0 0
        %2970 = vmatprep.subr.bf16.mxu0 0
        %2971 = vmatpush1.bf16.xpose.msra.mxu0 0
        %2972 = vmatprep.subr.bf16.mxu0 0
        %2973 = vmatpush1.bf16.xpose.msra.mxu0 0
        %2974 = vmatprep.subr.bf16.mxu0 0
        %2975 = vmatpush1.bf16.xpose.msra.mxu0 0
        %2976 = vmatprep.subr.bf16.mxu0 0
        %2977 = vmatpush1.bf16.xpose.msra.mxu0 0
        %2978 = vmatprep.subr.bf16.mxu0 0
        %2979 = vmatpush1.bf16.xpose.msra.mxu0 0
        %2980 = vmatprep.subr.bf16.mxu0 0
        %2981 = vmatpush1.bf16.xpose.msra.mxu0 0
        %2982 = vmatprep.subr.bf16.mxu0 0
        %2983 = vmatpush1.bf16.xpose.msra.mxu0 0
        %2984 = vmatprep.subr.bf16.mxu0 0
        %2985 = vmatpush1.bf16.xpose.msra.mxu0 0
        %2986 = vmatprep.mubr.bf16.mxu0 0
        %2987 = vmatmul.mubr.bf16.gmra.mrb[0].mxu0 %v2949
        %v2988 = vpop.f32.mrb[0].mxu0
        %v2989 = vadd.f32 0.0, %v2988
        %v2990 = vpop.f32.mrb[0].mxu0
        %v2991 = vpop.f32.mrb[0].mxu0
        %v2992 = vpop.f32.mrb[0].mxu0
        %2993 = vdwg.mxu0
        %v2994 = vsel %vm864, %v2989, -inf
        %2995 = vmax.xlane.f32.xlu0 %v2994
        %v2996 = vpop.xlane.xlu0 %2995
        %v2997 = vsub.f32 %v2989, %v2996
        %v2998 = vmul.f32 %v2997, 1.442695
        %v2999 = vpow.pop %v2998
        %v3000 = vsel %vm864, %v2999, 0.0
        %3001 = vadd.xlane.f32.xlu0 %v3000
        %v3002 = vpop.xlane.xlu0 %3001
        %v3003 = vrcp.pop %v3002
        %v3004 = vmul.f32 %v2999, %v3003
        %v3005 = vpack.c.bf16 %v3004, %v3004
        %3006 = vrot.lane.b32.xlu0 %v2490, 64
        %v3007 = vpop.permute.xlu0 %3006
        %v3009 = vsel %vm864, %v3005, 0
        %v3012 = vsel %vm880, %v3007, 0
        %3014 = vmatprep.subr.bf16.mxu0 0
        %3015 = vmatpush1.bf16.msra.mxu0 %v3012
        %3016 = vmatprep.subr.bf16.mxu0 0
        %3017 = vmatpush1.bf16.msra.mxu0 0
        %3018 = vmatprep.subr.bf16.mxu0 0
        %3019 = vmatpush1.bf16.msra.mxu0 0
        %3020 = vmatprep.subr.bf16.mxu0 0
        %3021 = vmatpush1.bf16.msra.mxu0 0
        %3022 = vmatprep.subr.bf16.mxu0 0
        %3023 = vmatpush1.bf16.msra.mxu0 0
        %3024 = vmatprep.subr.bf16.mxu0 0
        %3025 = vmatpush1.bf16.msra.mxu0 0
        %3026 = vmatprep.subr.bf16.mxu0 0
        %3027 = vmatpush1.bf16.msra.mxu0 0
        %3028 = vmatprep.subr.bf16.mxu0 0
        %3029 = vmatpush1.bf16.msra.mxu0 0
        %3030 = vmatprep.subr.bf16.mxu0 0
        %3031 = vmatpush1.bf16.msra.mxu0 0
        %3032 = vmatprep.subr.bf16.mxu0 0
        %3033 = vmatpush1.bf16.msra.mxu0 0
        %3034 = vmatprep.subr.bf16.mxu0 0
        %3035 = vmatpush1.bf16.msra.mxu0 0
        %3036 = vmatprep.subr.bf16.mxu0 0
        %3037 = vmatpush1.bf16.msra.mxu0 0
        %3038 = vmatprep.subr.bf16.mxu0 0
        %3039 = vmatpush1.bf16.msra.mxu0 0
        %3040 = vmatprep.subr.bf16.mxu0 0
        %3041 = vmatpush1.bf16.msra.mxu0 0
        %3042 = vmatprep.subr.bf16.mxu0 0
        %3043 = vmatpush1.bf16.msra.mxu0 0
        %3044 = vmatprep.subr.bf16.mxu0 0
        %3045 = vmatpush1.bf16.msra.mxu0 0
        %3046 = vmatprep.mubr.bf16.mxu0 0
        %3047 = vmatmul.mubr.bf16.gmra.mrb[0].mxu0 %v3009
        %v3048 = vpop.f32.mrb[0].mxu0
        %v3049 = vadd.f32 0.0, %v3048
        %v3050 = vpop.f32.mrb[0].mxu0
        %v3051 = vpop.f32.mrb[0].mxu0
        %v3052 = vpop.f32.mrb[0].mxu0
        %3053 = vdwg.mxu0
        %3055 = vrot.lane.b32.xlu0 %v3049, 64
        %v3056 = vpop.permute.xlu0 %3055
        %3058 = vst.msk [vmem:[#allocation2] sm:$0xff] %vm1390, %v3056
        %3059 = vrot.lane.b32.xlu0 %v2488, 48
        %v3060 = vpop.permute.xlu0 %3059
        %3061 = vrot.lane.b32.xlu0 %v2489, 48
        %v3062 = vpop.permute.xlu0 %3061
        %v3064 = vsel %vm446, %v3060, 0
        %v3067 = vsel %vm446, %v3062, 0
        %3069 = vmatprep.subr.bf16.mxu0 0
        %3070 = vmatpush1.bf16.xpose.msra.mxu0 %v3067
        %3071 = vmatprep.subr.bf16.mxu0 0
        %3072 = vmatpush1.bf16.xpose.msra.mxu0 0
        %3073 = vmatprep.subr.bf16.mxu0 0
        %3074 = vmatpush1.bf16.xpose.msra.mxu0 0
        %3075 = vmatprep.subr.bf16.mxu0 0
        %3076 = vmatpush1.bf16.xpose.msra.mxu0 0
        %3077 = vmatprep.subr.bf16.mxu0 0
        %3078 = vmatpush1.bf16.xpose.msra.mxu0 0
        %3079 = vmatprep.subr.bf16.mxu0 0
        %3080 = vmatpush1.bf16.xpose.msra.mxu0 0
        %3081 = vmatprep.subr.bf16.mxu0 0
        %3082 = vmatpush1.bf16.xpose.msra.mxu0 0
        %3083 = vmatprep.subr.bf16.mxu0 0
        %3084 = vmatpush1.bf16.xpose.msra.mxu0 0
        %3085 = vmatprep.subr.bf16.mxu0 0
        %3086 = vmatpush1.bf16.xpose.msra.mxu0 0
        %3087 = vmatprep.subr.bf16.mxu0 0
        %3088 = vmatpush1.bf16.xpose.msra.mxu0 0
        %3089 = vmatprep.subr.bf16.mxu0 0
        %3090 = vmatpush1.bf16.xpose.msra.mxu0 0
        %3091 = vmatprep.subr.bf16.mxu0 0
        %3092 = vmatpush1.bf16.xpose.msra.mxu0 0
        %3093 = vmatprep.subr.bf16.mxu0 0
        %3094 = vmatpush1.bf16.xpose.msra.mxu0 0
        %3095 = vmatprep.subr.bf16.mxu0 0
        %3096 = vmatpush1.bf16.xpose.msra.mxu0 0
        %3097 = vmatprep.subr.bf16.mxu0 0
        %3098 = vmatpush1.bf16.xpose.msra.mxu0 0
        %3099 = vmatprep.subr.bf16.mxu0 0
        %3100 = vmatpush1.bf16.xpose.msra.mxu0 0
        %3101 = vmatprep.mubr.bf16.mxu0 0
        %3102 = vmatmul.mubr.bf16.gmra.mrb[0].mxu0 %v3064
        %v3103 = vpop.f32.mrb[0].mxu0
        %v3104 = vadd.f32 0.0, %v3103
        %v3105 = vpop.f32.mrb[0].mxu0
        %v3106 = vpop.f32.mrb[0].mxu0
        %v3107 = vpop.f32.mrb[0].mxu0
        %3108 = vdwg.mxu0
        %v3109 = vsel %vm864, %v3104, -inf
        %3110 = vmax.xlane.f32.xlu0 %v3109
        %v3111 = vpop.xlane.xlu0 %3110
        %v3112 = vsub.f32 %v3104, %v3111
        %v3113 = vmul.f32 %v3112, 1.442695
        %v3114 = vpow.pop %v3113
        %v3115 = vsel %vm864, %v3114, 0.0
        %3116 = vadd.xlane.f32.xlu0 %v3115
        %v3117 = vpop.xlane.xlu0 %3116
        %v3118 = vrcp.pop %v3117
        %v3119 = vmul.f32 %v3114, %v3118
        %v3120 = vpack.c.bf16 %v3119, %v3119
        %3121 = vrot.lane.b32.xlu0 %v2490, 48
        %v3122 = vpop.permute.xlu0 %3121
        %v3124 = vsel %vm864, %v3120, 0
        %v3127 = vsel %vm880, %v3122, 0
        %3129 = vmatprep.subr.bf16.mxu0 0
        %3130 = vmatpush1.bf16.msra.mxu0 %v3127
        %3131 = vmatprep.subr.bf16.mxu0 0
        %3132 = vmatpush1.bf16.msra.mxu0 0
        %3133 = vmatprep.subr.bf16.mxu0 0
        %3134 = vmatpush1.bf16.msra.mxu0 0
        %3135 = vmatprep.subr.bf16.mxu0 0
        %3136 = vmatpush1.bf16.msra.mxu0 0
        %3137 = vmatprep.subr.bf16.mxu0 0
        %3138 = vmatpush1.bf16.msra.mxu0 0
        %3139 = vmatprep.subr.bf16.mxu0 0
        %3140 = vmatpush1.bf16.msra.mxu0 0
        %3141 = vmatprep.subr.bf16.mxu0 0
        %3142 = vmatpush1.bf16.msra.mxu0 0
        %3143 = vmatprep.subr.bf16.mxu0 0
        %3144 = vmatpush1.bf16.msra.mxu0 0
        %3145 = vmatprep.subr.bf16.mxu0 0
        %3146 = vmatpush1.bf16.msra.mxu0 0
        %3147 = vmatprep.subr.bf16.mxu0 0
        %3148 = vmatpush1.bf16.msra.mxu0 0
        %3149 = vmatprep.subr.bf16.mxu0 0
        %3150 = vmatpush1.bf16.msra.mxu0 0
        %3151 = vmatprep.subr.bf16.mxu0 0
        %3152 = vmatpush1.bf16.msra.mxu0 0
        %3153 = vmatprep.subr.bf16.mxu0 0
        %3154 = vmatpush1.bf16.msra.mxu0 0
        %3155 = vmatprep.subr.bf16.mxu0 0
        %3156 = vmatpush1.bf16.msra.mxu0 0
        %3157 = vmatprep.subr.bf16.mxu0 0
        %3158 = vmatpush1.bf16.msra.mxu0 0
        %3159 = vmatprep.subr.bf16.mxu0 0
        %3160 = vmatpush1.bf16.msra.mxu0 0
        %3161 = vmatprep.mubr.bf16.mxu0 0
        %3162 = vmatmul.mubr.bf16.gmra.mrb[0].mxu0 %v3124
        %v3163 = vpop.f32.mrb[0].mxu0
        %v3164 = vadd.f32 0.0, %v3163
        %v3165 = vpop.f32.mrb[0].mxu0
        %v3166 = vpop.f32.mrb[0].mxu0
        %v3167 = vpop.f32.mrb[0].mxu0
        %3168 = vdwg.mxu0
        %3170 = vrot.lane.b32.xlu0 %v3164, 80
        %v3171 = vpop.permute.xlu0 %3170
        %3173 = vst.msk [vmem:[#allocation2] sm:$0xff] %vm1506, %v3171
        %3174 = vrot.lane.b32.xlu0 %v2488, 32
        %v3175 = vpop.permute.xlu0 %3174
        %3176 = vrot.lane.b32.xlu0 %v2489, 32
        %v3177 = vpop.permute.xlu0 %3176
        %v3179 = vsel %vm446, %v3175, 0
        %v3182 = vsel %vm446, %v3177, 0
        %3184 = vmatprep.subr.bf16.mxu0 0
        %3185 = vmatpush1.bf16.xpose.msra.mxu0 %v3182
        %3186 = vmatprep.subr.bf16.mxu0 0
        %3187 = vmatpush1.bf16.xpose.msra.mxu0 0
        %3188 = vmatprep.subr.bf16.mxu0 0
        %3189 = vmatpush1.bf16.xpose.msra.mxu0 0
        %3190 = vmatprep.subr.bf16.mxu0 0
        %3191 = vmatpush1.bf16.xpose.msra.mxu0 0
        %3192 = vmatprep.subr.bf16.mxu0 0
        %3193 = vmatpush1.bf16.xpose.msra.mxu0 0
        %3194 = vmatprep.subr.bf16.mxu0 0
        %3195 = vmatpush1.bf16.xpose.msra.mxu0 0
        %3196 = vmatprep.subr.bf16.mxu0 0
        %3197 = vmatpush1.bf16.xpose.msra.mxu0 0
        %3198 = vmatprep.subr.bf16.mxu0 0
        %3199 = vmatpush1.bf16.xpose.msra.mxu0 0
        %3200 = vmatprep.subr.bf16.mxu0 0
        %3201 = vmatpush1.bf16.xpose.msra.mxu0 0
        %3202 = vmatprep.subr.bf16.mxu0 0
        %3203 = vmatpush1.bf16.xpose.msra.mxu0 0
        %3204 = vmatprep.subr.bf16.mxu0 0
        %3205 = vmatpush1.bf16.xpose.msra.mxu0 0
        %3206 = vmatprep.subr.bf16.mxu0 0
        %3207 = vmatpush1.bf16.xpose.msra.mxu0 0
        %3208 = vmatprep.subr.bf16.mxu0 0
        %3209 = vmatpush1.bf16.xpose.msra.mxu0 0
        %3210 = vmatprep.subr.bf16.mxu0 0
        %3211 = vmatpush1.bf16.xpose.msra.mxu0 0
        %3212 = vmatprep.subr.bf16.mxu0 0
        %3213 = vmatpush1.bf16.xpose.msra.mxu0 0
        %3214 = vmatprep.subr.bf16.mxu0 0
        %3215 = vmatpush1.bf16.xpose.msra.mxu0 0
        %3216 = vmatprep.mubr.bf16.mxu0 0
        %3217 = vmatmul.mubr.bf16.gmra.mrb[0].mxu0 %v3179
        %v3218 = vpop.f32.mrb[0].mxu0
        %v3219 = vadd.f32 0.0, %v3218
        %v3220 = vpop.f32.mrb[0].mxu0
        %v3221 = vpop.f32.mrb[0].mxu0
        %v3222 = vpop.f32.mrb[0].mxu0
        %3223 = vdwg.mxu0
        %v3224 = vsel %vm864, %v3219, -inf
        %3225 = vmax.xlane.f32.xlu0 %v3224
        %v3226 = vpop.xlane.xlu0 %3225
        %v3227 = vsub.f32 %v3219, %v3226
        %v3228 = vmul.f32 %v3227, 1.442695
        %v3229 = vpow.pop %v3228
        %v3230 = vsel %vm864, %v3229, 0.0
        %3231 = vadd.xlane.f32.xlu0 %v3230
        %v3232 = vpop.xlane.xlu0 %3231
        %v3233 = vrcp.pop %v3232
        %v3234 = vmul.f32 %v3229, %v3233
        %v3235 = vpack.c.bf16 %v3234, %v3234
        %3236 = vrot.lane.b32.xlu0 %v2490, 32
        %v3237 = vpop.permute.xlu0 %3236
        %v3239 = vsel %vm864, %v3235, 0
        %v3242 = vsel %vm880, %v3237, 0
        %3244 = vmatprep.subr.bf16.mxu0 0
        %3245 = vmatpush1.bf16.msra.mxu0 %v3242
        %3246 = vmatprep.subr.bf16.mxu0 0
        %3247 = vmatpush1.bf16.msra.mxu0 0
        %3248 = vmatprep.subr.bf16.mxu0 0
        %3249 = vmatpush1.bf16.msra.mxu0 0
        %3250 = vmatprep.subr.bf16.mxu0 0
        %3251 = vmatpush1.bf16.msra.mxu0 0
        %3252 = vmatprep.subr.bf16.mxu0 0
        %3253 = vmatpush1.bf16.msra.mxu0 0
        %3254 = vmatprep.subr.bf16.mxu0 0
        %3255 = vmatpush1.bf16.msra.mxu0 0
        %3256 = vmatprep.subr.bf16.mxu0 0
        %3257 = vmatpush1.bf16.msra.mxu0 0
        %3258 = vmatprep.subr.bf16.mxu0 0
        %3259 = vmatpush1.bf16.msra.mxu0 0
        %3260 = vmatprep.subr.bf16.mxu0 0
        %3261 = vmatpush1.bf16.msra.mxu0 0
        %3262 = vmatprep.subr.bf16.mxu0 0
        %3263 = vmatpush1.bf16.msra.mxu0 0
        %3264 = vmatprep.subr.bf16.mxu0 0
        %3265 = vmatpush1.bf16.msra.mxu0 0
        %3266 = vmatprep.subr.bf16.mxu0 0
        %3267 = vmatpush1.bf16.msra.mxu0 0
        %3268 = vmatprep.subr.bf16.mxu0 0
        %3269 = vmatpush1.bf16.msra.mxu0 0
        %3270 = vmatprep.subr.bf16.mxu0 0
        %3271 = vmatpush1.bf16.msra.mxu0 0
        %3272 = vmatprep.subr.bf16.mxu0 0
        %3273 = vmatpush1.bf16.msra.mxu0 0
        %3274 = vmatprep.subr.bf16.mxu0 0
        %3275 = vmatpush1.bf16.msra.mxu0 0
        %3276 = vmatprep.mubr.bf16.mxu0 0
        %3277 = vmatmul.mubr.bf16.gmra.mrb[0].mxu0 %v3239
        %v3278 = vpop.f32.mrb[0].mxu0
        %v3279 = vadd.f32 0.0, %v3278
        %v3280 = vpop.f32.mrb[0].mxu0
        %v3281 = vpop.f32.mrb[0].mxu0
        %v3282 = vpop.f32.mrb[0].mxu0
        %3283 = vdwg.mxu0
        %3285 = vrot.lane.b32.xlu0 %v3279, 96
        %v3286 = vpop.permute.xlu0 %3285
        %3288 = vst.msk [vmem:[#allocation2] sm:$0xff] %vm1622, %v3286
        %3289 = vrot.lane.b32.xlu0 %v2488, 16
        %v3290 = vpop.permute.xlu0 %3289
        %3291 = vrot.lane.b32.xlu0 %v2489, 16
        %v3292 = vpop.permute.xlu0 %3291
        %v3294 = vsel %vm446, %v3290, 0
        %v3297 = vsel %vm446, %v3292, 0
        %3299 = vmatprep.subr.bf16.mxu0 0
        %3300 = vmatpush1.bf16.xpose.msra.mxu0 %v3297
        %3301 = vmatprep.subr.bf16.mxu0 0
        %3302 = vmatpush1.bf16.xpose.msra.mxu0 0
        %3303 = vmatprep.subr.bf16.mxu0 0
        %3304 = vmatpush1.bf16.xpose.msra.mxu0 0
        %3305 = vmatprep.subr.bf16.mxu0 0
        %3306 = vmatpush1.bf16.xpose.msra.mxu0 0
        %3307 = vmatprep.subr.bf16.mxu0 0
        %3308 = vmatpush1.bf16.xpose.msra.mxu0 0
        %3309 = vmatprep.subr.bf16.mxu0 0
        %3310 = vmatpush1.bf16.xpose.msra.mxu0 0
        %3311 = vmatprep.subr.bf16.mxu0 0
        %3312 = vmatpush1.bf16.xpose.msra.mxu0 0
        %3313 = vmatprep.subr.bf16.mxu0 0
        %3314 = vmatpush1.bf16.xpose.msra.mxu0 0
        %3315 = vmatprep.subr.bf16.mxu0 0
        %3316 = vmatpush1.bf16.xpose.msra.mxu0 0
        %3317 = vmatprep.subr.bf16.mxu0 0
        %3318 = vmatpush1.bf16.xpose.msra.mxu0 0
        %3319 = vmatprep.subr.bf16.mxu0 0
        %3320 = vmatpush1.bf16.xpose.msra.mxu0 0
        %3321 = vmatprep.subr.bf16.mxu0 0
        %3322 = vmatpush1.bf16.xpose.msra.mxu0 0
        %3323 = vmatprep.subr.bf16.mxu0 0
        %3324 = vmatpush1.bf16.xpose.msra.mxu0 0
        %3325 = vmatprep.subr.bf16.mxu0 0
        %3326 = vmatpush1.bf16.xpose.msra.mxu0 0
        %3327 = vmatprep.subr.bf16.mxu0 0
        %3328 = vmatpush1.bf16.xpose.msra.mxu0 0
        %3329 = vmatprep.subr.bf16.mxu0 0
        %3330 = vmatpush1.bf16.xpose.msra.mxu0 0
        %3331 = vmatprep.mubr.bf16.mxu0 0
        %3332 = vmatmul.mubr.bf16.gmra.mrb[0].mxu0 %v3294
        %v3333 = vpop.f32.mrb[0].mxu0
        %v3334 = vadd.f32 0.0, %v3333
        %v3335 = vpop.f32.mrb[0].mxu0
        %v3336 = vpop.f32.mrb[0].mxu0
        %v3337 = vpop.f32.mrb[0].mxu0
        %3338 = vdwg.mxu0
        %v3339 = vsel %vm864, %v3334, -inf
        %3340 = vmax.xlane.f32.xlu0 %v3339
        %v3341 = vpop.xlane.xlu0 %3340
        %v3342 = vsub.f32 %v3334, %v3341
        %v3343 = vmul.f32 %v3342, 1.442695
        %v3344 = vpow.pop %v3343
        %v3345 = vsel %vm864, %v3344, 0.0
        %3346 = vadd.xlane.f32.xlu0 %v3345
        %v3347 = vpop.xlane.xlu0 %3346
        %v3348 = vrcp.pop %v3347
        %v3349 = vmul.f32 %v3344, %v3348
        %v3350 = vpack.c.bf16 %v3349, %v3349
        %3351 = vrot.lane.b32.xlu0 %v2490, 16
        %v3352 = vpop.permute.xlu0 %3351
        %v3354 = vsel %vm864, %v3350, 0
        %v3357 = vsel %vm880, %v3352, 0
        %3359 = vmatprep.subr.bf16.mxu0 0
        %3360 = vmatpush1.bf16.msra.mxu0 %v3357
        %3361 = vmatprep.subr.bf16.mxu0 0
        %3362 = vmatpush1.bf16.msra.mxu0 0
        %3363 = vmatprep.subr.bf16.mxu0 0
        %3364 = vmatpush1.bf16.msra.mxu0 0
        %3365 = vmatprep.subr.bf16.mxu0 0
        %3366 = vmatpush1.bf16.msra.mxu0 0
        %3367 = vmatprep.subr.bf16.mxu0 0
        %3368 = vmatpush1.bf16.msra.mxu0 0
        %3369 = vmatprep.subr.bf16.mxu0 0
        %3370 = vmatpush1.bf16.msra.mxu0 0
        %3371 = vmatprep.subr.bf16.mxu0 0
        %3372 = vmatpush1.bf16.msra.mxu0 0
        %3373 = vmatprep.subr.bf16.mxu0 0
        %3374 = vmatpush1.bf16.msra.mxu0 0
        %3375 = vmatprep.subr.bf16.mxu0 0
        %3376 = vmatpush1.bf16.msra.mxu0 0
        %3377 = vmatprep.subr.bf16.mxu0 0
        %3378 = vmatpush1.bf16.msra.mxu0 0
        %3379 = vmatprep.subr.bf16.mxu0 0
        %3380 = vmatpush1.bf16.msra.mxu0 0
        %3381 = vmatprep.subr.bf16.mxu0 0
        %3382 = vmatpush1.bf16.msra.mxu0 0
        %3383 = vmatprep.subr.bf16.mxu0 0
        %3384 = vmatpush1.bf16.msra.mxu0 0
        %3385 = vmatprep.subr.bf16.mxu0 0
        %3386 = vmatpush1.bf16.msra.mxu0 0
        %3387 = vmatprep.subr.bf16.mxu0 0
        %3388 = vmatpush1.bf16.msra.mxu0 0
        %3389 = vmatprep.subr.bf16.mxu0 0
        %3390 = vmatpush1.bf16.msra.mxu0 0
        %3391 = vmatprep.mubr.bf16.mxu0 0
        %3392 = vmatmul.mubr.bf16.gmra.mrb[0].mxu0 %v3354
        %v3393 = vpop.f32.mrb[0].mxu0
        %v3394 = vadd.f32 0.0, %v3393
        %v3395 = vpop.f32.mrb[0].mxu0
        %v3396 = vpop.f32.mrb[0].mxu0
        %v3397 = vpop.f32.mrb[0].mxu0
        %3398 = vdwg.mxu0
        %3400 = vrot.lane.b32.xlu0 %v3394, 112
        %v3401 = vpop.permute.xlu0 %3400
        %3403 = vst.msk [vmem:[#allocation2] sm:$0xff] %vm1738, %v3401
        %v3404 = vld [vmem:[#allocation2] sm:$0xff]
        %v3405 = vpack.c.bf16 %v3404, %v3404
        %v3406 = vlaneseq
        %v3407 = vshrl.u32 %v3406, 7
        %v3408 = vsub.s32 0, %v3407
        %v3409 = vrot.slane %v2261, %v3408
        %v3426 = vunpack.c.l.b16 %v2192
        %v3427 = vunpack.c.l.b16 %v2193
        %v3428 = vunpack.c.l.b16 %v2194
        %v3429 = vunpack.c.l.b16 %v2195
        %v3430 = vunpack.c.l.b16 %v2196
        %v3431 = vunpack.c.l.b16 %v2197
        %v3432 = vunpack.c.l.b16 %v2198
        %v3433 = vunpack.c.l.b16 %v2199
        %v3434 = vunpack.c.l.b16 %v2200
        %v3435 = vunpack.c.l.b16 %v2201
        %v3436 = vunpack.c.l.b16 %v2202
        %v3437 = vunpack.c.l.b16 %v2203
        %v3438 = vunpack.c.l.b16 %v2204
        %v3439 = vunpack.c.l.b16 %v2205
        %v3440 = vunpack.c.l.b16 %v2206
        %v3441 = vunpack.c.l.b16 %v2207
        %v3442 = vpack.c.b16 %v3427, %v3426
        %v3443 = vpack.c.b16 %v3429, %v3428
        %v3444 = vpack.c.b16 %v3431, %v3430
        %v3445 = vpack.c.b16 %v3433, %v3432
        %v3446 = vpack.c.b16 %v3435, %v3434
        %v3447 = vpack.c.b16 %v3437, %v3436
        %v3448 = vpack.c.b16 %v3439, %v3438
        %v3449 = vpack.c.b16 %v3441, %v3440
        %3458 = vmatprep.subr.bf16.mxu0 0
        %3459 = vmatpush1.bf16.msra.mxu0 %v3442
        %3460 = vmatprep.subr.bf16.mxu0 0
        %3461 = vmatpush1.bf16.msra.mxu0 %v3443
        %3462 = vmatprep.subr.bf16.mxu0 0
        %3463 = vmatpush1.bf16.msra.mxu0 %v3444
        %3464 = vmatprep.subr.bf16.mxu0 0
        %3465 = vmatpush1.bf16.msra.mxu0 %v3445
        %3466 = vmatprep.subr.bf16.mxu0 0
        %3467 = vmatpush1.bf16.msra.mxu0 %v3446
        %3468 = vmatprep.subr.bf16.mxu0 0
        %3469 = vmatpush1.bf16.msra.mxu0 %v3447
        %3470 = vmatprep.subr.bf16.mxu0 0
        %3471 = vmatpush1.bf16.msra.mxu0 %v3448
        %3472 = vmatprep.subr.bf16.mxu0 0
        %3473 = vmatpush1.bf16.msra.mxu0 %v3449
        %3474 = vmatprep.subr.bf16.mxu0 0
        %3475 = vmatpush1.bf16.msra.mxu0 0
        %3476 = vmatprep.subr.bf16.mxu0 0
        %3477 = vmatpush1.bf16.msra.mxu0 0
        %3478 = vmatprep.subr.bf16.mxu0 0
        %3479 = vmatpush1.bf16.msra.mxu0 0
        %3480 = vmatprep.subr.bf16.mxu0 0
        %3481 = vmatpush1.bf16.msra.mxu0 0
        %3482 = vmatprep.subr.bf16.mxu0 0
        %3483 = vmatpush1.bf16.msra.mxu0 0
        %3484 = vmatprep.subr.bf16.mxu0 0
        %3485 = vmatpush1.bf16.msra.mxu0 0
        %3486 = vmatprep.subr.bf16.mxu0 0
        %3487 = vmatpush1.bf16.msra.mxu0 0
        %3488 = vmatprep.subr.bf16.mxu0 0
        %3489 = vmatpush1.bf16.msra.mxu0 0
        %3490 = vmatprep.mubr.bf16.mxu0 0
        %3491 = vmatmul.mubr.bf16.gmra.mrb[0].mxu0 %v3405
        %v3492 = vpop.f32.mrb[0].mxu0
        %v3493 = vadd.f32 %v3409, %v3492
        %v3494 = vpop.f32.mrb[0].mxu0
        %v3495 = vpop.f32.mrb[0].mxu0
        %v3496 = vpop.f32.mrb[0].mxu0
        %3497 = vdwg.mxu0
        %v3498 = vadd.f32 %v2155, %v3493
        %3499 = vadd.xlane.f32.xlu0 %v3498
        %v3500 = vpop.xlane.xlu0 %3499
        %v3501 = vmul.f32 %v3500, %v1837
        %v3502 = vsub.f32 %v3498, %v3501
        %v3503 = vmul.f32 %v3502, %v3502
        %3504 = vadd.xlane.f32.xlu0 %v3503
        %v3505 = vpop.xlane.xlu0 %3504
        %v3506 = vmul.f32 %v3505, %v1837
        %v3507 = vadd.f32 %v3506, 1e-05
        %v3508 = vrsqrt.pop %v3507
        %v3509 = vmul.f32 %v3502, %v3508
        %v3510 = vlaneseq
        %v3511 = vshrl.u32 %v3510, 7
        %v3512 = vsub.s32 2, %v3511
        %v3513 = vrot.slane %v2261, %v3512
        %v3514 = vmul.f32 %v3509, %v3513
        %v3515 = vlaneseq
        %v3516 = vshrl.u32 %v3515, 7
        %v3517 = vsub.s32 3, %v3516
        %v3518 = vrot.slane %v2261, %v3517
        %v3519 = vadd.f32 %v3514, %v3518
        %v3520 = vpack.c.bf16 %v3519, %v3519
        %v3522 = vlaneseq
        %v3523 = vshrl.u32 %v3522, 7
        %v3524 = vsub.s32 0, %v3523
        %v3525 = vrot.slane %v2259, %v3524
        %v3526 = vlaneseq
        %v3527 = vshrl.u32 %v3526, 7
        %v3528 = vsub.s32 1, %v3527
        %v3529 = vrot.slane %v2259, %v3528
        %v3548 = vunpack.c.l.b16 %v2209
        %v3549 = vunpack.c.h.b16 %v2209
        %v3550 = vunpack.c.l.b16 %v2210
        %v3551 = vunpack.c.h.b16 %v2210
        %v3552 = vunpack.c.l.b16 %v2211
        %v3553 = vunpack.c.h.b16 %v2211
        %v3554 = vunpack.c.l.b16 %v2212
        %v3555 = vunpack.c.h.b16 %v2212
        %v3556 = vunpack.c.l.b16 %v2213
        %v3557 = vunpack.c.h.b16 %v2213
        %v3558 = vunpack.c.l.b16 %v2214
        %v3559 = vunpack.c.h.b16 %v2214
        %v3560 = vunpack.c.l.b16 %v2215
        %v3561 = vunpack.c.h.b16 %v2215
        %v3562 = vunpack.c.l.b16 %v2216
        %v3563 = vunpack.c.h.b16 %v2216
        %v3564 = vunpack.c.l.b16 %v2217
        %v3565 = vunpack.c.h.b16 %v2217
        %v3566 = vunpack.c.l.b16 %v2218
        %v3567 = vunpack.c.h.b16 %v2218
        %v3568 = vunpack.c.l.b16 %v2219
        %v3569 = vunpack.c.h.b16 %v2219
        %v3570 = vunpack.c.l.b16 %v2220
        %v3571 = vunpack.c.h.b16 %v2220
        %v3572 = vunpack.c.l.b16 %v2221
        %v3573 = vunpack.c.h.b16 %v2221
        %v3574 = vunpack.c.l.b16 %v2222
        %v3575 = vunpack.c.h.b16 %v2222
        %v3576 = vunpack.c.l.b16 %v2223
        %v3577 = vunpack.c.h.b16 %v2223
        %v3578 = vunpack.c.l.b16 %v2224
        %v3579 = vunpack.c.h.b16 %v2224
        %v3580 = vpack.c.b16 %v3550, %v3548
        %v3581 = vpack.c.b16 %v3551, %v3549
        %v3582 = vpack.c.b16 %v3554, %v3552
        %v3583 = vpack.c.b16 %v3555, %v3553
        %v3584 = vpack.c.b16 %v3558, %v3556
        %v3585 = vpack.c.b16 %v3559, %v3557
        %v3586 = vpack.c.b16 %v3562, %v3560
        %v3587 = vpack.c.b16 %v3563, %v3561
        %v3588 = vpack.c.b16 %v3566, %v3564
        %v3589 = vpack.c.b16 %v3567, %v3565
        %v3590 = vpack.c.b16 %v3570, %v3568
        %v3591 = vpack.c.b16 %v3571, %v3569
        %v3592 = vpack.c.b16 %v3574, %v3572
        %v3593 = vpack.c.b16 %v3575, %v3573
        %v3594 = vpack.c.b16 %v3578, %v3576
        %v3595 = vpack.c.b16 %v3579, %v3577
        %3612 = vmatprep.subr.bf16.mxu0 %v3581
        %3613 = vmatpush1.bf16.msra.mxu0 %v3580
        %3614 = vmatprep.subr.bf16.mxu0 %v3583
        %3615 = vmatpush1.bf16.msra.mxu0 %v3582
        %3616 = vmatprep.subr.bf16.mxu0 %v3585
        %3617 = vmatpush1.bf16.msra.mxu0 %v3584
        %3618 = vmatprep.subr.bf16.mxu0 %v3587
        %3619 = vmatpush1.bf16.msra.mxu0 %v3586
        %3620 = vmatprep.subr.bf16.mxu0 %v3589
        %3621 = vmatpush1.bf16.msra.mxu0 %v3588
        %3622 = vmatprep.subr.bf16.mxu0 %v3591
        %3623 = vmatpush1.bf16.msra.mxu0 %v3590
        %3624 = vmatprep.subr.bf16.mxu0 %v3593
        %3625 = vmatpush1.bf16.msra.mxu0 %v3592
        %3626 = vmatprep.subr.bf16.mxu0 %v3595
        %3627 = vmatpush1.bf16.msra.mxu0 %v3594
        %3628 = vmatprep.subr.bf16.mxu0 0
        %3629 = vmatpush1.bf16.msra.mxu0 0
        %3630 = vmatprep.subr.bf16.mxu0 0
        %3631 = vmatpush1.bf16.msra.mxu0 0
        %3632 = vmatprep.subr.bf16.mxu0 0
        %3633 = vmatpush1.bf16.msra.mxu0 0
        %3634 = vmatprep.subr.bf16.mxu0 0
        %3635 = vmatpush1.bf16.msra.mxu0 0
        %3636 = vmatprep.subr.bf16.mxu0 0
        %3637 = vmatpush1.bf16.msra.mxu0 0
        %3638 = vmatprep.subr.bf16.mxu0 0
        %3639 = vmatpush1.bf16.msra.mxu0 0
        %3640 = vmatprep.subr.bf16.mxu0 0
        %3641 = vmatpush1.bf16.msra.mxu0 0
        %3642 = vmatprep.subr.bf16.mxu0 0
        %3643 = vmatpush1.bf16.msra.mxu0 0
        %3644 = vmatprep.mubr.bf16.mxu0 0
        %3645 = vmatmul.mubr.bf16.gmra.mrb[0].mxu0 %v3520
        %v3646 = vpop.f32.mrb[0].mxu0
        %v3647 = vadd.f32 %v3525, %v3646
        %v3648 = vpop.f32.mrb[0].mxu0
        %v3649 = vadd.f32 %v3529, %v3648
        %v3650 = vpop.f32.mrb[0].mxu0
        %v3651 = vpop.f32.mrb[0].mxu0
        %3652 = vdwg.mxu0
        %v3653 = vmax.f32 %v3647, 0.0
        %v3654 = vmax.f32 %v3649, 0.0
        %v3655 = vpack.c.bf16 %v3653, %v3653
        %v3656 = vpack.c.bf16 %v3654, %v3654
        %v3657 = vlaneseq
        %v3658 = vshrl.u32 %v3657, 7
        %v3659 = vsub.s32 1, %v3658
        %v3660 = vrot.slane %v2261, %v3659
        %v3693 = vunpack.c.l.b16 %v2226
        %v3694 = vunpack.c.l.b16 %v2227
        %v3695 = vunpack.c.l.b16 %v2228
        %v3696 = vunpack.c.l.b16 %v2229
        %v3697 = vunpack.c.l.b16 %v2230
        %v3698 = vunpack.c.l.b16 %v2231
        %v3699 = vunpack.c.l.b16 %v2232
        %v3700 = vunpack.c.l.b16 %v2233
        %v3701 = vunpack.c.l.b16 %v2234
        %v3702 = vunpack.c.l.b16 %v2235
        %v3703 = vunpack.c.l.b16 %v2236
        %v3704 = vunpack.c.l.b16 %v2237
        %v3705 = vunpack.c.l.b16 %v2238
        %v3706 = vunpack.c.l.b16 %v2239
        %v3707 = vunpack.c.l.b16 %v2240
        %v3708 = vunpack.c.l.b16 %v2241
        %v3709 = vunpack.c.l.b16 %v2242
        %v3710 = vunpack.c.l.b16 %v2243
        %v3711 = vunpack.c.l.b16 %v2244
        %v3712 = vunpack.c.l.b16 %v2245
        %v3713 = vunpack.c.l.b16 %v2246
        %v3714 = vunpack.c.l.b16 %v2247
        %v3715 = vunpack.c.l.b16 %v2248
        %v3716 = vunpack.c.l.b16 %v2249
        %v3717 = vunpack.c.l.b16 %v2250
        %v3718 = vunpack.c.l.b16 %v2251
        %v3719 = vunpack.c.l.b16 %v2252
        %v3720 = vunpack.c.l.b16 %v2253
        %v3721 = vunpack.c.l.b16 %v2254
        %v3722 = vunpack.c.l.b16 %v2255
        %v3723 = vunpack.c.l.b16 %v2256
        %v3724 = vunpack.c.l.b16 %v2257
        %v3725 = vpack.c.b16 %v3694, %v3693
        %v3726 = vpack.c.b16 %v3696, %v3695
        %v3727 = vpack.c.b16 %v3698, %v3697
        %v3728 = vpack.c.b16 %v3700, %v3699
        %v3729 = vpack.c.b16 %v3702, %v3701
        %v3730 = vpack.c.b16 %v3704, %v3703
        %v3731 = vpack.c.b16 %v3706, %v3705
        %v3732 = vpack.c.b16 %v3708, %v3707
        %v3733 = vpack.c.b16 %v3710, %v3709
        %v3734 = vpack.c.b16 %v3712, %v3711
        %v3735 = vpack.c.b16 %v3714, %v3713
        %v3736 = vpack.c.b16 %v3716, %v3715
        %v3737 = vpack.c.b16 %v3718, %v3717
        %v3738 = vpack.c.b16 %v3720, %v3719
        %v3739 = vpack.c.b16 %v3722, %v3721
        %v3740 = vpack.c.b16 %v3724, %v3723
        %3757 = vmatprep.subr.bf16.mxu0 0
        %3758 = vmatpush1.bf16.msra.mxu0 %v3725
        %3759 = vmatprep.subr.bf16.mxu0 0
        %3760 = vmatpush1.bf16.msra.mxu0 %v3726
        %3761 = vmatprep.subr.bf16.mxu0 0
        %3762 = vmatpush1.bf16.msra.mxu0 %v3727
        %3763 = vmatprep.subr.bf16.mxu0 0
        %3764 = vmatpush1.bf16.msra.mxu0 %v3728
        %3765 = vmatprep.subr.bf16.mxu0 0
        %3766 = vmatpush1.bf16.msra.mxu0 %v3729
        %3767 = vmatprep.subr.bf16.mxu0 0
        %3768 = vmatpush1.bf16.msra.mxu0 %v3730
        %3769 = vmatprep.subr.bf16.mxu0 0
        %3770 = vmatpush1.bf16.msra.mxu0 %v3731
        %3771 = vmatprep.subr.bf16.mxu0 0
        %3772 = vmatpush1.bf16.msra.mxu0 %v3732
        %3773 = vmatprep.subr.bf16.mxu0 0
        %3774 = vmatpush1.bf16.msra.mxu0 %v3733
        %3775 = vmatprep.subr.bf16.mxu0 0
        %3776 = vmatpush1.bf16.msra.mxu0 %v3734
        %3777 = vmatprep.subr.bf16.mxu0 0
        %3778 = vmatpush1.bf16.msra.mxu0 %v3735
        %3779 = vmatprep.subr.bf16.mxu0 0
        %3780 = vmatpush1.bf16.msra.mxu0 %v3736
        %3781 = vmatprep.subr.bf16.mxu0 0
        %3782 = vmatpush1.bf16.msra.mxu0 %v3737
        %3783 = vmatprep.subr.bf16.mxu0 0
        %3784 = vmatpush1.bf16.msra.mxu0 %v3738
        %3785 = vmatprep.subr.bf16.mxu0 0
        %3786 = vmatpush1.bf16.msra.mxu0 %v3739
        %3787 = vmatprep.subr.bf16.mxu0 0
        %3788 = vmatpush1.bf16.msra.mxu0 %v3740
        %3789 = vmatprep.mubr.bf16.mxu0 %v3656
        %3790 = vmatmul.mubr.bf16.gmra.mrb[0].mxu0 %v3655
        %v3791 = vpop.f32.mrb[0].mxu0
        %v3792 = vadd.f32 %v3660, %v3791
        %v3793 = vpop.f32.mrb[0].mxu0
        %v3794 = vpop.f32.mrb[0].mxu0
        %v3795 = vpop.f32.mrb[0].mxu0
        %3796 = vdwg.mxu0
        %v3797 = vadd.f32 %v3519, %v3792
        %3798 = vadd.xlane.f32.xlu0 %v3797
        %v3799 = vpop.xlane.xlu0 %3798
        %v3800 = vmul.f32 %v3799, %v1837
        %v3801 = vsub.f32 %v3797, %v3800
        %v3802 = vmul.f32 %v3801, %v3801
        %3803 = vadd.xlane.f32.xlu0 %v3802
        %v3804 = vpop.xlane.xlu0 %3803
        %v3805 = vmul.f32 %v3804, %v1837
        %v3806 = vadd.f32 %v3805, 1e-05
        %v3807 = vrsqrt.pop %v3806
        %v3808 = vmul.f32 %v3801, %v3807
        %v3809 = vlaneseq
        %v3810 = vshrl.u32 %v3809, 7
        %v3811 = vsub.s32 4, %v3810
        %v3812 = vrot.slane %v2261, %v3811
        %v3813 = vmul.f32 %v3808, %v3812
        %v3814 = vlaneseq
        %v3815 = vshrl.u32 %v3814, 7
        %v3816 = vsub.s32 5, %v3815
        %v3817 = vrot.slane %v2261, %v3816
        %v3818 = vadd.f32 %v3813, %v3817
        %3819 = vst [vmem:[%s423] sm:$0xff] %v3818
        %s3820 = sand.u32 %s250, 1
        %s3821 = scalar_lea.sflag [#allocation5], %s3820
        %s3822 = sand.u32 %s250, 1
        %s3823 = smul.addr %s3822, 8
        %s3824 = scalar_lea.vmem [#allocation12], %s3823
        // Predicated region
        $region81: #{transformer_forward.1} parent=59 // pred_check
          %p3825 = pneg %p260
        $region82: #{transformer_forward.1} parent=59 // pred_check_branch
          %3827 = sbr.rel (%p3825) target = $region84
        $region83: #{transformer_forward.1} parent=59 // pred_region
          %s3829 = ssub.s32 128, 128
          %3830 = vsyncadd %s3821, %s3829
          %s3831 = smul.addr %s27, 128
          %s3832 = scalar_lea.hbm %s10, %s3831
          %s3834 = sshll.u32 %s3824, 4
          %s3835 = int_to_ptr.vmem [resolvable:$true] %s3834
          %3837 = dma.vmem_to_hbm [thread:$0]  %s3835, 128, %s3832, %s3821
        $region84: #{transformer_forward.1} parent=59 // pred_fallthru
          _
      $region60: #{transformer_forward.1} parent=5 // pred_fallthru
        _
      %p3838 = scmp.le.s32.totalorder 2, %s22
      // Predicated region
      $region85: #{transformer_forward.1} parent=5 // pred_check
        %p3839 = pneg %p3838
      $region86: #{transformer_forward.1} parent=5 // pred_check_branch
        %3841 = sbr.rel (%p3839) target = $region88
      $region87: #{transformer_forward.1} parent=5 // pred_region
        %s3842 = ssub.s32 %s22, 2
        // Predicated region
        $region89: #{transformer_forward.1} parent=87 // pred_check
          %p3843 = pneg %p266
        $region90: #{transformer_forward.1} parent=87 // pred_check_branch
          %3845 = sbr.rel (%p3843) target = $region92
        $region91: #{transformer_forward.1} parent=87 // pred_region
          %s3846 = sand.u32 %s251, 1
          %s3847 = scalar_lea.sflag [#allocation5], %s3846
          %s3848 = sand.u32 %s251, 1
          %s3849 = smul.addr %s3848, 8
          %s3850 = scalar_lea.vmem [#allocation12], %s3849
          %3851 = dma.done %s3847, 128
        $region92: #{transformer_forward.1} parent=87 // pred_fallthru
          _
      $region88: #{transformer_forward.1} parent=5 // pred_fallthru
        _
    $region6: #{transformer_forward.1} parent=1 // loop_footer
      %s26 = sadd.s32 1, %s22
    $region7: #{transformer_forward.1} parent=1 // loop_footer_branch
      %21 = sbr.rel target = $region3
    $region8: #{transformer_forward.1} parent=1 // loop_exit
      _
    %3852 = vsyncpa [#allocation4], 1
    %s3853 = scalar_lea.sflag [#allocation4], 1
    %3854 = vsyncpa %s3853, 1
    %3855 = vsyncpa [#allocation7], 1
    %3856 = vsyncpa [#allocation10], 1
    %3857 = vsyncpa [#allocation5], 1
    %s3858 = scalar_lea.sflag [#allocation5], 1
    %3859 = vsyncpa %s3858, 1

</llo_original>
